<compile_context>
chip_gen: v7x
topology: tpu7x:2x2x1
jax: 0.10.0
libtpu: 0.0.40
codegen_flags: <defaults>
</compile_context>

<pallas_src>
import math
from functools import partial

import numpy as np
import jax
import jax.numpy as jnp
from jax.experimental import pallas as pl
from jax.experimental.pallas import tpu as pltpu

KH = KW = 13
PAD1 = (0, 1)   # conv1: 3 -> 9
PAD2 = (1, 5)   # conv2: 9 -> 3   (applied to v1)
PAD3 = (0, 2)   # conv3: 3 -> 3   (applied to x2)
OFFX = max(PAD1[1], PAD3[1])     # x2 column 0 sits at lane offset 2 of its slot
LANE_TARGET = 128                # packed lane width per grid step


def _round_up(x, m):
    return ((x + m - 1) // m) * m


def _fill_lowered(low, w, hin, pad_h, row_off):
    """low[j, row_off + co*oh + o, ci*hin + r] = w[co, ci, r - o + pad_h, j].

    With the input stacked as V = (Cin*Hin, lanes), B = Wlow @ V gives
    B[j*RP + co*oh + o, l] = sum_{ci,i} w[co,ci,i,j] * V[ci*Hin + o + i - pad_h, l],
    i.e. the conv reduces to one matmul + KW lane-shifted adds. Height padding
    (pad_h) is baked in by simply omitting out-of-range rows."""
    cout, cin, kh, kw = w.shape
    oh = hin + 2 * pad_h - kh + 1
    wt = np.transpose(w, (3, 0, 1, 2))          # (kw, cout, cin, kh)
    for o in range(oh):
        for i in range(kh):
            r = o + i - pad_h
            if 0 <= r < hin:
                low[:, row_off + o: row_off + cout * oh: oh,
                    r: cin * hin: hin] = wt[:, :, :, i]
    return low


def _lower_params(w1, b1, w2, b2, w3, b3, H):
    """Host-side, one-time lowering of all conv weights/biases (bf16 weights)."""
    OH1 = H + 2 * PAD1[0] - KH + 1
    OH3 = H + 2 * PAD3[0] - KH + 1
    OH2 = OH1 + 2 * PAD2[0] - KH + 1
    c1, c2, c3 = w1.shape[0], w2.shape[0], w3.shape[0]
    cin = w1.shape[1]
    r1, r2, r3 = c1 * OH1, c2 * OH2, c3 * OH3
    r1p = _round_up(r1, 8)
    rp13 = _round_up(r1p + r3, 8)
    rp2 = _round_up(r2, 8)
    K13 = cin * H

    # conv1 + conv3 share the same RHS -> one fused lowered matrix.
    low13 = np.zeros((KW, rp13, K13), np.float32)
    _fill_lowered(low13, np.asarray(w1, np.float32), H, PAD1[0], 0)
    _fill_lowered(low13, np.asarray(w3, np.float32), H, PAD3[0], r1p)
    w13l = jnp.asarray(low13.reshape(KW * rp13, K13), dtype=jnp.bfloat16)

    bb13 = np.zeros((rp13, 1), np.float32)
    bb13[:r1, 0] = np.repeat(np.asarray(b1, np.float32), OH1)
    bb13[r1p:r1p + r3, 0] = np.repeat(np.asarray(b3, np.float32), OH3)

    # conv2 is lowered directly against conv1's activation rows (rp13 of them);
    # columns >= c1*OH1 are zero so conv3/pad rows are ignored, and conv2's
    # height pad is baked into the row mapping.
    low2 = np.zeros((KW, rp2, rp13), np.float32)
    _fill_lowered(low2, np.asarray(w2, np.float32), OH1, PAD2[0], 0)
    w2l = jnp.asarray(low2.reshape(KW * rp2, rp13), dtype=jnp.bfloat16)

    bb2 = np.zeros((rp2, 1), np.float32)
    bb2[:r2, 0] = np.repeat(np.asarray(b2, np.float32), OH2)

    return w13l, jnp.asarray(bb13), w2l, jnp.asarray(bb2)


@partial(jax.jit, static_argnames=("c1", "c2", "c3", "nb"))
def _fused_forward(x2, w13l, bb13, w2l, bb2, *, c1, c2, c3, nb):
    n, cin, H, W = x2.shape
    OH1, OW1 = H + 2 * PAD1[0] - KH + 1, W + 2 * PAD1[1] - KW + 1
    OH3, OW3 = H + 2 * PAD3[0] - KH + 1, W + 2 * PAD3[1] - KW + 1
    OH2, OW2 = OH1 + 2 * PAD2[0] - KH + 1, OW1 + 2 * PAD2[1] - KW + 1
    r1, r2, r3 = c1 * OH1, c2 * OH2, c3 * OH3
    r1p = _round_up(r1, 8)
    rp13 = _round_up(r1p + r3, 8)
    rp2 = _round_up(r2, 8)
    K13 = cin * H

    slot = W + 2 * OFFX                     # per-image lane slot (zero margins baked in)
    LB = _round_up(nb * slot, 128)          # packed lanes handled per grid step
    S = _round_up(max(n, 1), nb) // nb      # grid steps
    npad = S * nb
    Wacc = LB - (KW - 1)                    # conv1/conv3 accumulator width
    off1 = OFFX - PAD1[1]                   # conv1 output lane offset inside a slot (=1)
    off3 = OFFX - PAD3[1]                   # conv3 output lane offset (=0)
    base = off1 - PAD2[1]                   # conv2 read shift (=-4)
    Wacc2 = Wacc + base                     # conv2 accumulator width
    assert Wacc2 >= (nb - 1) * slot + OW2

    # --- pack batch along lanes: (n,cin,H,W) -> (cin*H, S*LB) bf16 ---
    xp = jnp.pad(x2.astype(jnp.float32),
                 ((0, npad - n), (0, 0), (0, 0), (OFFX, slot - W - OFFX)))
    xp = xp.transpose(1, 2, 0, 3).reshape(cin, H, S, nb * slot)
    if LB > nb * slot:
        xp = jnp.pad(xp, ((0, 0), (0, 0), (0, 0), (0, LB - nb * slot)))
    vx = xp.reshape(K13, S * LB).astype(jnp.bfloat16)

    def kernel(vx_ref, w13_ref, bb13_ref, w2_ref, bb2_ref,
               o13_ref, o2_ref, b13_s, acc2_s):
        # ---- conv1 + conv3: ONE fused MXU matmul over the lane-packed batch ----
        b13_s[...] = jnp.dot(w13_ref[...], vx_ref[...],
                             preferred_element_type=jnp.float32)
        # 13 lane-shifted adds; bias folded into the j=0 term; two interleaved
        # accumulation chains (breaks the serial VALU dependency without
        # blowing up vreg pressure).
        acc_a = bb13_ref[...] + b13_s[0:rp13, 0:Wacc]
        acc_b = b13_s[rp13:2 * rp13, 1:1 + Wacc]
        for j in range(2, KW):
            sl = b13_s[j * rp13:(j + 1) * rp13, j:j + Wacc]
            if j % 2 == 0:
                acc_a = acc_a + sl
            else:
                acc_b = acc_b + sl
        sig13 = jax.nn.sigmoid(acc_a + acc_b)
        o13_ref[...] = sig13                              # conv1 rows [0,r1), conv3 rows [r1p,r1p+r3)

        # ---- conv2 consumes conv1's activation directly (stays on-chip) ----
        # conv2's width padding = zeroing the lanes that are not valid conv1
        # outputs (one masked select), cast to bf16 for the MXU.
        lane = jax.lax.broadcasted_iota(jnp.int32, (1, Wacc), 1) % slot
        valid = (lane >= off1) & (lane < off1 + OW1)
        v1z = jnp.where(valid, sig13, 0.0).astype(jnp.bfloat16)
        b2 = jnp.dot(w2_ref[...], v1z, preferred_element_type=jnp.float32)

        # shifted adds with per-j clipping (clipped terms are exactly the
        # zero-padding reads that fall outside the packed array).
        acc2_s[...] = jnp.broadcast_to(bb2_ref[...], (rp2, Wacc2))
        for j in range(KW):
            s = j + base
            cs = max(0, -s)
            ce = min(Wacc2, Wacc - s)
            acc2_s[:, cs:ce] += b2[j * rp2:(j + 1) * rp2, cs + s:ce + s]
        o2_ref[...] = jax.nn.sigmoid(acc2_s[...])

    o13, o2 = pl.pallas_call(
        kernel,
        out_shape=(jax.ShapeDtypeStruct((S, rp13, Wacc), jnp.float32),
                   jax.ShapeDtypeStruct((S, rp2, Wacc2), jnp.float32)),
        grid=(S,),
        in_specs=[
            pl.BlockSpec((K13, LB), lambda s: (0, s)),
            pl.BlockSpec((KW * rp13, K13), lambda s: (0, 0)),
            pl.BlockSpec((rp13, 1), lambda s: (0, 0)),
            pl.BlockSpec((KW * rp2, rp13), lambda s: (0, 0)),
            pl.BlockSpec((rp2, 1), lambda s: (0, 0)),
        ],
        out_specs=(
            pl.BlockSpec((None, rp13, Wacc), lambda s: (s, 0, 0)),
            pl.BlockSpec((None, rp2, Wacc2), lambda s: (s, 0, 0)),
        ),
        scratch_shapes=[
            pltpu.VMEM((KW * rp13, LB), jnp.float32),
            pltpu.VMEM((rp2, Wacc2), jnp.float32),
        ],
        compiler_params=pltpu.CompilerParams(
            dimension_semantics=("parallel",)),
    )(vx, w13l, bb13, w2l, bb2)

    # --- unpack lane-packed outputs back to NCHW (tiny XLA post-processing) ---
    def extract(o, row_off, rows, col_off, cols):
        wd = o.shape[2]
        if nb * slot > wd:
            o = jnp.pad(o, ((0, 0), (0, 0), (0, nb * slot - wd)))
        else:
            o = o[:, :, :nb * slot]
        t = o.reshape(S, o.shape[1], nb, slot)
        t = t[:, row_off:row_off + rows, :, col_off:col_off + cols]
        t = jnp.transpose(t, (0, 2, 1, 3)).reshape(S * nb, rows, cols)
        return t[:n]

    v1 = extract(o13, 0, r1, off1, OW1).reshape(n, c1, OH1, OW1)
    v5 = extract(o13, r1p, r3, off3, OW3).reshape(n, c3, OH3, OW3)
    v3 = extract(o2, 0, r2, 0, OW2).reshape(n, c2, OH2, OW2)
    return v1, v3, v5


class Model:
    """JAX/Pallas port: conv1(3->9,13x13,pad(0,1)), conv2(9->3,13x13,pad(1,5)),
    conv3(3->3,13x13,pad(0,2)), each followed by sigmoid."""

    def __init__(self, key):
        ks = jax.random.split(key, 6)

        def init(kw_, kb_, cout, cin):
            fan_in = cin * KH * KW
            bound = 1.0 / math.sqrt(fan_in)
            w = jax.random.uniform(kw_, (cout, cin, KH, KW), minval=-bound,
                                   maxval=bound, dtype=jnp.float32)
            b = jax.random.uniform(kb_, (cout,), minval=-bound, maxval=bound,
                                   dtype=jnp.float32)
            return w, b

        self.w1, self.b1 = init(ks[0], ks[1], 9, 3)
        self.w2, self.b2 = init(ks[2], ks[3], 3, 9)
        self.w3, self.b3 = init(ks[4], ks[5], 3, 3)
        self._cache = {}

    def _lowered(self, H):
        if H not in self._cache:
            self._cache[H] = _lower_params(self.w1, self.b1, self.w2, self.b2,
                                           self.w3, self.b3, H)
        return self._cache[H]

    def forward(self, x2):
        n, cin, H, W = x2.shape
        assert H >= 23 and W >= 13, "spatial dims too small for the three 13x13 convs"
        nb = max(1, LANE_TARGET // (W + 2 * OFFX))
        w13l, bb13, w2l, bb2 = self._lowered(H)
        # NOTE: the PyTorch forward returns None; the three intermediates (all of
        # the module's work) are returned here so the kernel is observable.
        return _fused_forward(x2, w13l, bb13, w2l, bb2,
                              c1=int(self.w1.shape[0]), c2=int(self.w2.shape[0]),
                              c3=int(self.w3.shape[0]), nb=nb)


if __name__ == "__main__":
    key = jax.random.PRNGKey(0)
    k_param, k_x = jax.random.split(key)

    # The original example input (1, 3, 9, 28) is too small for the 13x13 kernels
    # (PyTorch itself would raise). Use the smallest consistent spatial size and a
    # batch of 8 so the lane-packed kernel runs 2 grid steps (both TCs on v7x).
    x2 = jax.random.normal(k_x, (8, 3, 25, 28), dtype=jnp.float32)

    model = Model(k_param)
    v1, v3, v5 = model.forward(x2)
    jax.block_until_ready((v1, v3, v5))

    assert v1.shape == (8, 9, 13, 18)
    assert v3.shape == (8, 3, 3, 16)
    assert v5.shape == (8, 3, 13, 20)

    # Cross-check against XLA's conv (catches any indexing / lowering bug).
    def ref(x, w, b, pad):
        y = jax.lax.conv_general_dilated(
            x, w, window_strides=(1, 1),
            padding=[(pad[0], pad[0]), (pad[1], pad[1])],
            dimension_numbers=("NCHW", "OIHW", "NCHW"))
        return jax.nn.sigmoid(y + b.reshape(1, -1, 1, 1))

    r1 = ref(x2, model.w1, model.b1, PAD1)
    r3 = ref(r1, model.w2, model.b2, PAD2)
    r5 = ref(x2, model.w3, model.b3, PAD3)
    assert np.allclose(np.asarray(v1), np.asarray(r1), atol=2e-2)
    assert np.allclose(np.asarray(v3), np.asarray(r3), atol=2e-2)
    assert np.allclose(np.asarray(v5), np.asarray(r5), atol=2e-2)

    print("KERNEL_OK")
</pallas_src>

<mosaic_0001>
module attributes {stable_mosaic.version = 11 : i64} {
  func.func @kernel(%arg0: i32, %arg1: memref<75x128xbf16, #tpu.memory_space<vmem>>, %arg2: memref<2080x75xbf16, #tpu.memory_space<vmem>>, %arg3: memref<160x1xf32, #tpu.memory_space<vmem>>, %arg4: memref<208x160xbf16, #tpu.memory_space<vmem>>, %arg5: memref<16x1xf32, #tpu.memory_space<vmem>>, %arg6: memref<1x160x116xf32, #tpu.memory_space<vmem>>, %arg7: memref<1x16x112xf32, #tpu.memory_space<vmem>>, %arg8: memref<2080x128xf32, #tpu.memory_space<vmem>>, %arg9: memref<16x112xf32, #tpu.memory_space<vmem>>) attributes {dimension_semantics = [#tpu.dimension_semantics<parallel>], iteration_bounds = array<i64: 2>, scalar_prefetch = 0 : i64, scratch_operands = 2 : i64, tpu.core_type = #tpu.core_type<tc>, window_params = [{transform_indices = @transform_0, window_bounds = array<i64: 75, 128>}, {pipeline_mode = #tpu.pipeline_mode<synchronous>, transform_indices = @transform_1, window_bounds = array<i64: 2080, 75>}, {pipeline_mode = #tpu.pipeline_mode<synchronous>, transform_indices = @transform_2, window_bounds = array<i64: 160, 1>}, {pipeline_mode = #tpu.pipeline_mode<synchronous>, transform_indices = @transform_3, window_bounds = array<i64: 208, 160>}, {pipeline_mode = #tpu.pipeline_mode<synchronous>, transform_indices = @transform_4, window_bounds = array<i64: 16, 1>}, {transform_indices = @transform_5, window_bounds = array<i64: 1, 160, 116>}, {transform_indices = @transform_6, window_bounds = array<i64: 1, 16, 112>}]} {
    %c0 = arith.constant 0 : index
    %c0_0 = arith.constant 0 : index
    %0 = vector.load %arg2[%c0, %c0_0] : memref<2080x75xbf16, #tpu.memory_space<vmem>>, vector<2080x75xbf16>
    %c0_1 = arith.constant 0 : index
    %c0_2 = arith.constant 0 : index
    %1 = vector.load %arg1[%c0_1, %c0_2] : memref<75x128xbf16, #tpu.memory_space<vmem>>, vector<75x128xbf16>
    %cst = arith.constant dense<0.000000e+00> : vector<2080x128xf32>
    %2 = tpu.matmul %0, %1, %cst {dimension_numbers = #tpu.dot_dimension_numbers<[1], [0], [0], [1], [0, 0, 1, 1], [], []>} : vector<2080x75xbf16>, vector<75x128xbf16>, vector<2080x128xf32> -> vector<2080x128xf32>
    %c0_3 = arith.constant 0 : index
    %c0_4 = arith.constant 0 : index
    %3 = vector.load %arg8[%c0_3, %c0_4] : memref<2080x128xf32, #tpu.memory_space<vmem>>, vector<2080x128xf32>
    tpu.vector_store %arg8[%c0_3, %c0_4], %2 {strides = array<i32>} : memref<2080x128xf32, #tpu.memory_space<vmem>>, vector<2080x128xf32>,
    %c0_5 = arith.constant 0 : index
    %c0_6 = arith.constant 0 : index
    %4 = vector.load %arg3[%c0_5, %c0_6] : memref<160x1xf32, #tpu.memory_space<vmem>>, vector<160x1xf32>
    %c0_7 = arith.constant 0 : index
    %c0_8 = arith.constant 0 : index
    %5 = vector.load %arg8[%c0_7, %c0_8] : memref<2080x128xf32, #tpu.memory_space<vmem>>, vector<160x116xf32>
    %6 = vector.broadcast %4 : vector<160x1xf32> to vector<160x116xf32>
    %7 = arith.addf %6, %5 : vector<160x116xf32>
    %c160 = arith.constant 160 : index
    %c1 = arith.constant 1 : index
    %8 = vector.load %arg8[%c160, %c1] : memref<2080x128xf32, #tpu.memory_space<vmem>>, vector<160x116xf32>
    %c320 = arith.constant 320 : index
    %c2 = arith.constant 2 : index
    %9 = vector.load %arg8[%c320, %c2] : memref<2080x128xf32, #tpu.memory_space<vmem>>, vector<160x116xf32>
    %10 = arith.addf %7, %9 : vector<160x116xf32>
    %c480 = arith.constant 480 : index
    %c3 = arith.constant 3 : index
    %11 = vector.load %arg8[%c480, %c3] : memref<2080x128xf32, #tpu.memory_space<vmem>>, vector<160x116xf32>
    %12 = arith.addf %8, %11 : vector<160x116xf32>
    %c640 = arith.constant 640 : index
    %c4 = arith.constant 4 : index
    %13 = vector.load %arg8[%c640, %c4] : memref<2080x128xf32, #tpu.memory_space<vmem>>, vector<160x116xf32>
    %14 = arith.addf %10, %13 : vector<160x116xf32>
    %c800 = arith.constant 800 : index
    %c5 = arith.constant 5 : index
    %15 = vector.load %arg8[%c800, %c5] : memref<2080x128xf32, #tpu.memory_space<vmem>>, vector<160x116xf32>
    %16 = arith.addf %12, %15 : vector<160x116xf32>
    %c960 = arith.constant 960 : index
    %c6 = arith.constant 6 : index
    %17 = vector.load %arg8[%c960, %c6] : memref<2080x128xf32, #tpu.memory_space<vmem>>, vector<160x116xf32>
    %18 = arith.addf %14, %17 : vector<160x116xf32>
    %c1120 = arith.constant 1120 : index
    %c7 = arith.constant 7 : index
    %19 = vector.load %arg8[%c1120, %c7] : memref<2080x128xf32, #tpu.memory_space<vmem>>, vector<160x116xf32>
    %20 = arith.addf %16, %19 : vector<160x116xf32>
    %c1280 = arith.constant 1280 : index
    %c8 = arith.constant 8 : index
    %21 = vector.load %arg8[%c1280, %c8] : memref<2080x128xf32, #tpu.memory_space<vmem>>, vector<160x116xf32>
    %22 = arith.addf %18, %21 : vector<160x116xf32>
    %c1440 = arith.constant 1440 : index
    %c9 = arith.constant 9 : index
    %23 = vector.load %arg8[%c1440, %c9] : memref<2080x128xf32, #tpu.memory_space<vmem>>, vector<160x116xf32>
    %24 = arith.addf %20, %23 : vector<160x116xf32>
    %c1600 = arith.constant 1600 : index
    %c10 = arith.constant 10 : index
    %25 = vector.load %arg8[%c1600, %c10] : memref<2080x128xf32, #tpu.memory_space<vmem>>, vector<160x116xf32>
    %26 = arith.addf %22, %25 : vector<160x116xf32>
    %c1760 = arith.constant 1760 : index
    %c11 = arith.constant 11 : index
    %27 = vector.load %arg8[%c1760, %c11] : memref<2080x128xf32, #tpu.memory_space<vmem>>, vector<160x116xf32>
    %28 = arith.addf %24, %27 : vector<160x116xf32>
    %c1920 = arith.constant 1920 : index
    %c12 = arith.constant 12 : index
    %29 = vector.load %arg8[%c1920, %c12] : memref<2080x128xf32, #tpu.memory_space<vmem>>, vector<160x116xf32>
    %30 = arith.addf %26, %29 : vector<160x116xf32>
    %31 = arith.addf %30, %28 : vector<160x116xf32>
    %32 = arith.negf %31 : vector<160x116xf32>
    %33 = math.exp %32 : vector<160x116xf32>
    %cst_9 = arith.constant 1.000000e+00 : f32
    %34 = vector.broadcast %cst_9 : f32 to vector<160x116xf32>
    %35 = arith.addf %34, %33 : vector<160x116xf32>
    %36 = arith.divf %34, %35 : vector<160x116xf32>
    %c0_10 = arith.constant 0 : index
    %c0_11 = arith.constant 0 : index
    %c0_12 = arith.constant 0 : index
    %37 = vector.load %arg6[%c0_10, %c0_11, %c0_12] : memref<1x160x116xf32, #tpu.memory_space<vmem>>, vector<1x160x116xf32>
    %38 = vector.shape_cast %37 : vector<1x160x116xf32> to vector<160x116xf32>
    %39 = vector.shape_cast %36 : vector<160x116xf32> to vector<1x160x116xf32>
    tpu.vector_store %arg6[%c0_10, %c0_11, %c0_12], %39 {strides = array<i32>} : memref<1x160x116xf32, #tpu.memory_space<vmem>>, vector<1x160x116xf32>,
    %40 = tpu.iota {dimensions = array<i32: 1>} : vector<1x116xi32>
    %c32_i32 = arith.constant 32 : i32
    %c0_i32 = arith.constant 0 : i32
    %41 = arith.cmpi eq, %c32_i32, %c0_i32 : i32
    %c1_i32 = arith.constant 1 : i32
    %42 = arith.select %41, %c1_i32, %c32_i32 : i32
    %43 = vector.broadcast %42 : i32 to vector<1x116xi32>
    %44 = arith.remsi %40, %43 : vector<1x116xi32>
    %c0_i32_13 = arith.constant 0 : i32
    %45 = vector.broadcast %c0_i32_13 : i32 to vector<1x116xi32>
    %46 = arith.cmpi ne, %44, %45 : vector<1x116xi32>
    %c0_i32_14 = arith.constant 0 : i32
    %47 = vector.broadcast %c0_i32_14 : i32 to vector<1x116xi32>
    %48 = arith.cmpi slt, %44, %47 : vector<1x116xi32>
    %c0_i32_15 = arith.constant 0 : i32
    %49 = arith.cmpi slt, %42, %c0_i32_15 : i32
    %50 = vector.broadcast %49 : i1 to vector<1x116xi1>
    %51 = vector.broadcast %50 : vector<1x116xi1> to vector<1x116xi1>
    %52 = arith.xori %48, %51 : vector<1x116xi1>
    %53 = arith.andi %52, %46 : vector<1x116xi1>
    %54 = vector.broadcast %42 : i32 to vector<1x116xi32>
    %55 = arith.addi %44, %54 : vector<1x116xi32>
    %56 = arith.select %53, %55, %44 : vector<1x116xi1>, vector<1x116xi32>
    %c1_i32_16 = arith.constant 1 : i32
    %57 = vector.broadcast %c1_i32_16 : i32 to vector<1x116xi32>
    %58 = arith.cmpi sge, %56, %57 : vector<1x116xi32>
    %c19_i32 = arith.constant 19 : i32
    %59 = vector.broadcast %c19_i32 : i32 to vector<1x116xi32>
    %60 = arith.cmpi slt, %56, %59 : vector<1x116xi32>
    %61 = arith.andi %58, %60 : vector<1x116xi1>
    %cst_17 = arith.constant 0.000000e+00 : f32
    %62 = vector.shape_cast %61 : vector<1x116xi1> to vector<1x116xi1>
    %63 = vector.broadcast %62 : vector<1x116xi1> to vector<160x116xi1>
    %64 = vector.broadcast %cst_17 : f32 to vector<160x116xf32>
    %65 = arith.select %63, %36, %64 : vector<160x116xi1>, vector<160x116xf32>
    %66 = arith.truncf %65 : vector<160x116xf32> to vector<160x116xbf16>
    %c0_18 = arith.constant 0 : index
    %c0_19 = arith.constant 0 : index
    %67 = vector.load %arg4[%c0_18, %c0_19] : memref<208x160xbf16, #tpu.memory_space<vmem>>, vector<208x160xbf16>
    %cst_20 = arith.constant dense<0.000000e+00> : vector<208x116xf32>
    %68 = tpu.matmul %67, %66, %cst_20 {dimension_numbers = #tpu.dot_dimension_numbers<[1], [0], [0], [1], [0, 0, 1, 1], [], []>} : vector<208x160xbf16>, vector<160x116xbf16>, vector<208x116xf32> -> vector<208x116xf32>
    %c0_21 = arith.constant 0 : index
    %c0_22 = arith.constant 0 : index
    %69 = vector.load %arg5[%c0_21, %c0_22] : memref<16x1xf32, #tpu.memory_space<vmem>>, vector<16x1xf32>
    %70 = vector.shape_cast %69 : vector<16x1xf32> to vector<16x1xf32>
    %71 = vector.broadcast %70 : vector<16x1xf32> to vector<16x112xf32>
    %c0_23 = arith.constant 0 : index
    %c0_24 = arith.constant 0 : index
    %72 = vector.load %arg9[%c0_23, %c0_24] : memref<16x112xf32, #tpu.memory_space<vmem>>, vector<16x112xf32>
    tpu.vector_store %arg9[%c0_23, %c0_24], %71 {strides = array<i32>} : memref<16x112xf32, #tpu.memory_space<vmem>>, vector<16x112xf32>,
    %c0_25 = arith.constant 0 : index
    %c4_26 = arith.constant 4 : index
    %73 = vector.load %arg9[%c0_25, %c4_26] : memref<16x112xf32, #tpu.memory_space<vmem>>, vector<16x108xf32>
    %74 = vector.extract_strided_slice %68 {offsets = [0, 0], sizes = [16, 108], strides = [1, 1]} : vector<208x116xf32> to vector<16x108xf32>
    %75 = arith.addf %73, %74 : vector<16x108xf32>
    %c0_27 = arith.constant 0 : index
    %c4_28 = arith.constant 4 : index
    %76 = vector.load %arg9[%c0_27, %c4_28] : memref<16x112xf32, #tpu.memory_space<vmem>>, vector<16x108xf32>
    tpu.vector_store %arg9[%c0_27, %c4_28], %75 {strides = array<i32>} : memref<16x112xf32, #tpu.memory_space<vmem>>, vector<16x108xf32>,
    %c0_29 = arith.constant 0 : index
    %c3_30 = arith.constant 3 : index
    %77 = vector.load %arg9[%c0_29, %c3_30] : memref<16x112xf32, #tpu.memory_space<vmem>>, vector<16x109xf32>
    %78 = vector.extract_strided_slice %68 {offsets = [16, 0], sizes = [16, 109], strides = [1, 1]} : vector<208x116xf32> to vector<16x109xf32>
    %79 = arith.addf %77, %78 : vector<16x109xf32>
    %c0_31 = arith.constant 0 : index
    %c3_32 = arith.constant 3 : index
    %80 = vector.load %arg9[%c0_31, %c3_32] : memref<16x112xf32, #tpu.memory_space<vmem>>, vector<16x109xf32>
    tpu.vector_store %arg9[%c0_31, %c3_32], %79 {strides = array<i32>} : memref<16x112xf32, #tpu.memory_space<vmem>>, vector<16x109xf32>,
    %c0_33 = arith.constant 0 : index
    %c2_34 = arith.constant 2 : index
    %81 = vector.load %arg9[%c0_33, %c2_34] : memref<16x112xf32, #tpu.memory_space<vmem>>, vector<16x110xf32>
    %82 = vector.extract_strided_slice %68 {offsets = [32, 0], sizes = [16, 110], strides = [1, 1]} : vector<208x116xf32> to vector<16x110xf32>
    %83 = arith.addf %81, %82 : vector<16x110xf32>
    %c0_35 = arith.constant 0 : index
    %c2_36 = arith.constant 2 : index
    %84 = vector.load %arg9[%c0_35, %c2_36] : memref<16x112xf32, #tpu.memory_space<vmem>>, vector<16x110xf32>
    tpu.vector_store %arg9[%c0_35, %c2_36], %83 {strides = array<i32>} : memref<16x112xf32, #tpu.memory_space<vmem>>, vector<16x110xf32>,
    %c0_37 = arith.constant 0 : index
    %c1_38 = arith.constant 1 : index
    %85 = vector.load %arg9[%c0_37, %c1_38] : memref<16x112xf32, #tpu.memory_space<vmem>>, vector<16x111xf32>
    %86 = vector.extract_strided_slice %68 {offsets = [48, 0], sizes = [16, 111], strides = [1, 1]} : vector<208x116xf32> to vector<16x111xf32>
    %87 = arith.addf %85, %86 : vector<16x111xf32>
    %c0_39 = arith.constant 0 : index
    %c1_40 = arith.constant 1 : index
    %88 = vector.load %arg9[%c0_39, %c1_40] : memref<16x112xf32, #tpu.memory_space<vmem>>, vector<16x111xf32>
    tpu.vector_store %arg9[%c0_39, %c1_40], %87 {strides = array<i32>} : memref<16x112xf32, #tpu.memory_space<vmem>>, vector<16x111xf32>,
    %c0_41 = arith.constant 0 : index
    %c0_42 = arith.constant 0 : index
    %89 = vector.load %arg9[%c0_41, %c0_42] : memref<16x112xf32, #tpu.memory_space<vmem>>, vector<16x112xf32>
    %90 = vector.extract_strided_slice %68 {offsets = [64, 0], sizes = [16, 112], strides = [1, 1]} : vector<208x116xf32> to vector<16x112xf32>
    %91 = arith.addf %89, %90 : vector<16x112xf32>
    %c0_43 = arith.constant 0 : index
    %c0_44 = arith.constant 0 : index
    %92 = vector.load %arg9[%c0_43, %c0_44] : memref<16x112xf32, #tpu.memory_space<vmem>>, vector<16x112xf32>
    tpu.vector_store %arg9[%c0_43, %c0_44], %91 {strides = array<i32>} : memref<16x112xf32, #tpu.memory_space<vmem>>, vector<16x112xf32>,
    %c0_45 = arith.constant 0 : index
    %c0_46 = arith.constant 0 : index
    %93 = vector.load %arg9[%c0_45, %c0_46] : memref<16x112xf32, #tpu.memory_space<vmem>>, vector<16x112xf32>
    %94 = vector.extract_strided_slice %68 {offsets = [80, 1], sizes = [16, 112], strides = [1, 1]} : vector<208x116xf32> to vector<16x112xf32>
    %95 = arith.addf %93, %94 : vector<16x112xf32>
    %c0_47 = arith.constant 0 : index
    %c0_48 = arith.constant 0 : index
    %96 = vector.load %arg9[%c0_47, %c0_48] : memref<16x112xf32, #tpu.memory_space<vmem>>, vector<16x112xf32>
    tpu.vector_store %arg9[%c0_47, %c0_48], %95 {strides = array<i32>} : memref<16x112xf32, #tpu.memory_space<vmem>>, vector<16x112xf32>,
    %c0_49 = arith.constant 0 : index
    %c0_50 = arith.constant 0 : index
    %97 = vector.load %arg9[%c0_49, %c0_50] : memref<16x112xf32, #tpu.memory_space<vmem>>, vector<16x112xf32>
    %98 = vector.extract_strided_slice %68 {offsets = [96, 2], sizes = [16, 112], strides = [1, 1]} : vector<208x116xf32> to vector<16x112xf32>
    %99 = arith.addf %97, %98 : vector<16x112xf32>
    %c0_51 = arith.constant 0 : index
    %c0_52 = arith.constant 0 : index
    %100 = vector.load %arg9[%c0_51, %c0_52] : memref<16x112xf32, #tpu.memory_space<vmem>>, vector<16x112xf32>
    tpu.vector_store %arg9[%c0_51, %c0_52], %99 {strides = array<i32>} : memref<16x112xf32, #tpu.memory_space<vmem>>, vector<16x112xf32>,
    %c0_53 = arith.constant 0 : index
    %c0_54 = arith.constant 0 : index
    %101 = vector.load %arg9[%c0_53, %c0_54] : memref<16x112xf32, #tpu.memory_space<vmem>>, vector<16x112xf32>
    %102 = vector.extract_strided_slice %68 {offsets = [112, 3], sizes = [16, 112], strides = [1, 1]} : vector<208x116xf32> to vector<16x112xf32>
    %103 = arith.addf %101, %102 : vector<16x112xf32>
    %c0_55 = arith.constant 0 : index
    %c0_56 = arith.constant 0 : index
    %104 = vector.load %arg9[%c0_55, %c0_56] : memref<16x112xf32, #tpu.memory_space<vmem>>, vector<16x112xf32>
    tpu.vector_store %arg9[%c0_55, %c0_56], %103 {strides = array<i32>} : memref<16x112xf32, #tpu.memory_space<vmem>>, vector<16x112xf32>,
    %c0_57 = arith.constant 0 : index
    %c0_58 = arith.constant 0 : index
    %105 = vector.load %arg9[%c0_57, %c0_58] : memref<16x112xf32, #tpu.memory_space<vmem>>, vector<16x112xf32>
    %106 = vector.extract_strided_slice %68 {offsets = [128, 4], sizes = [16, 112], strides = [1, 1]} : vector<208x116xf32> to vector<16x112xf32>
    %107 = arith.addf %105, %106 : vector<16x112xf32>
    %c0_59 = arith.constant 0 : index
    %c0_60 = arith.constant 0 : index
    %108 = vector.load %arg9[%c0_59, %c0_60] : memref<16x112xf32, #tpu.memory_space<vmem>>, vector<16x112xf32>
    tpu.vector_store %arg9[%c0_59, %c0_60], %107 {strides = array<i32>} : memref<16x112xf32, #tpu.memory_space<vmem>>, vector<16x112xf32>,
    %c0_61 = arith.constant 0 : index
    %c0_62 = arith.constant 0 : index
    %109 = vector.load %arg9[%c0_61, %c0_62] : memref<16x112xf32, #tpu.memory_space<vmem>>, vector<16x111xf32>
    %110 = vector.extract_strided_slice %68 {offsets = [144, 5], sizes = [16, 111], strides = [1, 1]} : vector<208x116xf32> to vector<16x111xf32>
    %111 = arith.addf %109, %110 : vector<16x111xf32>
    %c0_63 = arith.constant 0 : index
    %c0_64 = arith.constant 0 : index
    %112 = vector.load %arg9[%c0_63, %c0_64] : memref<16x112xf32, #tpu.memory_space<vmem>>, vector<16x111xf32>
    tpu.vector_store %arg9[%c0_63, %c0_64], %111 {strides = array<i32>} : memref<16x112xf32, #tpu.memory_space<vmem>>, vector<16x111xf32>,
    %c0_65 = arith.constant 0 : index
    %c0_66 = arith.constant 0 : index
    %113 = vector.load %arg9[%c0_65, %c0_66] : memref<16x112xf32, #tpu.memory_space<vmem>>, vector<16x110xf32>
    %114 = vector.extract_strided_slice %68 {offsets = [160, 6], sizes = [16, 110], strides = [1, 1]} : vector<208x116xf32> to vector<16x110xf32>
    %115 = arith.addf %113, %114 : vector<16x110xf32>
    %c0_67 = arith.constant 0 : index
    %c0_68 = arith.constant 0 : index
    %116 = vector.load %arg9[%c0_67, %c0_68] : memref<16x112xf32, #tpu.memory_space<vmem>>, vector<16x110xf32>
    tpu.vector_store %arg9[%c0_67, %c0_68], %115 {strides = array<i32>} : memref<16x112xf32, #tpu.memory_space<vmem>>, vector<16x110xf32>,
    %c0_69 = arith.constant 0 : index
    %c0_70 = arith.constant 0 : index
    %117 = vector.load %arg9[%c0_69, %c0_70] : memref<16x112xf32, #tpu.memory_space<vmem>>, vector<16x109xf32>
    %118 = vector.extract_strided_slice %68 {offsets = [176, 7], sizes = [16, 109], strides = [1, 1]} : vector<208x116xf32> to vector<16x109xf32>
    %119 = arith.addf %117, %118 : vector<16x109xf32>
    %c0_71 = arith.constant 0 : index
    %c0_72 = arith.constant 0 : index
    %120 = vector.load %arg9[%c0_71, %c0_72] : memref<16x112xf32, #tpu.memory_space<vmem>>, vector<16x109xf32>
    tpu.vector_store %arg9[%c0_71, %c0_72], %119 {strides = array<i32>} : memref<16x112xf32, #tpu.memory_space<vmem>>, vector<16x109xf32>,
    %c0_73 = arith.constant 0 : index
    %c0_74 = arith.constant 0 : index
    %121 = vector.load %arg9[%c0_73, %c0_74] : memref<16x112xf32, #tpu.memory_space<vmem>>, vector<16x108xf32>
    %122 = vector.extract_strided_slice %68 {offsets = [192, 8], sizes = [16, 108], strides = [1, 1]} : vector<208x116xf32> to vector<16x108xf32>
    %123 = arith.addf %121, %122 : vector<16x108xf32>
    %c0_75 = arith.constant 0 : index
    %c0_76 = arith.constant 0 : index
    %124 = vector.load %arg9[%c0_75, %c0_76] : memref<16x112xf32, #tpu.memory_space<vmem>>, vector<16x108xf32>
    tpu.vector_store %arg9[%c0_75, %c0_76], %123 {strides = array<i32>} : memref<16x112xf32, #tpu.memory_space<vmem>>, vector<16x108xf32>,
    %c0_77 = arith.constant 0 : index
    %c0_78 = arith.constant 0 : index
    %125 = vector.load %arg9[%c0_77, %c0_78] : memref<16x112xf32, #tpu.memory_space<vmem>>, vector<16x112xf32>
    %126 = arith.negf %125 : vector<16x112xf32>
    %127 = math.exp %126 : vector<16x112xf32>
    %cst_79 = arith.constant 1.000000e+00 : f32
    %128 = vector.broadcast %cst_79 : f32 to vector<16x112xf32>
    %129 = arith.addf %128, %127 : vector<16x112xf32>
    %130 = arith.divf %128, %129 : vector<16x112xf32>
    %c0_80 = arith.constant 0 : index
    %c0_81 = arith.constant 0 : index
    %c0_82 = arith.constant 0 : index
    %131 = vector.load %arg7[%c0_80, %c0_81, %c0_82] : memref<1x16x112xf32, #tpu.memory_space<vmem>>, vector<1x16x112xf32>
    %132 = vector.shape_cast %131 : vector<1x16x112xf32> to vector<16x112xf32>
    %133 = vector.shape_cast %130 : vector<16x112xf32> to vector<1x16x112xf32>
    tpu.vector_store %arg7[%c0_80, %c0_81, %c0_82], %133 {strides = array<i32>} : memref<1x16x112xf32, #tpu.memory_space<vmem>>, vector<1x16x112xf32>,
    return
  }
  func.func @transform_0(%arg0: i32) -> (i32, i32) {
    %c0_i32 = arith.constant 0 : i32
    %c0_i32_0 = arith.constant 0 : i32
    return %c0_i32, %arg0 : i32, i32
  }
  func.func @transform_1(%arg0: i32) -> (i32, i32) {
    %c0_i32 = arith.constant 0 : i32
    %c0_i32_0 = arith.constant 0 : i32
    %c0_i32_1 = arith.constant 0 : i32
    return %c0_i32, %c0_i32_0 : i32, i32
  }
  func.func @transform_2(%arg0: i32) -> (i32, i32) {
    %c0_i32 = arith.constant 0 : i32
    %c0_i32_0 = arith.constant 0 : i32
    %c0_i32_1 = arith.constant 0 : i32
    return %c0_i32, %c0_i32_0 : i32, i32
  }
  func.func @transform_3(%arg0: i32) -> (i32, i32) {
    %c0_i32 = arith.constant 0 : i32
    %c0_i32_0 = arith.constant 0 : i32
    %c0_i32_1 = arith.constant 0 : i32
    return %c0_i32, %c0_i32_0 : i32, i32
  }
  func.func @transform_4(%arg0: i32) -> (i32, i32) {
    %c0_i32 = arith.constant 0 : i32
    %c0_i32_0 = arith.constant 0 : i32
    %c0_i32_1 = arith.constant 0 : i32
    return %c0_i32, %c0_i32_0 : i32, i32
  }
  func.func @transform_5(%arg0: i32) -> (i32, i32, i32) {
    %c0_i32 = arith.constant 0 : i32
    %c0_i32_0 = arith.constant 0 : i32
    %c0_i32_1 = arith.constant 0 : i32
    return %arg0, %c0_i32, %c0_i32_0 : i32, i32, i32
  }
  func.func @transform_6(%arg0: i32) -> (i32, i32, i32) {
    %c0_i32 = arith.constant 0 : i32
    %c0_i32_0 = arith.constant 0 : i32
    %c0_i32_1 = arith.constant 0 : i32
    return %arg0, %c0_i32, %c0_i32_0 : i32, i32, i32
  }
}

</mosaic_0001>

<llo_original>
// kernel: _fused_forward.1
$region0: #{_fused_forward.1}
  #allocation0 [shape = 'u32[]', space=smem, size = 0x4, offset = 0x4, fixed_abs, tag = 'smem constant byte address 0x4 - core index']
  #allocation1 [shape = 'u32[144,128]{1,0:T(1,128)}', space=vmem, size = 0x12000, scoped, tag = 'internal scratch']
  #allocation2 [shape = 'f32[2080,128]{1,0:T(8,128)}', space=vmem, size = 0x104000, scoped, tag = 'scratch operand']
  #allocation3 [shape = 'f32[16,112]{1,0:T(8,128)}', space=vmem, size = 0x2000, scoped, tag = 'scratch operand']
  %s0 = inlined_call_operand.vmem [shape: bf16[75,256], index: 0, kind: input, shape index: {}]
  %s1 = inlined_call_operand.vmem [shape: bf16[2080,75], index: 1, kind: input, shape index: {}]
  %s2 = inlined_call_operand.vmem [shape: f32[160,1], index: 2, kind: input, shape index: {}]
  %s3 = inlined_call_operand.vmem [shape: bf16[208,160], index: 3, kind: input, shape index: {}]
  %s4 = inlined_call_operand.vmem [shape: f32[16,1], index: 4, kind: input, shape index: {}]
  %s5 = inlined_call_operand.vmem [shape: f32[2,160,116], index: 5, kind: output, shape index: {0}]
  %s6 = inlined_call_operand.vmem [shape: f32[2,16,112], index: 6, kind: output, shape index: {1}]
  %7 = xla_tuple %s5, %s6
  %s8 = sld [smem:[#allocation0]]
  $region102: #{_fused_forward.1} parent=0
    _
  %s10 = ssub.s32 1, %s8
  %s11 = scalar_select 0, %s10, %s8
  $region1: #{_fused_forward.1} parent=0
    #allocation4 [shape = 'u8[40960]{0}', space=vmem, size = 0xa000, scoped, tag = 'input window, operand 0']
    loop: start=0, step=1, limit=4
    $region2: #{_fused_forward.1} parent=1 // loop_pre_header
      _
    $region3: #{_fused_forward.1} parent=1 // loop_header
      %s13 = sphi 0, %s17
      %p14 = scmp.ge.s32.totalorder %s13, 4
      %s23 = sphi 0, %s25
      %s26 = sphi 0, %s23
      %s27 = sphi 0, %s26
      %s43 = sphi 0, %s27
      %s47 = sphi 0, %s47
      %s49 = sphi 0, %s47
      %s50 = sphi 0, %s49
      %s64 = sphi 0, %s50
      %s68 = sphi 0, %s68
      %s70 = sphi 0, %s68
      %s71 = sphi 0, %s70
      %s85 = sphi 0, %s71
      %s89 = sphi 0, %s89
      %s91 = sphi 0, %s89
      %s92 = sphi 0, %s91
      %s106 = sphi 0, %s92
      %s110 = sphi 0, %s110
      %s112 = sphi 0, %s110
      %s113 = sphi 0, %s112
      %s127 = sphi 0, %s113
      %s133 = sphi 0, %s135
      %s136 = sphi 0, %s133
      %s137 = sphi 0, %s136
      %s153 = sphi 0, %s137
      %s159 = sphi 0, %s161
      %s162 = sphi 0, %s159
      %s163 = sphi 0, %s162
      %s179 = sphi 0, %s163
    $region4: #{_fused_forward.1} parent=1 // loop_header_branch
      %16 = sbr.rel (%p14) target = $region8
    $region5: #{_fused_forward.1} parent=1 // loop_body
      %s18 = ssub.s32 %s13, 1
      %s19 = ssub.s32 %s13, 2
      %s20 = sadd.s32 %s13, 1
      %s21 = ssub.s32 %s13, %s20
      %p22 = scmp.eq.s32.totalorder %s21, 0
      %s24 = sadd.s32 %s23, 1
      %s25 = scalar_select %p22, %s23, %s24
      %p28 = pneg %p22
      %p29 = scmp.eq.s32.totalorder %s13, 1
      %p30 = por %p28, %p29
      %p31 = scmp.ne.s32.totalorder %s23, %s26
      %p32 = scmp.eq.s32.totalorder %s13, 0
      %p33 = por %p31, %p32
      %p34 = scmp.ne.s32.totalorder %s23, %s26
      %p35 = scmp.eq.s32.totalorder %s18, 1
      %p36 = por %p34, %p35
      %p37 = scmp.ne.s32.totalorder %s26, %s27
      %p38 = scmp.eq.s32.totalorder %s18, 0
      %p39 = por %p37, %p38
      %p40 = scmp.ne.s32.totalorder %s26, %s27
      %p41 = scmp.eq.s32.totalorder %s19, 1
      %p42 = por %p40, %p41
      %p44 = scmp.ne.s32.totalorder %s27, %s43
      %p45 = scmp.eq.s32.totalorder %s19, 0
      %p46 = por %p44, %p45
      %s48 = sadd.s32 %s47, 1
      %p51 = scmp.eq.s32.totalorder %s13, 1
      %p52 = scmp.ne.s32.totalorder %s47, %s49
      %p53 = scmp.eq.s32.totalorder %s13, 0
      %p54 = por %p52, %p53
      %p55 = scmp.ne.s32.totalorder %s47, %s49
      %p56 = scmp.eq.s32.totalorder %s18, 1
      %p57 = por %p55, %p56
      %p58 = scmp.ne.s32.totalorder %s49, %s50
      %p59 = scmp.eq.s32.totalorder %s18, 0
      %p60 = por %p58, %p59
      %p61 = scmp.ne.s32.totalorder %s49, %s50
      %p62 = scmp.eq.s32.totalorder %s19, 1
      %p63 = por %p61, %p62
      %p65 = scmp.ne.s32.totalorder %s50, %s64
      %p66 = scmp.eq.s32.totalorder %s19, 0
      %p67 = por %p65, %p66
      %s69 = sadd.s32 %s68, 1
      %p72 = scmp.eq.s32.totalorder %s13, 1
      %p73 = scmp.ne.s32.totalorder %s68, %s70
      %p74 = scmp.eq.s32.totalorder %s13, 0
      %p75 = por %p73, %p74
      %p76 = scmp.ne.s32.totalorder %s68, %s70
      %p77 = scmp.eq.s32.totalorder %s18, 1
      %p78 = por %p76, %p77
      %p79 = scmp.ne.s32.totalorder %s70, %s71
      %p80 = scmp.eq.s32.totalorder %s18, 0
      %p81 = por %p79, %p80
      %p82 = scmp.ne.s32.totalorder %s70, %s71
      %p83 = scmp.eq.s32.totalorder %s19, 1
      %p84 = por %p82, %p83
      %p86 = scmp.ne.s32.totalorder %s71, %s85
      %p87 = scmp.eq.s32.totalorder %s19, 0
      %p88 = por %p86, %p87
      %s90 = sadd.s32 %s89, 1
      %p93 = scmp.eq.s32.totalorder %s13, 1
      %p94 = scmp.ne.s32.totalorder %s89, %s91
      %p95 = scmp.eq.s32.totalorder %s13, 0
      %p96 = por %p94, %p95
      %p97 = scmp.ne.s32.totalorder %s89, %s91
      %p98 = scmp.eq.s32.totalorder %s18, 1
      %p99 = por %p97, %p98
      %p100 = scmp.ne.s32.totalorder %s91, %s92
      %p101 = scmp.eq.s32.totalorder %s18, 0
      %p102 = por %p100, %p101
      %p103 = scmp.ne.s32.totalorder %s91, %s92
      %p104 = scmp.eq.s32.totalorder %s19, 1
      %p105 = por %p103, %p104
      %p107 = scmp.ne.s32.totalorder %s92, %s106
      %p108 = scmp.eq.s32.totalorder %s19, 0
      %p109 = por %p107, %p108
      %s111 = sadd.s32 %s110, 1
      %p114 = scmp.eq.s32.totalorder %s13, 1
      %p115 = scmp.ne.s32.totalorder %s110, %s112
      %p116 = scmp.eq.s32.totalorder %s13, 0
      %p117 = por %p115, %p116
      %p118 = scmp.ne.s32.totalorder %s110, %s112
      %p119 = scmp.eq.s32.totalorder %s18, 1
      %p120 = por %p118, %p119
      %p121 = scmp.ne.s32.totalorder %s112, %s113
      %p122 = scmp.eq.s32.totalorder %s18, 0
      %p123 = por %p121, %p122
      %p124 = scmp.ne.s32.totalorder %s112, %s113
      %p125 = scmp.eq.s32.totalorder %s19, 1
      %p126 = por %p124, %p125
      %p128 = scmp.ne.s32.totalorder %s113, %s127
      %p129 = scmp.eq.s32.totalorder %s19, 0
      %p130 = por %p128, %p129
      %s131 = ssub.s32 %s13, %s20
      %p132 = scmp.eq.s32.totalorder %s131, 0
      %s134 = sadd.s32 %s133, 1
      %s135 = scalar_select %p132, %s133, %s134
      %p138 = pneg %p132
      %p139 = scmp.eq.s32.totalorder %s13, 1
      %p140 = por %p138, %p139
      %p141 = scmp.ne.s32.totalorder %s133, %s136
      %p142 = scmp.eq.s32.totalorder %s13, 0
      %p143 = por %p141, %p142
      %p144 = scmp.ne.s32.totalorder %s133, %s136
      %p145 = scmp.eq.s32.totalorder %s18, 1
      %p146 = por %p144, %p145
      %p147 = scmp.ne.s32.totalorder %s136, %s137
      %p148 = scmp.eq.s32.totalorder %s18, 0
      %p149 = por %p147, %p148
      %p150 = scmp.ne.s32.totalorder %s136, %s137
      %p151 = scmp.eq.s32.totalorder %s19, 1
      %p152 = por %p150, %p151
      %p154 = scmp.ne.s32.totalorder %s137, %s153
      %p155 = scmp.eq.s32.totalorder %s19, 0
      %p156 = por %p154, %p155
      %s157 = ssub.s32 %s13, %s20
      %p158 = scmp.eq.s32.totalorder %s157, 0
      %s160 = sadd.s32 %s159, 1
      %s161 = scalar_select %p158, %s159, %s160
      %p164 = pneg %p158
      %p165 = scmp.eq.s32.totalorder %s13, 1
      %p166 = por %p164, %p165
      %p167 = scmp.ne.s32.totalorder %s159, %s162
      %p168 = scmp.eq.s32.totalorder %s13, 0
      %p169 = por %p167, %p168
      %p170 = scmp.ne.s32.totalorder %s159, %s162
      %p171 = scmp.eq.s32.totalorder %s18, 1
      %p172 = por %p170, %p171
      %p173 = scmp.ne.s32.totalorder %s162, %s163
      %p174 = scmp.eq.s32.totalorder %s18, 0
      %p175 = por %p173, %p174
      %p176 = scmp.ne.s32.totalorder %s162, %s163
      %p177 = scmp.eq.s32.totalorder %s19, 1
      %p178 = por %p176, %p177
      %p180 = scmp.ne.s32.totalorder %s163, %s179
      %p181 = scmp.eq.s32.totalorder %s19, 0
      %p182 = por %p180, %p181
      %p183 = scmp.le.s32.totalorder 1, %s13
      %p184 = scmp.lt.s32.totalorder %s13, 3
      %p185 = pnand %p183, %p184
      %p186 = pneg %p185
      // Predicated region
      $region9: #{_fused_forward.1} parent=5 // pred_check
        _
      $region10: #{_fused_forward.1} parent=5 // pred_check_branch
        %188 = sbr.rel (%p185) target = $region12
      $region11: #{_fused_forward.1} parent=5 // pred_region
        %s189 = ssub.s32 %s13, 1
        // Predicated region
        $region13: #{_fused_forward.1} parent=11 // pred_check
          %p190 = pneg %p60
        $region14: #{_fused_forward.1} parent=11 // pred_check_branch
          %192 = sbr.rel (%p190) target = $region16
        $region15: #{_fused_forward.1} parent=11 // pred_region
          _
        $region16: #{_fused_forward.1} parent=11 // pred_fallthru
          _
        // Predicated region
        $region17: #{_fused_forward.1} parent=11 // pred_check
          %p193 = pneg %p81
        $region18: #{_fused_forward.1} parent=11 // pred_check_branch
          %195 = sbr.rel (%p193) target = $region20
        $region19: #{_fused_forward.1} parent=11 // pred_region
          _
        $region20: #{_fused_forward.1} parent=11 // pred_fallthru
          _
        // Predicated region
        $region21: #{_fused_forward.1} parent=11 // pred_check
          %p196 = pneg %p102
        $region22: #{_fused_forward.1} parent=11 // pred_check_branch
          %198 = sbr.rel (%p196) target = $region24
        $region23: #{_fused_forward.1} parent=11 // pred_region
          _
        $region24: #{_fused_forward.1} parent=11 // pred_fallthru
          _
        // Predicated region
        $region25: #{_fused_forward.1} parent=11 // pred_check
          %p199 = pneg %p123
        $region26: #{_fused_forward.1} parent=11 // pred_check_branch
          %201 = sbr.rel (%p199) target = $region28
        $region27: #{_fused_forward.1} parent=11 // pred_region
          _
        $region28: #{_fused_forward.1} parent=11 // pred_fallthru
          _
      $region12: #{_fused_forward.1} parent=5 // pred_fallthru
        _
      %p202 = scmp.lt.s32.totalorder %s13, 2
      // Predicated region
      $region29: #{_fused_forward.1} parent=5 // pred_check
        %p203 = pneg %p202
      $region30: #{_fused_forward.1} parent=5 // pred_check_branch
        %205 = sbr.rel (%p203) target = $region32
      $region31: #{_fused_forward.1} parent=5 // pred_region
        // Predicated region
        $region33: #{_fused_forward.1} parent=31 // pred_check
          %p206 = pneg %p33
        $region34: #{_fused_forward.1} parent=31 // pred_check_branch
          %208 = sbr.rel (%p206) target = $region36
        $region35: #{_fused_forward.1} parent=31 // pred_region
          %s209 = sand.u32 %s23, 1
          %s210 = sand.u32 %s23, 1
          %s211 = smul.addr %s210, 40
          %s212 = scalar_lea.vmem [#allocation4], %s211
          %s213 = smul.addr %s13, 4
          %s214 = scalar_lea.vmem %s0, %s213
          // Predicated region
          $region37: #{_fused_forward.1} parent=35 // pred_check
            _
          $region38: #{_fused_forward.1} parent=35 // pred_check_branch
            %216 = sbr.rel (0) target = $region40
          $region39: #{_fused_forward.1} parent=35 // pred_region
            // Predicated region
            $region41: #{_fused_forward.1} parent=39 // pred_check
              _
            $region42: #{_fused_forward.1} parent=39 // pred_check_branch
              %218 = sbr.rel target = $region44
            $region43: #{_fused_forward.1} parent=39 // pred_region
              // Predicated region
              $region56: #{_fused_forward.1} parent=43 // pred_check
                _
              $region57: #{_fused_forward.1} parent=43 // pred_check_branch
                %251 = sbr.rel (0) target = $region59
              $region58: #{_fused_forward.1} parent=43 // pred_region
                loop: start=0, step=1, limit=1
                $region60: #{_fused_forward.1} parent=58 // loop_pre_header
                  _
                $region61: #{_fused_forward.1} parent=58 // loop_header
                  %s253 = sphi 0, %s257
                  %p254 = scmp.ge.s32.totalorder %s253, 1
                  %s258 = sphi %s214, %s214
                  %s259 = sphi %s212, %s212
                $region62: #{_fused_forward.1} parent=58 // loop_header_branch
                  %256 = sbr.rel (%p254) target = $region66
                $region63: #{_fused_forward.1} parent=58 // loop_body
                  _
                $region64: #{_fused_forward.1} parent=58 // loop_footer
                  %s257 = sadd.s32 1, %s253
                $region65: #{_fused_forward.1} parent=58 // loop_footer_branch
                  %252 = sbr.rel target = $region61
                $region66: #{_fused_forward.1} parent=58 // loop_exit
                  _
                loop: start=0, step=1, limit=1
                $region67: #{_fused_forward.1} parent=58 // loop_pre_header
                  _
                $region68: #{_fused_forward.1} parent=58 // loop_header
                  %s262 = sphi 0, %s266
                  %p263 = scmp.ge.s32.totalorder %s262, 1
                  %s267 = sphi %s214, %s214
                  %s268 = sphi %s212, %s212
                $region69: #{_fused_forward.1} parent=58 // loop_header_branch
                  %265 = sbr.rel (%p263) target = $region73
                $region70: #{_fused_forward.1} parent=58 // loop_body
                  %v269 = vld [vmem:[%s267] sm:$0xf]
                  %270 = vst [vmem:[%s268] sm:$0xf] %v269
                  %v271 = vld [vmem:[%s267 + $0x8] sm:$0xf]
                  %272 = vst [vmem:[%s268 + $0x4] sm:$0xf] %v271
                  %v273 = vld [vmem:[%s267 + $0x10] sm:$0xf]
                  %274 = vst [vmem:[%s268 + $0x8] sm:$0xf] %v273
                  %v275 = vld [vmem:[%s267 + $0x18] sm:$0xf]
                  %276 = vst [vmem:[%s268 + $0xc] sm:$0xf] %v275
                  %v277 = vld [vmem:[%s267 + $0x20] sm:$0xf]
                  %278 = vst [vmem:[%s268 + $0x10] sm:$0xf] %v277
                  %v279 = vld [vmem:[%s267 + $0x28] sm:$0xf]
                  %280 = vst [vmem:[%s268 + $0x14] sm:$0xf] %v279
                  %v281 = vld [vmem:[%s267 + $0x30] sm:$0xf]
                  %282 = vst [vmem:[%s268 + $0x18] sm:$0xf] %v281
                  %v283 = vld [vmem:[%s267 + $0x38] sm:$0xf]
                  %284 = vst [vmem:[%s268 + $0x1c] sm:$0xf] %v283
                  %v285 = vld [vmem:[%s267 + $0x40] sm:$0xf]
                  %286 = vst [vmem:[%s268 + $0x20] sm:$0xf] %v285
                  %v287 = vld [vmem:[%s267 + $0x48] sm:$0xf]
                  %288 = vst [vmem:[%s268 + $0x24] sm:$0xf] %v287
                $region71: #{_fused_forward.1} parent=58 // loop_footer
                  %s266 = sadd.s32 1, %s262
                $region72: #{_fused_forward.1} parent=58 // loop_footer_branch
                  %261 = sbr.rel target = $region68
                $region73: #{_fused_forward.1} parent=58 // loop_exit
                  _
              $region59: #{_fused_forward.1} parent=43 // pred_fallthru
                _
            $region44: #{_fused_forward.1} parent=39 // pred_fallthru
              _
            // Predicated region
            $region45: #{_fused_forward.1} parent=39 // pred_check
              _
            $region46: #{_fused_forward.1} parent=39 // pred_check_branch
              %220 = sbr.rel (0) target = $region48
            $region47: #{_fused_forward.1} parent=39 // pred_region
              loop: start=0, step=1, limit=1
              $region49: #{_fused_forward.1} parent=47 // loop_pre_header
                _
              $region50: #{_fused_forward.1} parent=47 // loop_header
                %s223 = sphi 0, %s227
                %p224 = scmp.ge.s32.totalorder %s223, 1
                %s228 = sphi %s214, %s214
                %s229 = sphi %s212, %s212
              $region51: #{_fused_forward.1} parent=47 // loop_header_branch
                %226 = sbr.rel (%p224) target = $region55
              $region52: #{_fused_forward.1} parent=47 // loop_body
                %v230 = vld [vmem:[%s228] sm:$0xf]
                %231 = vst [vmem:[%s229] sm:$0xf] %v230
                %v232 = vld [vmem:[%s228 + $0x8] sm:$0xf]
                %233 = vst [vmem:[%s229 + $0x4] sm:$0xf] %v232
                %v234 = vld [vmem:[%s228 + $0x10] sm:$0xf]
                %235 = vst [vmem:[%s229 + $0x8] sm:$0xf] %v234
                %v236 = vld [vmem:[%s228 + $0x18] sm:$0xf]
                %237 = vst [vmem:[%s229 + $0xc] sm:$0xf] %v236
                %v238 = vld [vmem:[%s228 + $0x20] sm:$0xf]
                %239 = vst [vmem:[%s229 + $0x10] sm:$0xf] %v238
                %v240 = vld [vmem:[%s228 + $0x28] sm:$0xf]
                %241 = vst [vmem:[%s229 + $0x14] sm:$0xf] %v240
                %v242 = vld [vmem:[%s228 + $0x30] sm:$0xf]
                %243 = vst [vmem:[%s229 + $0x18] sm:$0xf] %v242
                %v244 = vld [vmem:[%s228 + $0x38] sm:$0xf]
                %245 = vst [vmem:[%s229 + $0x1c] sm:$0xf] %v244
                %v246 = vld [vmem:[%s228 + $0x40] sm:$0xf]
                %247 = vst [vmem:[%s229 + $0x20] sm:$0xf] %v246
                %v248 = vld [vmem:[%s228 + $0x48] sm:$0xf]
                %249 = vst [vmem:[%s229 + $0x24] sm:$0xf] %v248
              $region53: #{_fused_forward.1} parent=47 // loop_footer
                %s227 = sadd.s32 1, %s223
              $region54: #{_fused_forward.1} parent=47 // loop_footer_branch
                %222 = sbr.rel target = $region50
              $region55: #{_fused_forward.1} parent=47 // loop_exit
                _
            $region48: #{_fused_forward.1} parent=39 // pred_fallthru
              _
          $region40: #{_fused_forward.1} parent=35 // pred_fallthru
            _
          %289 = vnop
        $region36: #{_fused_forward.1} parent=31 // pred_fallthru
          _
      $region32: #{_fused_forward.1} parent=5 // pred_fallthru
        _
      %p290 = scmp.le.s32.totalorder 1, %s13
      %p291 = scmp.lt.s32.totalorder %s13, 3
      %p292 = pnand %p290, %p291
      %p293 = pneg %p292
      // Predicated region
      $region74: #{_fused_forward.1} parent=5 // pred_check
        _
      $region75: #{_fused_forward.1} parent=5 // pred_check_branch
        %295 = sbr.rel (%p292) target = $region77
      $region76: #{_fused_forward.1} parent=5 // pred_region
        %s296 = ssub.s32 %s13, 1
        %s297 = sand.u32 %s26, 1
        %s298 = sand.u32 %s26, 1
        %s299 = smul.addr %s298, 40
        %s300 = scalar_lea.vmem [#allocation4], %s299
        // Predicated region
        $region78: #{_fused_forward.1} parent=76 // pred_check
          %p301 = pneg %p39
        $region79: #{_fused_forward.1} parent=76 // pred_check_branch
          %303 = sbr.rel (%p301) target = $region81
        $region80: #{_fused_forward.1} parent=76 // pred_region
          _
        $region81: #{_fused_forward.1} parent=76 // pred_fallthru
          _
        %s304 = sand.u32 %s26, 1
        %s305 = sand.u32 %s26, 1
        %s306 = smul.addr %s305, 40
        %s307 = scalar_lea.vmem [#allocation4], %s306
        %p308 = pneg %p39
        %p309 = pneg %p36
        %p310 = pneg %p60
        %p311 = pneg %p57
        %p312 = pneg %p81
        %p313 = pneg %p78
        %p314 = pneg %p102
        %p315 = pneg %p99
        %p316 = pneg %p123
        %p317 = pneg %p120
        %p318 = pneg %p149
        %p319 = pneg %p146
        %p320 = scmp.lt.s32.totalorder %s18, 1
        %s321 = scalar_select %p320, %s18, 1
        %s322 = smul.addr %s321, 20
        %s323 = smul.addr %s322, 8
        %s324 = scalar_lea.vmem %s5, %s323
        %p325 = pneg %p175
        %p326 = pneg %p172
        %p327 = scmp.lt.s32.totalorder %s18, 1
        %s328 = scalar_select %p327, %s18, 1
        %s329 = smul.addr %s328, 2
        %s330 = smul.addr %s329, 8
        %s331 = scalar_lea.vmem %s6, %s330
        %p332 = scmp.lt.s32.totalorder %s18, 1
        %s333 = scalar_select %p332, %s18, 1
        %s334 = smul.addr %s333, 20
        %s335 = smul.addr %s334, 8
        %s336 = scalar_lea.vmem %s5, %s335
        %p337 = scmp.lt.s32.totalorder %s18, 1
        %s338 = scalar_select %p337, %s18, 1
        %s339 = smul.addr %s338, 2
        %s340 = smul.addr %s339, 8
        %s341 = scalar_lea.vmem %s6, %s340
        %v343 = vld [vmem:[%s1] sm:$0xf]
        %v344 = vld [vmem:[%s1 + $0x4] sm:$0xf]
        %v345 = vld [vmem:[%s1 + $0x8] sm:$0xf]
        %v346 = vld [vmem:[%s1 + $0xc] sm:$0xf]
        %v347 = vld [vmem:[%s1 + $0x10] sm:$0xf]
        %v348 = vld [vmem:[%s1 + $0x14] sm:$0xf]
        %v349 = vld [vmem:[%s1 + $0x18] sm:$0xf]
        %v350 = vld [vmem:[%s1 + $0x1c] sm:$0xf]
        %v351 = vld [vmem:[%s1 + $0x20] sm:$0xf]
        %v352 = vld [vmem:[%s1 + $0x24] sm:$0xf]
        %v353 = vld [vmem:[%s1 + $0x28] sm:$0xf]
        %v354 = vld [vmem:[%s1 + $0x2c] sm:$0xf]
        %v355 = vld [vmem:[%s1 + $0x30] sm:$0xf]
        %v356 = vld [vmem:[%s1 + $0x34] sm:$0xf]
        %v357 = vld [vmem:[%s1 + $0x38] sm:$0xf]
        %v358 = vld [vmem:[%s1 + $0x3c] sm:$0xf]
        %v359 = vld [vmem:[%s1 + $0x40] sm:$0xf]
        %v360 = vld [vmem:[%s1 + $0x44] sm:$0xf]
        %v361 = vld [vmem:[%s1 + $0x48] sm:$0xf]
        %v362 = vld [vmem:[%s1 + $0x4c] sm:$0xf]
        %v363 = vld [vmem:[%s1 + $0x50] sm:$0xf]
        %v364 = vld [vmem:[%s1 + $0x54] sm:$0xf]
        %v365 = vld [vmem:[%s1 + $0x58] sm:$0xf]
        %v366 = vld [vmem:[%s1 + $0x5c] sm:$0xf]
        %v367 = vld [vmem:[%s1 + $0x60] sm:$0xf]
        %v368 = vld [vmem:[%s1 + $0x64] sm:$0xf]
        %v369 = vld [vmem:[%s1 + $0x68] sm:$0xf]
        %v370 = vld [vmem:[%s1 + $0x6c] sm:$0xf]
        %v371 = vld [vmem:[%s1 + $0x70] sm:$0xf]
        %v372 = vld [vmem:[%s1 + $0x74] sm:$0xf]
        %v373 = vld [vmem:[%s1 + $0x78] sm:$0xf]
        %v374 = vld [vmem:[%s1 + $0x7c] sm:$0xf]
        %v375 = vld [vmem:[%s1 + $0x80] sm:$0xf]
        %v376 = vld [vmem:[%s1 + $0x84] sm:$0xf]
        %v377 = vld [vmem:[%s1 + $0x88] sm:$0xf]
        %v378 = vld [vmem:[%s1 + $0x8c] sm:$0xf]
        %v379 = vld [vmem:[%s1 + $0x90] sm:$0xf]
        %v380 = vld [vmem:[%s1 + $0x94] sm:$0xf]
        %v381 = vld [vmem:[%s1 + $0x98] sm:$0xf]
        %v382 = vld [vmem:[%s1 + $0x9c] sm:$0xf]
        %v383 = vld [vmem:[%s1 + $0xa0] sm:$0xf]
        %v384 = vld [vmem:[%s1 + $0xa4] sm:$0xf]
        %v385 = vld [vmem:[%s1 + $0xa8] sm:$0xf]
        %v386 = vld [vmem:[%s1 + $0xac] sm:$0xf]
        %v387 = vld [vmem:[%s1 + $0xb0] sm:$0xf]
        %v388 = vld [vmem:[%s1 + $0xb4] sm:$0xf]
        %v389 = vld [vmem:[%s1 + $0xb8] sm:$0xf]
        %v390 = vld [vmem:[%s1 + $0xbc] sm:$0xf]
        %v391 = vld [vmem:[%s1 + $0xc0] sm:$0xf]
        %v392 = vld [vmem:[%s1 + $0xc4] sm:$0xf]
        %v393 = vld [vmem:[%s1 + $0xc8] sm:$0xf]
        %v394 = vld [vmem:[%s1 + $0xcc] sm:$0xf]
        %v395 = vld [vmem:[%s1 + $0xd0] sm:$0xf]
        %v396 = vld [vmem:[%s1 + $0xd4] sm:$0xf]
        %v397 = vld [vmem:[%s1 + $0xd8] sm:$0xf]
        %v398 = vld [vmem:[%s1 + $0xdc] sm:$0xf]
        %v399 = vld [vmem:[%s1 + $0xe0] sm:$0xf]
        %v400 = vld [vmem:[%s1 + $0xe4] sm:$0xf]
        %v401 = vld [vmem:[%s1 + $0xe8] sm:$0xf]
        %v402 = vld [vmem:[%s1 + $0xec] sm:$0xf]
        %v403 = vld [vmem:[%s1 + $0xf0] sm:$0xf]
        %v404 = vld [vmem:[%s1 + $0xf4] sm:$0xf]
        %v405 = vld [vmem:[%s1 + $0xf8] sm:$0xf]
        %v406 = vld [vmem:[%s1 + $0xfc] sm:$0xf]
        %v407 = vld [vmem:[%s1 + $0x100] sm:$0xf]
        %v408 = vld [vmem:[%s1 + $0x104] sm:$0xf]
        %v409 = vld [vmem:[%s1 + $0x108] sm:$0xf]
        %v410 = vld [vmem:[%s1 + $0x10c] sm:$0xf]
        %v411 = vld [vmem:[%s1 + $0x110] sm:$0xf]
        %v412 = vld [vmem:[%s1 + $0x114] sm:$0xf]
        %v413 = vld [vmem:[%s1 + $0x118] sm:$0xf]
        %v414 = vld [vmem:[%s1 + $0x11c] sm:$0xf]
        %v415 = vld [vmem:[%s1 + $0x120] sm:$0xf]
        %v416 = vld [vmem:[%s1 + $0x124] sm:$0xf]
        %v417 = vld [vmem:[%s1 + $0x128] sm:$0xf]
        %v418 = vld [vmem:[%s1 + $0x12c] sm:$0xf]
        %v419 = vld [vmem:[%s1 + $0x130] sm:$0xf]
        %v420 = vld [vmem:[%s1 + $0x134] sm:$0xf]
        %v421 = vld [vmem:[%s1 + $0x138] sm:$0xf]
        %v422 = vld [vmem:[%s1 + $0x13c] sm:$0xf]
        %v423 = vld [vmem:[%s1 + $0x140] sm:$0xf]
        %v424 = vld [vmem:[%s1 + $0x144] sm:$0xf]
        %v425 = vld [vmem:[%s1 + $0x148] sm:$0xf]
        %v426 = vld [vmem:[%s1 + $0x14c] sm:$0xf]
        %v427 = vld [vmem:[%s1 + $0x150] sm:$0xf]
        %v428 = vld [vmem:[%s1 + $0x154] sm:$0xf]
        %v429 = vld [vmem:[%s1 + $0x158] sm:$0xf]
        %v430 = vld [vmem:[%s1 + $0x15c] sm:$0xf]
        %v431 = vld [vmem:[%s1 + $0x160] sm:$0xf]
        %v432 = vld [vmem:[%s1 + $0x164] sm:$0xf]
        %v433 = vld [vmem:[%s1 + $0x168] sm:$0xf]
        %v434 = vld [vmem:[%s1 + $0x16c] sm:$0xf]
        %v435 = vld [vmem:[%s1 + $0x170] sm:$0xf]
        %v436 = vld [vmem:[%s1 + $0x174] sm:$0xf]
        %v437 = vld [vmem:[%s1 + $0x178] sm:$0xf]
        %v438 = vld [vmem:[%s1 + $0x17c] sm:$0xf]
        %v439 = vld [vmem:[%s1 + $0x180] sm:$0xf]
        %v440 = vld [vmem:[%s1 + $0x184] sm:$0xf]
        %v441 = vld [vmem:[%s1 + $0x188] sm:$0xf]
        %v442 = vld [vmem:[%s1 + $0x18c] sm:$0xf]
        %v443 = vld [vmem:[%s1 + $0x190] sm:$0xf]
        %v444 = vld [vmem:[%s1 + $0x194] sm:$0xf]
        %v445 = vld [vmem:[%s1 + $0x198] sm:$0xf]
        %v446 = vld [vmem:[%s1 + $0x19c] sm:$0xf]
        %v447 = vld [vmem:[%s1 + $0x1a0] sm:$0xf]
        %v448 = vld [vmem:[%s1 + $0x1a4] sm:$0xf]
        %v449 = vld [vmem:[%s1 + $0x1a8] sm:$0xf]
        %v450 = vld [vmem:[%s1 + $0x1ac] sm:$0xf]
        %v451 = vld [vmem:[%s1 + $0x1b0] sm:$0xf]
        %v452 = vld [vmem:[%s1 + $0x1b4] sm:$0xf]
        %v453 = vld [vmem:[%s1 + $0x1b8] sm:$0xf]
        %v454 = vld [vmem:[%s1 + $0x1bc] sm:$0xf]
        %v455 = vld [vmem:[%s1 + $0x1c0] sm:$0xf]
        %v456 = vld [vmem:[%s1 + $0x1c4] sm:$0xf]
        %v457 = vld [vmem:[%s1 + $0x1c8] sm:$0xf]
        %v458 = vld [vmem:[%s1 + $0x1cc] sm:$0xf]
        %v459 = vld [vmem:[%s1 + $0x1d0] sm:$0xf]
        %v460 = vld [vmem:[%s1 + $0x1d4] sm:$0xf]
        %v461 = vld [vmem:[%s1 + $0x1d8] sm:$0xf]
        %v462 = vld [vmem:[%s1 + $0x1dc] sm:$0xf]
        %v463 = vld [vmem:[%s1 + $0x1e0] sm:$0xf]
        %v464 = vld [vmem:[%s1 + $0x1e4] sm:$0xf]
        %v465 = vld [vmem:[%s1 + $0x1e8] sm:$0xf]
        %v466 = vld [vmem:[%s1 + $0x1ec] sm:$0xf]
        %v467 = vld [vmem:[%s1 + $0x1f0] sm:$0xf]
        %v468 = vld [vmem:[%s1 + $0x1f4] sm:$0xf]
        %v469 = vld [vmem:[%s1 + $0x1f8] sm:$0xf]
        %v470 = vld [vmem:[%s1 + $0x1fc] sm:$0xf]
        %v471 = vld [vmem:[%s1 + $0x200] sm:$0xf]
        %v472 = vld [vmem:[%s1 + $0x204] sm:$0xf]
        %v473 = vld [vmem:[%s1 + $0x208] sm:$0xf]
        %v474 = vld [vmem:[%s1 + $0x20c] sm:$0xf]
        %v475 = vld [vmem:[%s1 + $0x210] sm:$0xf]
        %v476 = vld [vmem:[%s1 + $0x214] sm:$0xf]
        %v477 = vld [vmem:[%s1 + $0x218] sm:$0xf]
        %v478 = vld [vmem:[%s1 + $0x21c] sm:$0xf]
        %v479 = vld [vmem:[%s1 + $0x220] sm:$0xf]
        %v480 = vld [vmem:[%s1 + $0x224] sm:$0xf]
        %v481 = vld [vmem:[%s1 + $0x228] sm:$0xf]
        %v482 = vld [vmem:[%s1 + $0x22c] sm:$0xf]
        %v483 = vld [vmem:[%s1 + $0x230] sm:$0xf]
        %v484 = vld [vmem:[%s1 + $0x234] sm:$0xf]
        %v485 = vld [vmem:[%s1 + $0x238] sm:$0xf]
        %v486 = vld [vmem:[%s1 + $0x23c] sm:$0xf]
        %v487 = vld [vmem:[%s1 + $0x240] sm:$0xf]
        %v488 = vld [vmem:[%s1 + $0x244] sm:$0xf]
        %v489 = vld [vmem:[%s1 + $0x248] sm:$0xf]
        %v490 = vld [vmem:[%s1 + $0x24c] sm:$0xf]
        %v491 = vld [vmem:[%s1 + $0x250] sm:$0xf]
        %v492 = vld [vmem:[%s1 + $0x254] sm:$0xf]
        %v493 = vld [vmem:[%s1 + $0x258] sm:$0xf]
        %v494 = vld [vmem:[%s1 + $0x25c] sm:$0xf]
        %v495 = vld [vmem:[%s1 + $0x260] sm:$0xf]
        %v496 = vld [vmem:[%s1 + $0x264] sm:$0xf]
        %v497 = vld [vmem:[%s1 + $0x268] sm:$0xf]
        %v498 = vld [vmem:[%s1 + $0x26c] sm:$0xf]
        %v499 = vld [vmem:[%s1 + $0x270] sm:$0xf]
        %v500 = vld [vmem:[%s1 + $0x274] sm:$0xf]
        %v501 = vld [vmem:[%s1 + $0x278] sm:$0xf]
        %v502 = vld [vmem:[%s1 + $0x27c] sm:$0xf]
        %v503 = vld [vmem:[%s1 + $0x280] sm:$0xf]
        %v504 = vld [vmem:[%s1 + $0x284] sm:$0xf]
        %v505 = vld [vmem:[%s1 + $0x288] sm:$0xf]
        %v506 = vld [vmem:[%s1 + $0x28c] sm:$0xf]
        %v507 = vld [vmem:[%s1 + $0x290] sm:$0xf]
        %v508 = vld [vmem:[%s1 + $0x294] sm:$0xf]
        %v509 = vld [vmem:[%s1 + $0x298] sm:$0xf]
        %v510 = vld [vmem:[%s1 + $0x29c] sm:$0xf]
        %v511 = vld [vmem:[%s1 + $0x2a0] sm:$0xf]
        %v512 = vld [vmem:[%s1 + $0x2a4] sm:$0xf]
        %v513 = vld [vmem:[%s1 + $0x2a8] sm:$0xf]
        %v514 = vld [vmem:[%s1 + $0x2ac] sm:$0xf]
        %v515 = vld [vmem:[%s1 + $0x2b0] sm:$0xf]
        %v516 = vld [vmem:[%s1 + $0x2b4] sm:$0xf]
        %v517 = vld [vmem:[%s1 + $0x2b8] sm:$0xf]
        %v518 = vld [vmem:[%s1 + $0x2bc] sm:$0xf]
        %v519 = vld [vmem:[%s1 + $0x2c0] sm:$0xf]
        %v520 = vld [vmem:[%s1 + $0x2c4] sm:$0xf]
        %v521 = vld [vmem:[%s1 + $0x2c8] sm:$0xf]
        %v522 = vld [vmem:[%s1 + $0x2cc] sm:$0xf]
        %v523 = vld [vmem:[%s1 + $0x2d0] sm:$0xf]
        %v524 = vld [vmem:[%s1 + $0x2d4] sm:$0xf]
        %v525 = vld [vmem:[%s1 + $0x2d8] sm:$0xf]
        %v526 = vld [vmem:[%s1 + $0x2dc] sm:$0xf]
        %v527 = vld [vmem:[%s1 + $0x2e0] sm:$0xf]
        %v528 = vld [vmem:[%s1 + $0x2e4] sm:$0xf]
        %v529 = vld [vmem:[%s1 + $0x2e8] sm:$0xf]
        %v530 = vld [vmem:[%s1 + $0x2ec] sm:$0xf]
        %v531 = vld [vmem:[%s1 + $0x2f0] sm:$0xf]
        %v532 = vld [vmem:[%s1 + $0x2f4] sm:$0xf]
        %v533 = vld [vmem:[%s1 + $0x2f8] sm:$0xf]
        %v534 = vld [vmem:[%s1 + $0x2fc] sm:$0xf]
        %v535 = vld [vmem:[%s1 + $0x300] sm:$0xf]
        %v536 = vld [vmem:[%s1 + $0x304] sm:$0xf]
        %v537 = vld [vmem:[%s1 + $0x308] sm:$0xf]
        %v538 = vld [vmem:[%s1 + $0x30c] sm:$0xf]
        %v539 = vld [vmem:[%s1 + $0x310] sm:$0xf]
        %v540 = vld [vmem:[%s1 + $0x314] sm:$0xf]
        %v541 = vld [vmem:[%s1 + $0x318] sm:$0xf]
        %v542 = vld [vmem:[%s1 + $0x31c] sm:$0xf]
        %v543 = vld [vmem:[%s1 + $0x320] sm:$0xf]
        %v544 = vld [vmem:[%s1 + $0x324] sm:$0xf]
        %v545 = vld [vmem:[%s1 + $0x328] sm:$0xf]
        %v546 = vld [vmem:[%s1 + $0x32c] sm:$0xf]
        %v547 = vld [vmem:[%s1 + $0x330] sm:$0xf]
        %v548 = vld [vmem:[%s1 + $0x334] sm:$0xf]
        %v549 = vld [vmem:[%s1 + $0x338] sm:$0xf]
        %v550 = vld [vmem:[%s1 + $0x33c] sm:$0xf]
        %v551 = vld [vmem:[%s1 + $0x340] sm:$0xf]
        %v552 = vld [vmem:[%s1 + $0x344] sm:$0xf]
        %v553 = vld [vmem:[%s1 + $0x348] sm:$0xf]
        %v554 = vld [vmem:[%s1 + $0x34c] sm:$0xf]
        %v555 = vld [vmem:[%s1 + $0x350] sm:$0xf]
        %v556 = vld [vmem:[%s1 + $0x354] sm:$0xf]
        %v557 = vld [vmem:[%s1 + $0x358] sm:$0xf]
        %v558 = vld [vmem:[%s1 + $0x35c] sm:$0xf]
        %v559 = vld [vmem:[%s1 + $0x360] sm:$0xf]
        %v560 = vld [vmem:[%s1 + $0x364] sm:$0xf]
        %v561 = vld [vmem:[%s1 + $0x368] sm:$0xf]
        %v562 = vld [vmem:[%s1 + $0x36c] sm:$0xf]
        %v563 = vld [vmem:[%s1 + $0x370] sm:$0xf]
        %v564 = vld [vmem:[%s1 + $0x374] sm:$0xf]
        %v565 = vld [vmem:[%s1 + $0x378] sm:$0xf]
        %v566 = vld [vmem:[%s1 + $0x37c] sm:$0xf]
        %v567 = vld [vmem:[%s1 + $0x380] sm:$0xf]
        %v568 = vld [vmem:[%s1 + $0x384] sm:$0xf]
        %v569 = vld [vmem:[%s1 + $0x388] sm:$0xf]
        %v570 = vld [vmem:[%s1 + $0x38c] sm:$0xf]
        %v571 = vld [vmem:[%s1 + $0x390] sm:$0xf]
        %v572 = vld [vmem:[%s1 + $0x394] sm:$0xf]
        %v573 = vld [vmem:[%s1 + $0x398] sm:$0xf]
        %v574 = vld [vmem:[%s1 + $0x39c] sm:$0xf]
        %v575 = vld [vmem:[%s1 + $0x3a0] sm:$0xf]
        %v576 = vld [vmem:[%s1 + $0x3a4] sm:$0xf]
        %v577 = vld [vmem:[%s1 + $0x3a8] sm:$0xf]
        %v578 = vld [vmem:[%s1 + $0x3ac] sm:$0xf]
        %v579 = vld [vmem:[%s1 + $0x3b0] sm:$0xf]
        %v580 = vld [vmem:[%s1 + $0x3b4] sm:$0xf]
        %v581 = vld [vmem:[%s1 + $0x3b8] sm:$0xf]
        %v582 = vld [vmem:[%s1 + $0x3bc] sm:$0xf]
        %v583 = vld [vmem:[%s1 + $0x3c0] sm:$0xf]
        %v584 = vld [vmem:[%s1 + $0x3c4] sm:$0xf]
        %v585 = vld [vmem:[%s1 + $0x3c8] sm:$0xf]
        %v586 = vld [vmem:[%s1 + $0x3cc] sm:$0xf]
        %v587 = vld [vmem:[%s1 + $0x3d0] sm:$0xf]
        %v588 = vld [vmem:[%s1 + $0x3d4] sm:$0xf]
        %v589 = vld [vmem:[%s1 + $0x3d8] sm:$0xf]
        %v590 = vld [vmem:[%s1 + $0x3dc] sm:$0xf]
        %v591 = vld [vmem:[%s1 + $0x3e0] sm:$0xf]
        %v592 = vld [vmem:[%s1 + $0x3e4] sm:$0xf]
        %v593 = vld [vmem:[%s1 + $0x3e8] sm:$0xf]
        %v594 = vld [vmem:[%s1 + $0x3ec] sm:$0xf]
        %v595 = vld [vmem:[%s1 + $0x3f0] sm:$0xf]
        %v596 = vld [vmem:[%s1 + $0x3f4] sm:$0xf]
        %v597 = vld [vmem:[%s1 + $0x3f8] sm:$0xf]
        %v598 = vld [vmem:[%s1 + $0x3fc] sm:$0xf]
        %v599 = vld [vmem:[%s1 + $0x400] sm:$0xf]
        %v600 = vld [vmem:[%s1 + $0x404] sm:$0xf]
        %v601 = vld [vmem:[%s1 + $0x408] sm:$0xf]
        %v602 = vld [vmem:[%s1 + $0x40c] sm:$0xf]
        %v603 = vld [vmem:[%s300] sm:$0xf]
        %v604 = vld [vmem:[%s300 + $0x4] sm:$0xf]
        %v605 = vld [vmem:[%s300 + $0x8] sm:$0xf]
        %v606 = vld [vmem:[%s300 + $0xc] sm:$0xf]
        %v607 = vld [vmem:[%s300 + $0x10] sm:$0xf]
        %v608 = vld [vmem:[%s300 + $0x14] sm:$0xf]
        %v609 = vld [vmem:[%s300 + $0x18] sm:$0xf]
        %v610 = vld [vmem:[%s300 + $0x1c] sm:$0xf]
        %v611 = vld [vmem:[%s300 + $0x20] sm:$0xf]
        %v612 = vld [vmem:[%s300 + $0x24] sm:$0x3]
        %v873 = vunpack.c.l.b16 %v343
        %v874 = vunpack.c.l.b16 %v344
        %v875 = vunpack.c.l.b16 %v345
        %v876 = vunpack.c.l.b16 %v346
        %v877 = vunpack.c.l.b16 %v347
        %v878 = vunpack.c.l.b16 %v348
        %v879 = vunpack.c.l.b16 %v349
        %v880 = vunpack.c.l.b16 %v350
        %v881 = vunpack.c.l.b16 %v351
        %v882 = vunpack.c.l.b16 %v352
        %v883 = vunpack.c.l.b16 %v353
        %v884 = vunpack.c.l.b16 %v354
        %v885 = vunpack.c.l.b16 %v355
        %v886 = vunpack.c.l.b16 %v356
        %v887 = vunpack.c.l.b16 %v357
        %v888 = vunpack.c.l.b16 %v358
        %v889 = vunpack.c.l.b16 %v359
        %v890 = vunpack.c.l.b16 %v360
        %v891 = vunpack.c.l.b16 %v361
        %v892 = vunpack.c.l.b16 %v362
        %v893 = vunpack.c.l.b16 %v363
        %v894 = vunpack.c.l.b16 %v364
        %v895 = vunpack.c.l.b16 %v365
        %v896 = vunpack.c.l.b16 %v366
        %v897 = vunpack.c.l.b16 %v367
        %v898 = vunpack.c.l.b16 %v368
        %v899 = vunpack.c.l.b16 %v369
        %v900 = vunpack.c.l.b16 %v370
        %v901 = vunpack.c.l.b16 %v371
        %v902 = vunpack.c.l.b16 %v372
        %v903 = vunpack.c.l.b16 %v373
        %v904 = vunpack.c.l.b16 %v374
        %v905 = vunpack.c.l.b16 %v375
        %v906 = vunpack.c.l.b16 %v376
        %v907 = vunpack.c.l.b16 %v377
        %v908 = vunpack.c.l.b16 %v378
        %v909 = vunpack.c.l.b16 %v379
        %v910 = vunpack.c.l.b16 %v380
        %v911 = vunpack.c.l.b16 %v381
        %v912 = vunpack.c.l.b16 %v382
        %v913 = vunpack.c.l.b16 %v383
        %v914 = vunpack.c.l.b16 %v384
        %v915 = vunpack.c.l.b16 %v385
        %v916 = vunpack.c.l.b16 %v386
        %v917 = vunpack.c.l.b16 %v387
        %v918 = vunpack.c.l.b16 %v388
        %v919 = vunpack.c.l.b16 %v389
        %v920 = vunpack.c.l.b16 %v390
        %v921 = vunpack.c.l.b16 %v391
        %v922 = vunpack.c.l.b16 %v392
        %v923 = vunpack.c.l.b16 %v393
        %v924 = vunpack.c.l.b16 %v394
        %v925 = vunpack.c.l.b16 %v395
        %v926 = vunpack.c.l.b16 %v396
        %v927 = vunpack.c.l.b16 %v397
        %v928 = vunpack.c.l.b16 %v398
        %v929 = vunpack.c.l.b16 %v399
        %v930 = vunpack.c.l.b16 %v400
        %v931 = vunpack.c.l.b16 %v401
        %v932 = vunpack.c.l.b16 %v402
        %v933 = vunpack.c.l.b16 %v403
        %v934 = vunpack.c.l.b16 %v404
        %v935 = vunpack.c.l.b16 %v405
        %v936 = vunpack.c.l.b16 %v406
        %v937 = vunpack.c.l.b16 %v407
        %v938 = vunpack.c.l.b16 %v408
        %v939 = vunpack.c.l.b16 %v409
        %v940 = vunpack.c.l.b16 %v410
        %v941 = vunpack.c.l.b16 %v411
        %v942 = vunpack.c.l.b16 %v412
        %v943 = vunpack.c.l.b16 %v413
        %v944 = vunpack.c.l.b16 %v414
        %v945 = vunpack.c.l.b16 %v415
        %v946 = vunpack.c.l.b16 %v416
        %v947 = vunpack.c.l.b16 %v417
        %v948 = vunpack.c.l.b16 %v418
        %v949 = vunpack.c.l.b16 %v419
        %v950 = vunpack.c.l.b16 %v420
        %v951 = vunpack.c.l.b16 %v421
        %v952 = vunpack.c.l.b16 %v422
        %v953 = vunpack.c.l.b16 %v423
        %v954 = vunpack.c.l.b16 %v424
        %v955 = vunpack.c.l.b16 %v425
        %v956 = vunpack.c.l.b16 %v426
        %v957 = vunpack.c.l.b16 %v427
        %v958 = vunpack.c.l.b16 %v428
        %v959 = vunpack.c.l.b16 %v429
        %v960 = vunpack.c.l.b16 %v430
        %v961 = vunpack.c.l.b16 %v431
        %v962 = vunpack.c.l.b16 %v432
        %v963 = vunpack.c.l.b16 %v433
        %v964 = vunpack.c.l.b16 %v434
        %v965 = vunpack.c.l.b16 %v435
        %v966 = vunpack.c.l.b16 %v436
        %v967 = vunpack.c.l.b16 %v437
        %v968 = vunpack.c.l.b16 %v438
        %v969 = vunpack.c.l.b16 %v439
        %v970 = vunpack.c.l.b16 %v440
        %v971 = vunpack.c.l.b16 %v441
        %v972 = vunpack.c.l.b16 %v442
        %v973 = vunpack.c.l.b16 %v443
        %v974 = vunpack.c.l.b16 %v444
        %v975 = vunpack.c.l.b16 %v445
        %v976 = vunpack.c.l.b16 %v446
        %v977 = vunpack.c.l.b16 %v447
        %v978 = vunpack.c.l.b16 %v448
        %v979 = vunpack.c.l.b16 %v449
        %v980 = vunpack.c.l.b16 %v450
        %v981 = vunpack.c.l.b16 %v451
        %v982 = vunpack.c.l.b16 %v452
        %v983 = vunpack.c.l.b16 %v453
        %v984 = vunpack.c.l.b16 %v454
        %v985 = vunpack.c.l.b16 %v455
        %v986 = vunpack.c.l.b16 %v456
        %v987 = vunpack.c.l.b16 %v457
        %v988 = vunpack.c.l.b16 %v458
        %v989 = vunpack.c.l.b16 %v459
        %v990 = vunpack.c.l.b16 %v460
        %v991 = vunpack.c.l.b16 %v461
        %v992 = vunpack.c.l.b16 %v462
        %v993 = vunpack.c.l.b16 %v463
        %v994 = vunpack.c.l.b16 %v464
        %v995 = vunpack.c.l.b16 %v465
        %v996 = vunpack.c.l.b16 %v466
        %v997 = vunpack.c.l.b16 %v467
        %v998 = vunpack.c.l.b16 %v468
        %v999 = vunpack.c.l.b16 %v469
        %v1000 = vunpack.c.l.b16 %v470
        %v1001 = vunpack.c.l.b16 %v471
        %v1002 = vunpack.c.l.b16 %v472
        %v1003 = vunpack.c.l.b16 %v473
        %v1004 = vunpack.c.l.b16 %v474
        %v1005 = vunpack.c.l.b16 %v475
        %v1006 = vunpack.c.l.b16 %v476
        %v1007 = vunpack.c.l.b16 %v477
        %v1008 = vunpack.c.l.b16 %v478
        %v1009 = vunpack.c.l.b16 %v479
        %v1010 = vunpack.c.l.b16 %v480
        %v1011 = vunpack.c.l.b16 %v481
        %v1012 = vunpack.c.l.b16 %v482
        %v1013 = vunpack.c.l.b16 %v483
        %v1014 = vunpack.c.l.b16 %v484
        %v1015 = vunpack.c.l.b16 %v485
        %v1016 = vunpack.c.l.b16 %v486
        %v1017 = vunpack.c.l.b16 %v487
        %v1018 = vunpack.c.l.b16 %v488
        %v1019 = vunpack.c.l.b16 %v489
        %v1020 = vunpack.c.l.b16 %v490
        %v1021 = vunpack.c.l.b16 %v491
        %v1022 = vunpack.c.l.b16 %v492
        %v1023 = vunpack.c.l.b16 %v493
        %v1024 = vunpack.c.l.b16 %v494
        %v1025 = vunpack.c.l.b16 %v495
        %v1026 = vunpack.c.l.b16 %v496
        %v1027 = vunpack.c.l.b16 %v497
        %v1028 = vunpack.c.l.b16 %v498
        %v1029 = vunpack.c.l.b16 %v499
        %v1030 = vunpack.c.l.b16 %v500
        %v1031 = vunpack.c.l.b16 %v501
        %v1032 = vunpack.c.l.b16 %v502
        %v1033 = vunpack.c.l.b16 %v503
        %v1034 = vunpack.c.l.b16 %v504
        %v1035 = vunpack.c.l.b16 %v505
        %v1036 = vunpack.c.l.b16 %v506
        %v1037 = vunpack.c.l.b16 %v507
        %v1038 = vunpack.c.l.b16 %v508
        %v1039 = vunpack.c.l.b16 %v509
        %v1040 = vunpack.c.l.b16 %v510
        %v1041 = vunpack.c.l.b16 %v511
        %v1042 = vunpack.c.l.b16 %v512
        %v1043 = vunpack.c.l.b16 %v513
        %v1044 = vunpack.c.l.b16 %v514
        %v1045 = vunpack.c.l.b16 %v515
        %v1046 = vunpack.c.l.b16 %v516
        %v1047 = vunpack.c.l.b16 %v517
        %v1048 = vunpack.c.l.b16 %v518
        %v1049 = vunpack.c.l.b16 %v519
        %v1050 = vunpack.c.l.b16 %v520
        %v1051 = vunpack.c.l.b16 %v521
        %v1052 = vunpack.c.l.b16 %v522
        %v1053 = vunpack.c.l.b16 %v523
        %v1054 = vunpack.c.l.b16 %v524
        %v1055 = vunpack.c.l.b16 %v525
        %v1056 = vunpack.c.l.b16 %v526
        %v1057 = vunpack.c.l.b16 %v527
        %v1058 = vunpack.c.l.b16 %v528
        %v1059 = vunpack.c.l.b16 %v529
        %v1060 = vunpack.c.l.b16 %v530
        %v1061 = vunpack.c.l.b16 %v531
        %v1062 = vunpack.c.l.b16 %v532
        %v1063 = vunpack.c.l.b16 %v533
        %v1064 = vunpack.c.l.b16 %v534
        %v1065 = vunpack.c.l.b16 %v535
        %v1066 = vunpack.c.l.b16 %v536
        %v1067 = vunpack.c.l.b16 %v537
        %v1068 = vunpack.c.l.b16 %v538
        %v1069 = vunpack.c.l.b16 %v539
        %v1070 = vunpack.c.l.b16 %v540
        %v1071 = vunpack.c.l.b16 %v541
        %v1072 = vunpack.c.l.b16 %v542
        %v1073 = vunpack.c.l.b16 %v543
        %v1074 = vunpack.c.l.b16 %v544
        %v1075 = vunpack.c.l.b16 %v545
        %v1076 = vunpack.c.l.b16 %v546
        %v1077 = vunpack.c.l.b16 %v547
        %v1078 = vunpack.c.l.b16 %v548
        %v1079 = vunpack.c.l.b16 %v549
        %v1080 = vunpack.c.l.b16 %v550
        %v1081 = vunpack.c.l.b16 %v551
        %v1082 = vunpack.c.l.b16 %v552
        %v1083 = vunpack.c.l.b16 %v553
        %v1084 = vunpack.c.l.b16 %v554
        %v1085 = vunpack.c.l.b16 %v555
        %v1086 = vunpack.c.l.b16 %v556
        %v1087 = vunpack.c.l.b16 %v557
        %v1088 = vunpack.c.l.b16 %v558
        %v1089 = vunpack.c.l.b16 %v559
        %v1090 = vunpack.c.l.b16 %v560
        %v1091 = vunpack.c.l.b16 %v561
        %v1092 = vunpack.c.l.b16 %v562
        %v1093 = vunpack.c.l.b16 %v563
        %v1094 = vunpack.c.l.b16 %v564
        %v1095 = vunpack.c.l.b16 %v565
        %v1096 = vunpack.c.l.b16 %v566
        %v1097 = vunpack.c.l.b16 %v567
        %v1098 = vunpack.c.l.b16 %v568
        %v1099 = vunpack.c.l.b16 %v569
        %v1100 = vunpack.c.l.b16 %v570
        %v1101 = vunpack.c.l.b16 %v571
        %v1102 = vunpack.c.l.b16 %v572
        %v1103 = vunpack.c.l.b16 %v573
        %v1104 = vunpack.c.l.b16 %v574
        %v1105 = vunpack.c.l.b16 %v575
        %v1106 = vunpack.c.l.b16 %v576
        %v1107 = vunpack.c.l.b16 %v577
        %v1108 = vunpack.c.l.b16 %v578
        %v1109 = vunpack.c.l.b16 %v579
        %v1110 = vunpack.c.l.b16 %v580
        %v1111 = vunpack.c.l.b16 %v581
        %v1112 = vunpack.c.l.b16 %v582
        %v1113 = vunpack.c.l.b16 %v583
        %v1114 = vunpack.c.l.b16 %v584
        %v1115 = vunpack.c.l.b16 %v585
        %v1116 = vunpack.c.l.b16 %v586
        %v1117 = vunpack.c.l.b16 %v587
        %v1118 = vunpack.c.l.b16 %v588
        %v1119 = vunpack.c.l.b16 %v589
        %v1120 = vunpack.c.l.b16 %v590
        %v1121 = vunpack.c.l.b16 %v591
        %v1122 = vunpack.c.l.b16 %v592
        %v1123 = vunpack.c.l.b16 %v593
        %v1124 = vunpack.c.l.b16 %v594
        %v1125 = vunpack.c.l.b16 %v595
        %v1126 = vunpack.c.l.b16 %v596
        %v1127 = vunpack.c.l.b16 %v597
        %v1128 = vunpack.c.l.b16 %v598
        %v1129 = vunpack.c.l.b16 %v599
        %v1130 = vunpack.c.l.b16 %v600
        %v1131 = vunpack.c.l.b16 %v601
        %v1132 = vunpack.c.l.b16 %v602
        %v1133 = vpack.c.b16 %v874, %v873
        %v1134 = vpack.c.b16 %v876, %v875
        %v1135 = vpack.c.b16 %v878, %v877
        %v1136 = vpack.c.b16 %v880, %v879
        %v1137 = vpack.c.b16 %v882, %v881
        %v1138 = vpack.c.b16 %v884, %v883
        %v1139 = vpack.c.b16 %v886, %v885
        %v1140 = vpack.c.b16 %v888, %v887
        %v1141 = vpack.c.b16 %v890, %v889
        %v1142 = vpack.c.b16 %v892, %v891
        %v1143 = vpack.c.b16 %v894, %v893
        %v1144 = vpack.c.b16 %v896, %v895
        %v1145 = vpack.c.b16 %v898, %v897
        %v1146 = vpack.c.b16 %v900, %v899
        %v1147 = vpack.c.b16 %v902, %v901
        %v1148 = vpack.c.b16 %v904, %v903
        %v1149 = vpack.c.b16 %v906, %v905
        %v1150 = vpack.c.b16 %v908, %v907
        %v1151 = vpack.c.b16 %v910, %v909
        %v1152 = vpack.c.b16 %v912, %v911
        %v1153 = vpack.c.b16 %v914, %v913
        %v1154 = vpack.c.b16 %v916, %v915
        %v1155 = vpack.c.b16 %v918, %v917
        %v1156 = vpack.c.b16 %v920, %v919
        %v1157 = vpack.c.b16 %v922, %v921
        %v1158 = vpack.c.b16 %v924, %v923
        %v1159 = vpack.c.b16 %v926, %v925
        %v1160 = vpack.c.b16 %v928, %v927
        %v1161 = vpack.c.b16 %v930, %v929
        %v1162 = vpack.c.b16 %v932, %v931
        %v1163 = vpack.c.b16 %v934, %v933
        %v1164 = vpack.c.b16 %v936, %v935
        %v1165 = vpack.c.b16 %v938, %v937
        %v1166 = vpack.c.b16 %v940, %v939
        %v1167 = vpack.c.b16 %v942, %v941
        %v1168 = vpack.c.b16 %v944, %v943
        %v1169 = vpack.c.b16 %v946, %v945
        %v1170 = vpack.c.b16 %v948, %v947
        %v1171 = vpack.c.b16 %v950, %v949
        %v1172 = vpack.c.b16 %v952, %v951
        %v1173 = vpack.c.b16 %v954, %v953
        %v1174 = vpack.c.b16 %v956, %v955
        %v1175 = vpack.c.b16 %v958, %v957
        %v1176 = vpack.c.b16 %v960, %v959
        %v1177 = vpack.c.b16 %v962, %v961
        %v1178 = vpack.c.b16 %v964, %v963
        %v1179 = vpack.c.b16 %v966, %v965
        %v1180 = vpack.c.b16 %v968, %v967
        %v1181 = vpack.c.b16 %v970, %v969
        %v1182 = vpack.c.b16 %v972, %v971
        %v1183 = vpack.c.b16 %v974, %v973
        %v1184 = vpack.c.b16 %v976, %v975
        %v1185 = vpack.c.b16 %v978, %v977
        %v1186 = vpack.c.b16 %v980, %v979
        %v1187 = vpack.c.b16 %v982, %v981
        %v1188 = vpack.c.b16 %v984, %v983
        %v1189 = vpack.c.b16 %v986, %v985
        %v1190 = vpack.c.b16 %v988, %v987
        %v1191 = vpack.c.b16 %v990, %v989
        %v1192 = vpack.c.b16 %v992, %v991
        %v1193 = vpack.c.b16 %v994, %v993
        %v1194 = vpack.c.b16 %v996, %v995
        %v1195 = vpack.c.b16 %v998, %v997
        %v1196 = vpack.c.b16 %v1000, %v999
        %v1197 = vpack.c.b16 %v1002, %v1001
        %v1198 = vpack.c.b16 %v1004, %v1003
        %v1199 = vpack.c.b16 %v1006, %v1005
        %v1200 = vpack.c.b16 %v1008, %v1007
        %v1201 = vpack.c.b16 %v1010, %v1009
        %v1202 = vpack.c.b16 %v1012, %v1011
        %v1203 = vpack.c.b16 %v1014, %v1013
        %v1204 = vpack.c.b16 %v1016, %v1015
        %v1205 = vpack.c.b16 %v1018, %v1017
        %v1206 = vpack.c.b16 %v1020, %v1019
        %v1207 = vpack.c.b16 %v1022, %v1021
        %v1208 = vpack.c.b16 %v1024, %v1023
        %v1209 = vpack.c.b16 %v1026, %v1025
        %v1210 = vpack.c.b16 %v1028, %v1027
        %v1211 = vpack.c.b16 %v1030, %v1029
        %v1212 = vpack.c.b16 %v1032, %v1031
        %v1213 = vpack.c.b16 %v1034, %v1033
        %v1214 = vpack.c.b16 %v1036, %v1035
        %v1215 = vpack.c.b16 %v1038, %v1037
        %v1216 = vpack.c.b16 %v1040, %v1039
        %v1217 = vpack.c.b16 %v1042, %v1041
        %v1218 = vpack.c.b16 %v1044, %v1043
        %v1219 = vpack.c.b16 %v1046, %v1045
        %v1220 = vpack.c.b16 %v1048, %v1047
        %v1221 = vpack.c.b16 %v1050, %v1049
        %v1222 = vpack.c.b16 %v1052, %v1051
        %v1223 = vpack.c.b16 %v1054, %v1053
        %v1224 = vpack.c.b16 %v1056, %v1055
        %v1225 = vpack.c.b16 %v1058, %v1057
        %v1226 = vpack.c.b16 %v1060, %v1059
        %v1227 = vpack.c.b16 %v1062, %v1061
        %v1228 = vpack.c.b16 %v1064, %v1063
        %v1229 = vpack.c.b16 %v1066, %v1065
        %v1230 = vpack.c.b16 %v1068, %v1067
        %v1231 = vpack.c.b16 %v1070, %v1069
        %v1232 = vpack.c.b16 %v1072, %v1071
        %v1233 = vpack.c.b16 %v1074, %v1073
        %v1234 = vpack.c.b16 %v1076, %v1075
        %v1235 = vpack.c.b16 %v1078, %v1077
        %v1236 = vpack.c.b16 %v1080, %v1079
        %v1237 = vpack.c.b16 %v1082, %v1081
        %v1238 = vpack.c.b16 %v1084, %v1083
        %v1239 = vpack.c.b16 %v1086, %v1085
        %v1240 = vpack.c.b16 %v1088, %v1087
        %v1241 = vpack.c.b16 %v1090, %v1089
        %v1242 = vpack.c.b16 %v1092, %v1091
        %v1243 = vpack.c.b16 %v1094, %v1093
        %v1244 = vpack.c.b16 %v1096, %v1095
        %v1245 = vpack.c.b16 %v1098, %v1097
        %v1246 = vpack.c.b16 %v1100, %v1099
        %v1247 = vpack.c.b16 %v1102, %v1101
        %v1248 = vpack.c.b16 %v1104, %v1103
        %v1249 = vpack.c.b16 %v1106, %v1105
        %v1250 = vpack.c.b16 %v1108, %v1107
        %v1251 = vpack.c.b16 %v1110, %v1109
        %v1252 = vpack.c.b16 %v1112, %v1111
        %v1253 = vpack.c.b16 %v1114, %v1113
        %v1254 = vpack.c.b16 %v1116, %v1115
        %v1255 = vpack.c.b16 %v1118, %v1117
        %v1256 = vpack.c.b16 %v1120, %v1119
        %v1257 = vpack.c.b16 %v1122, %v1121
        %v1258 = vpack.c.b16 %v1124, %v1123
        %v1259 = vpack.c.b16 %v1126, %v1125
        %v1260 = vpack.c.b16 %v1128, %v1127
        %v1261 = vpack.c.b16 %v1130, %v1129
        %v1262 = vpack.c.b16 %v1132, %v1131
        %v1273 = vunpack.c.l.b16 %v603
        %v1274 = vunpack.c.l.b16 %v604
        %v1275 = vunpack.c.l.b16 %v605
        %v1276 = vunpack.c.l.b16 %v606
        %v1277 = vunpack.c.l.b16 %v607
        %v1278 = vunpack.c.l.b16 %v608
        %v1279 = vunpack.c.l.b16 %v609
        %v1280 = vunpack.c.l.b16 %v610
        %v1281 = vunpack.c.l.b16 %v611
        %v1282 = vunpack.c.l.b16 %v612
        %v1283 = vpack.c.b16 %v1274, %v1273
        %v1284 = vpack.c.b16 %v1276, %v1275
        %v1285 = vpack.c.b16 %v1278, %v1277
        %v1286 = vpack.c.b16 %v1280, %v1279
        %v1287 = vpack.c.b16 %v1282, %v1281
        %vm1292 = vcmask 613376
        %v1294 = vsel %vm1292, %v1133, 0
        %v1297 = vsel %vm1292, %v1134, 0
        %v1300 = vsel %vm1292, %v1135, 0
        %v1303 = vsel %vm1292, %v1136, 0
        %v1306 = vsel %vm1292, %v1137, 0
        %v1309 = vsel %vm1292, %v1138, 0
        %v1312 = vsel %vm1292, %v1139, 0
        %v1315 = vsel %vm1292, %v1140, 0
        %v1318 = vsel %vm1292, %v1141, 0
        %v1321 = vsel %vm1292, %v1142, 0
        %v1324 = vsel %vm1292, %v1143, 0
        %v1327 = vsel %vm1292, %v1144, 0
        %v1330 = vsel %vm1292, %v1145, 0
        %v1333 = vsel %vm1292, %v1146, 0
        %v1336 = vsel %vm1292, %v1147, 0
        %v1339 = vsel %vm1292, %v1148, 0
        %v1342 = vsel %vm1292, %v1149, 0
        %v1345 = vsel %vm1292, %v1150, 0
        %v1348 = vsel %vm1292, %v1151, 0
        %v1351 = vsel %vm1292, %v1152, 0
        %v1354 = vsel %vm1292, %v1153, 0
        %v1357 = vsel %vm1292, %v1154, 0
        %v1360 = vsel %vm1292, %v1155, 0
        %v1363 = vsel %vm1292, %v1156, 0
        %v1366 = vsel %vm1292, %v1157, 0
        %v1369 = vsel %vm1292, %v1158, 0
        %v1372 = vsel %vm1292, %v1159, 0
        %v1375 = vsel %vm1292, %v1160, 0
        %v1378 = vsel %vm1292, %v1161, 0
        %v1381 = vsel %vm1292, %v1162, 0
        %v1384 = vsel %vm1292, %v1163, 0
        %v1387 = vsel %vm1292, %v1164, 0
        %v1390 = vsel %vm1292, %v1165, 0
        %v1393 = vsel %vm1292, %v1166, 0
        %v1396 = vsel %vm1292, %v1167, 0
        %v1399 = vsel %vm1292, %v1168, 0
        %v1402 = vsel %vm1292, %v1169, 0
        %v1405 = vsel %vm1292, %v1170, 0
        %v1408 = vsel %vm1292, %v1171, 0
        %v1411 = vsel %vm1292, %v1172, 0
        %v1414 = vsel %vm1292, %v1173, 0
        %v1417 = vsel %vm1292, %v1174, 0
        %v1420 = vsel %vm1292, %v1175, 0
        %v1423 = vsel %vm1292, %v1176, 0
        %v1426 = vsel %vm1292, %v1177, 0
        %v1429 = vsel %vm1292, %v1178, 0
        %v1432 = vsel %vm1292, %v1179, 0
        %v1435 = vsel %vm1292, %v1180, 0
        %v1438 = vsel %vm1292, %v1181, 0
        %v1441 = vsel %vm1292, %v1182, 0
        %v1444 = vsel %vm1292, %v1183, 0
        %v1447 = vsel %vm1292, %v1184, 0
        %v1450 = vsel %vm1292, %v1185, 0
        %v1453 = vsel %vm1292, %v1186, 0
        %v1456 = vsel %vm1292, %v1187, 0
        %v1459 = vsel %vm1292, %v1188, 0
        %v1462 = vsel %vm1292, %v1189, 0
        %v1465 = vsel %vm1292, %v1190, 0
        %v1468 = vsel %vm1292, %v1191, 0
        %v1471 = vsel %vm1292, %v1192, 0
        %v1474 = vsel %vm1292, %v1193, 0
        %v1477 = vsel %vm1292, %v1194, 0
        %v1480 = vsel %vm1292, %v1195, 0
        %v1483 = vsel %vm1292, %v1196, 0
        %v1486 = vsel %vm1292, %v1197, 0
        %v1489 = vsel %vm1292, %v1198, 0
        %v1492 = vsel %vm1292, %v1199, 0
        %v1495 = vsel %vm1292, %v1200, 0
        %v1498 = vsel %vm1292, %v1201, 0
        %v1501 = vsel %vm1292, %v1202, 0
        %v1504 = vsel %vm1292, %v1203, 0
        %v1507 = vsel %vm1292, %v1204, 0
        %v1510 = vsel %vm1292, %v1205, 0
        %v1513 = vsel %vm1292, %v1206, 0
        %v1516 = vsel %vm1292, %v1207, 0
        %v1519 = vsel %vm1292, %v1208, 0
        %v1522 = vsel %vm1292, %v1209, 0
        %v1525 = vsel %vm1292, %v1210, 0
        %v1528 = vsel %vm1292, %v1211, 0
        %v1531 = vsel %vm1292, %v1212, 0
        %v1534 = vsel %vm1292, %v1213, 0
        %v1537 = vsel %vm1292, %v1214, 0
        %v1540 = vsel %vm1292, %v1215, 0
        %v1543 = vsel %vm1292, %v1216, 0
        %v1546 = vsel %vm1292, %v1217, 0
        %v1549 = vsel %vm1292, %v1218, 0
        %v1552 = vsel %vm1292, %v1219, 0
        %v1555 = vsel %vm1292, %v1220, 0
        %v1558 = vsel %vm1292, %v1221, 0
        %v1561 = vsel %vm1292, %v1222, 0
        %v1564 = vsel %vm1292, %v1223, 0
        %v1567 = vsel %vm1292, %v1224, 0
        %v1570 = vsel %vm1292, %v1225, 0
        %v1573 = vsel %vm1292, %v1226, 0
        %v1576 = vsel %vm1292, %v1227, 0
        %v1579 = vsel %vm1292, %v1228, 0
        %v1582 = vsel %vm1292, %v1229, 0
        %v1585 = vsel %vm1292, %v1230, 0
        %v1588 = vsel %vm1292, %v1231, 0
        %v1591 = vsel %vm1292, %v1232, 0
        %v1594 = vsel %vm1292, %v1233, 0
        %v1597 = vsel %vm1292, %v1234, 0
        %v1600 = vsel %vm1292, %v1235, 0
        %v1603 = vsel %vm1292, %v1236, 0
        %v1606 = vsel %vm1292, %v1237, 0
        %v1609 = vsel %vm1292, %v1238, 0
        %v1612 = vsel %vm1292, %v1239, 0
        %v1615 = vsel %vm1292, %v1240, 0
        %v1618 = vsel %vm1292, %v1241, 0
        %v1621 = vsel %vm1292, %v1242, 0
        %v1624 = vsel %vm1292, %v1243, 0
        %v1627 = vsel %vm1292, %v1244, 0
        %v1630 = vsel %vm1292, %v1245, 0
        %v1633 = vsel %vm1292, %v1246, 0
        %v1636 = vsel %vm1292, %v1247, 0
        %v1639 = vsel %vm1292, %v1248, 0
        %v1642 = vsel %vm1292, %v1249, 0
        %v1645 = vsel %vm1292, %v1250, 0
        %v1648 = vsel %vm1292, %v1251, 0
        %v1651 = vsel %vm1292, %v1252, 0
        %v1654 = vsel %vm1292, %v1253, 0
        %v1657 = vsel %vm1292, %v1254, 0
        %v1660 = vsel %vm1292, %v1255, 0
        %v1663 = vsel %vm1292, %v1256, 0
        %v1666 = vsel %vm1292, %v1257, 0
        %v1669 = vsel %vm1292, %v1258, 0
        %v1672 = vsel %vm1292, %v1259, 0
        %v1675 = vsel %vm1292, %v1260, 0
        %v1678 = vsel %vm1292, %v1261, 0
        %v1681 = vsel %vm1292, %v1262, 0
        %vm1683 = vcmask 1044480
        %vm1684 = vcmask 1045504
        %v1685 = vsel %vm1683, 4294967295, 65535
        %v1686 = vsel %vm1684, %v1685, 0
        %v1688 = vand.u32 %v1287, %v1686
        %1690 = vmatprep.subr.bf16.mxu0 0
        %1691 = vmatpush1.bf16.msra.mxu0 %v1283
        %1692 = vmatprep.subr.bf16.mxu0 0
        %1693 = vmatpush1.bf16.msra.mxu0 %v1284
        %1694 = vmatprep.subr.bf16.mxu0 0
        %1695 = vmatpush1.bf16.msra.mxu0 %v1285
        %1696 = vmatprep.subr.bf16.mxu0 0
        %1697 = vmatpush1.bf16.msra.mxu0 %v1286
        %1698 = vmatprep.subr.bf16.mxu0 0
        %1699 = vmatpush1.bf16.msra.mxu0 %v1688
        %1700 = vmatprep.subr.bf16.mxu0 0
        %1701 = vmatpush1.bf16.msra.mxu0 0
        %1702 = vmatprep.subr.bf16.mxu0 0
        %1703 = vmatpush1.bf16.msra.mxu0 0
        %1704 = vmatprep.subr.bf16.mxu0 0
        %1705 = vmatpush1.bf16.msra.mxu0 0
        %1706 = vmatprep.subr.bf16.mxu0 0
        %1707 = vmatpush1.bf16.msra.mxu0 0
        %1708 = vmatprep.subr.bf16.mxu0 0
        %1709 = vmatpush1.bf16.msra.mxu0 0
        %1710 = vmatprep.subr.bf16.mxu0 0
        %1711 = vmatpush1.bf16.msra.mxu0 0
        %1712 = vmatprep.subr.bf16.mxu0 0
        %1713 = vmatpush1.bf16.msra.mxu0 0
        %1714 = vmatprep.subr.bf16.mxu0 0
        %1715 = vmatpush1.bf16.msra.mxu0 0
        %1716 = vmatprep.subr.bf16.mxu0 0
        %1717 = vmatpush1.bf16.msra.mxu0 0
        %1718 = vmatprep.subr.bf16.mxu0 0
        %1719 = vmatpush1.bf16.msra.mxu0 0
        %1720 = vmatprep.subr.bf16.mxu0 0
        %1721 = vmatpush1.bf16.msra.mxu0 0
        %1722 = vmatprep.mubr.bf16.mxu0 0
        %1723 = vmatmul.mubr.bf16.gmra.mrb[0].mxu0 %v1294
        %v1724 = vpop.f32.mrb[0].mxu0
        %v1725 = vadd.f32 0.0, %v1724
        %v1726 = vpop.f32.mrb[0].mxu0
        %v1727 = vpop.f32.mrb[0].mxu0
        %v1728 = vadd.f32 0.0, %v1727
        %v1729 = vpop.f32.mrb[0].mxu0
        %1730 = vmatprep.mubr.bf16.mxu0 0
        %1731 = vmatmul.mubr.bf16.gmra.mrb[0].mxu0 %v1297
        %v1732 = vpop.f32.mrb[0].mxu0
        %v1733 = vadd.f32 0.0, %v1732
        %v1734 = vpop.f32.mrb[0].mxu0
        %v1735 = vpop.f32.mrb[0].mxu0
        %v1736 = vadd.f32 0.0, %v1735
        %v1737 = vpop.f32.mrb[0].mxu0
        %1738 = vmatprep.mubr.bf16.mxu0 0
        %1739 = vmatmul.mubr.bf16.gmra.mrb[0].mxu0 %v1300
        %v1740 = vpop.f32.mrb[0].mxu0
        %v1741 = vadd.f32 0.0, %v1740
        %v1742 = vpop.f32.mrb[0].mxu0
        %v1743 = vpop.f32.mrb[0].mxu0
        %v1744 = vadd.f32 0.0, %v1743
        %v1745 = vpop.f32.mrb[0].mxu0
        %1746 = vmatprep.mubr.bf16.mxu0 0
        %1747 = vmatmul.mubr.bf16.gmra.mrb[0].mxu0 %v1303
        %v1748 = vpop.f32.mrb[0].mxu0
        %v1749 = vadd.f32 0.0, %v1748
        %v1750 = vpop.f32.mrb[0].mxu0
        %v1751 = vpop.f32.mrb[0].mxu0
        %v1752 = vadd.f32 0.0, %v1751
        %v1753 = vpop.f32.mrb[0].mxu0
        %1754 = vmatprep.mubr.bf16.mxu0 0
        %1755 = vmatmul.mubr.bf16.gmra.mrb[0].mxu0 %v1306
        %v1756 = vpop.f32.mrb[0].mxu0
        %v1757 = vadd.f32 0.0, %v1756
        %v1758 = vpop.f32.mrb[0].mxu0
        %v1759 = vpop.f32.mrb[0].mxu0
        %v1760 = vadd.f32 0.0, %v1759
        %v1761 = vpop.f32.mrb[0].mxu0
        %1762 = vmatprep.mubr.bf16.mxu0 0
        %1763 = vmatmul.mubr.bf16.gmra.mrb[0].mxu0 %v1309
        %v1764 = vpop.f32.mrb[0].mxu0
        %v1765 = vadd.f32 0.0, %v1764
        %v1766 = vpop.f32.mrb[0].mxu0
        %v1767 = vpop.f32.mrb[0].mxu0
        %v1768 = vadd.f32 0.0, %v1767
        %v1769 = vpop.f32.mrb[0].mxu0
        %1770 = vmatprep.mubr.bf16.mxu0 0
        %1771 = vmatmul.mubr.bf16.gmra.mrb[0].mxu0 %v1312
        %v1772 = vpop.f32.mrb[0].mxu0
        %v1773 = vadd.f32 0.0, %v1772
        %v1774 = vpop.f32.mrb[0].mxu0
        %v1775 = vpop.f32.mrb[0].mxu0
        %v1776 = vadd.f32 0.0, %v1775
        %v1777 = vpop.f32.mrb[0].mxu0
        %1778 = vmatprep.mubr.bf16.mxu0 0
        %1779 = vmatmul.mubr.bf16.gmra.mrb[0].mxu0 %v1315
        %v1780 = vpop.f32.mrb[0].mxu0
        %v1781 = vadd.f32 0.0, %v1780
        %v1782 = vpop.f32.mrb[0].mxu0
        %v1783 = vpop.f32.mrb[0].mxu0
        %v1784 = vadd.f32 0.0, %v1783
        %v1785 = vpop.f32.mrb[0].mxu0
        %1786 = vmatprep.mubr.bf16.mxu0 0
        %1787 = vmatmul.mubr.bf16.gmra.mrb[0].mxu0 %v1318
        %v1788 = vpop.f32.mrb[0].mxu0
        %v1789 = vadd.f32 0.0, %v1788
        %v1790 = vpop.f32.mrb[0].mxu0
        %v1791 = vpop.f32.mrb[0].mxu0
        %v1792 = vadd.f32 0.0, %v1791
        %v1793 = vpop.f32.mrb[0].mxu0
        %1794 = vmatprep.mubr.bf16.mxu0 0
        %1795 = vmatmul.mubr.bf16.gmra.mrb[0].mxu0 %v1321
        %v1796 = vpop.f32.mrb[0].mxu0
        %v1797 = vadd.f32 0.0, %v1796
        %v1798 = vpop.f32.mrb[0].mxu0
        %v1799 = vpop.f32.mrb[0].mxu0
        %v1800 = vadd.f32 0.0, %v1799
        %v1801 = vpop.f32.mrb[0].mxu0
        %1802 = vmatprep.mubr.bf16.mxu0 0
        %1803 = vmatmul.mubr.bf16.gmra.mrb[0].mxu0 %v1324
        %v1804 = vpop.f32.mrb[0].mxu0
        %v1805 = vadd.f32 0.0, %v1804
        %v1806 = vpop.f32.mrb[0].mxu0
        %v1807 = vpop.f32.mrb[0].mxu0
        %v1808 = vadd.f32 0.0, %v1807
        %v1809 = vpop.f32.mrb[0].mxu0
        %1810 = vmatprep.mubr.bf16.mxu0 0
        %1811 = vmatmul.mubr.bf16.gmra.mrb[0].mxu0 %v1327
        %v1812 = vpop.f32.mrb[0].mxu0
        %v1813 = vadd.f32 0.0, %v1812
        %v1814 = vpop.f32.mrb[0].mxu0
        %v1815 = vpop.f32.mrb[0].mxu0
        %v1816 = vadd.f32 0.0, %v1815
        %v1817 = vpop.f32.mrb[0].mxu0
        %1818 = vmatprep.mubr.bf16.mxu0 0
        %1819 = vmatmul.mubr.bf16.gmra.mrb[0].mxu0 %v1330
        %v1820 = vpop.f32.mrb[0].mxu0
        %v1821 = vadd.f32 0.0, %v1820
        %v1822 = vpop.f32.mrb[0].mxu0
        %v1823 = vpop.f32.mrb[0].mxu0
        %v1824 = vadd.f32 0.0, %v1823
        %v1825 = vpop.f32.mrb[0].mxu0
        %1826 = vmatprep.mubr.bf16.mxu0 0
        %1827 = vmatmul.mubr.bf16.gmra.mrb[0].mxu0 %v1333
        %v1828 = vpop.f32.mrb[0].mxu0
        %v1829 = vadd.f32 0.0, %v1828
        %v1830 = vpop.f32.mrb[0].mxu0
        %v1831 = vpop.f32.mrb[0].mxu0
        %v1832 = vadd.f32 0.0, %v1831
        %v1833 = vpop.f32.mrb[0].mxu0
        %1834 = vmatprep.mubr.bf16.mxu0 0
        %1835 = vmatmul.mubr.bf16.gmra.mrb[0].mxu0 %v1336
        %v1836 = vpop.f32.mrb[0].mxu0
        %v1837 = vadd.f32 0.0, %v1836
        %v1838 = vpop.f32.mrb[0].mxu0
        %v1839 = vpop.f32.mrb[0].mxu0
        %v1840 = vadd.f32 0.0, %v1839
        %v1841 = vpop.f32.mrb[0].mxu0
        %1842 = vmatprep.mubr.bf16.mxu0 0
        %1843 = vmatmul.mubr.bf16.gmra.mrb[0].mxu0 %v1339
        %v1844 = vpop.f32.mrb[0].mxu0
        %v1845 = vadd.f32 0.0, %v1844
        %v1846 = vpop.f32.mrb[0].mxu0
        %v1847 = vpop.f32.mrb[0].mxu0
        %v1848 = vadd.f32 0.0, %v1847
        %v1849 = vpop.f32.mrb[0].mxu0
        %1850 = vmatprep.mubr.bf16.mxu0 0
        %1851 = vmatmul.mubr.bf16.gmra.mrb[0].mxu0 %v1342
        %v1852 = vpop.f32.mrb[0].mxu0
        %v1853 = vadd.f32 0.0, %v1852
        %v1854 = vpop.f32.mrb[0].mxu0
        %v1855 = vpop.f32.mrb[0].mxu0
        %v1856 = vadd.f32 0.0, %v1855
        %v1857 = vpop.f32.mrb[0].mxu0
        %1858 = vmatprep.mubr.bf16.mxu0 0
        %1859 = vmatmul.mubr.bf16.gmra.mrb[0].mxu0 %v1345
        %v1860 = vpop.f32.mrb[0].mxu0
        %v1861 = vadd.f32 0.0, %v1860
        %v1862 = vpop.f32.mrb[0].mxu0
        %v1863 = vpop.f32.mrb[0].mxu0
        %v1864 = vadd.f32 0.0, %v1863
        %v1865 = vpop.f32.mrb[0].mxu0
        %1866 = vmatprep.mubr.bf16.mxu0 0
        %1867 = vmatmul.mubr.bf16.gmra.mrb[0].mxu0 %v1348
        %v1868 = vpop.f32.mrb[0].mxu0
        %v1869 = vadd.f32 0.0, %v1868
        %v1870 = vpop.f32.mrb[0].mxu0
        %v1871 = vpop.f32.mrb[0].mxu0
        %v1872 = vadd.f32 0.0, %v1871
        %v1873 = vpop.f32.mrb[0].mxu0
        %1874 = vmatprep.mubr.bf16.mxu0 0
        %1875 = vmatmul.mubr.bf16.gmra.mrb[0].mxu0 %v1351
        %v1876 = vpop.f32.mrb[0].mxu0
        %v1877 = vadd.f32 0.0, %v1876
        %v1878 = vpop.f32.mrb[0].mxu0
        %v1879 = vpop.f32.mrb[0].mxu0
        %v1880 = vadd.f32 0.0, %v1879
        %v1881 = vpop.f32.mrb[0].mxu0
        %1882 = vmatprep.mubr.bf16.mxu0 0
        %1883 = vmatmul.mubr.bf16.gmra.mrb[0].mxu0 %v1354
        %v1884 = vpop.f32.mrb[0].mxu0
        %v1885 = vadd.f32 0.0, %v1884
        %v1886 = vpop.f32.mrb[0].mxu0
        %v1887 = vpop.f32.mrb[0].mxu0
        %v1888 = vadd.f32 0.0, %v1887
        %v1889 = vpop.f32.mrb[0].mxu0
        %1890 = vmatprep.mubr.bf16.mxu0 0
        %1891 = vmatmul.mubr.bf16.gmra.mrb[0].mxu0 %v1357
        %v1892 = vpop.f32.mrb[0].mxu0
        %v1893 = vadd.f32 0.0, %v1892
        %v1894 = vpop.f32.mrb[0].mxu0
        %v1895 = vpop.f32.mrb[0].mxu0
        %v1896 = vadd.f32 0.0, %v1895
        %v1897 = vpop.f32.mrb[0].mxu0
        %1898 = vmatprep.mubr.bf16.mxu0 0
        %1899 = vmatmul.mubr.bf16.gmra.mrb[0].mxu0 %v1360
        %v1900 = vpop.f32.mrb[0].mxu0
        %v1901 = vadd.f32 0.0, %v1900
        %v1902 = vpop.f32.mrb[0].mxu0
        %v1903 = vpop.f32.mrb[0].mxu0
        %v1904 = vadd.f32 0.0, %v1903
        %v1905 = vpop.f32.mrb[0].mxu0
        %1906 = vmatprep.mubr.bf16.mxu0 0
        %1907 = vmatmul.mubr.bf16.gmra.mrb[0].mxu0 %v1363
        %v1908 = vpop.f32.mrb[0].mxu0
        %v1909 = vadd.f32 0.0, %v1908
        %v1910 = vpop.f32.mrb[0].mxu0
        %v1911 = vpop.f32.mrb[0].mxu0
        %v1912 = vadd.f32 0.0, %v1911
        %v1913 = vpop.f32.mrb[0].mxu0
        %1914 = vmatprep.mubr.bf16.mxu0 0
        %1915 = vmatmul.mubr.bf16.gmra.mrb[0].mxu0 %v1366
        %v1916 = vpop.f32.mrb[0].mxu0
        %v1917 = vadd.f32 0.0, %v1916
        %v1918 = vpop.f32.mrb[0].mxu0
        %v1919 = vpop.f32.mrb[0].mxu0
        %v1920 = vadd.f32 0.0, %v1919
        %v1921 = vpop.f32.mrb[0].mxu0
        %1922 = vmatprep.mubr.bf16.mxu0 0
        %1923 = vmatmul.mubr.bf16.gmra.mrb[0].mxu0 %v1369
        %v1924 = vpop.f32.mrb[0].mxu0
        %v1925 = vadd.f32 0.0, %v1924
        %v1926 = vpop.f32.mrb[0].mxu0
        %v1927 = vpop.f32.mrb[0].mxu0
        %v1928 = vadd.f32 0.0, %v1927
        %v1929 = vpop.f32.mrb[0].mxu0
        %1930 = vmatprep.mubr.bf16.mxu0 0
        %1931 = vmatmul.mubr.bf16.gmra.mrb[0].mxu0 %v1372
        %v1932 = vpop.f32.mrb[0].mxu0
        %v1933 = vadd.f32 0.0, %v1932
        %v1934 = vpop.f32.mrb[0].mxu0
        %v1935 = vpop.f32.mrb[0].mxu0
        %v1936 = vadd.f32 0.0, %v1935
        %v1937 = vpop.f32.mrb[0].mxu0
        %1938 = vmatprep.mubr.bf16.mxu0 0
        %1939 = vmatmul.mubr.bf16.gmra.mrb[0].mxu0 %v1375
        %v1940 = vpop.f32.mrb[0].mxu0
        %v1941 = vadd.f32 0.0, %v1940
        %v1942 = vpop.f32.mrb[0].mxu0
        %v1943 = vpop.f32.mrb[0].mxu0
        %v1944 = vadd.f32 0.0, %v1943
        %v1945 = vpop.f32.mrb[0].mxu0
        %1946 = vmatprep.mubr.bf16.mxu0 0
        %1947 = vmatmul.mubr.bf16.gmra.mrb[0].mxu0 %v1378
        %v1948 = vpop.f32.mrb[0].mxu0
        %v1949 = vadd.f32 0.0, %v1948
        %v1950 = vpop.f32.mrb[0].mxu0
        %v1951 = vpop.f32.mrb[0].mxu0
        %v1952 = vadd.f32 0.0, %v1951
        %v1953 = vpop.f32.mrb[0].mxu0
        %1954 = vmatprep.mubr.bf16.mxu0 0
        %1955 = vmatmul.mubr.bf16.gmra.mrb[0].mxu0 %v1381
        %v1956 = vpop.f32.mrb[0].mxu0
        %v1957 = vadd.f32 0.0, %v1956
        %v1958 = vpop.f32.mrb[0].mxu0
        %v1959 = vpop.f32.mrb[0].mxu0
        %v1960 = vadd.f32 0.0, %v1959
        %v1961 = vpop.f32.mrb[0].mxu0
        %1962 = vmatprep.mubr.bf16.mxu0 0
        %1963 = vmatmul.mubr.bf16.gmra.mrb[0].mxu0 %v1384
        %v1964 = vpop.f32.mrb[0].mxu0
        %v1965 = vadd.f32 0.0, %v1964
        %v1966 = vpop.f32.mrb[0].mxu0
        %v1967 = vpop.f32.mrb[0].mxu0
        %v1968 = vadd.f32 0.0, %v1967
        %v1969 = vpop.f32.mrb[0].mxu0
        %1970 = vmatprep.mubr.bf16.mxu0 0
        %1971 = vmatmul.mubr.bf16.gmra.mrb[0].mxu0 %v1387
        %v1972 = vpop.f32.mrb[0].mxu0
        %v1973 = vadd.f32 0.0, %v1972
        %v1974 = vpop.f32.mrb[0].mxu0
        %v1975 = vpop.f32.mrb[0].mxu0
        %v1976 = vadd.f32 0.0, %v1975
        %v1977 = vpop.f32.mrb[0].mxu0
        %1978 = vmatprep.mubr.bf16.mxu0 0
        %1979 = vmatmul.mubr.bf16.gmra.mrb[0].mxu0 %v1390
        %v1980 = vpop.f32.mrb[0].mxu0
        %v1981 = vadd.f32 0.0, %v1980
        %v1982 = vpop.f32.mrb[0].mxu0
        %v1983 = vpop.f32.mrb[0].mxu0
        %v1984 = vadd.f32 0.0, %v1983
        %v1985 = vpop.f32.mrb[0].mxu0
        %1986 = vmatprep.mubr.bf16.mxu0 0
        %1987 = vmatmul.mubr.bf16.gmra.mrb[0].mxu0 %v1393
        %v1988 = vpop.f32.mrb[0].mxu0
        %v1989 = vadd.f32 0.0, %v1988
        %v1990 = vpop.f32.mrb[0].mxu0
        %v1991 = vpop.f32.mrb[0].mxu0
        %v1992 = vadd.f32 0.0, %v1991
        %v1993 = vpop.f32.mrb[0].mxu0
        %1994 = vmatprep.mubr.bf16.mxu0 0
        %1995 = vmatmul.mubr.bf16.gmra.mrb[0].mxu0 %v1396
        %v1996 = vpop.f32.mrb[0].mxu0
        %v1997 = vadd.f32 0.0, %v1996
        %v1998 = vpop.f32.mrb[0].mxu0
        %v1999 = vpop.f32.mrb[0].mxu0
        %v2000 = vadd.f32 0.0, %v1999
        %v2001 = vpop.f32.mrb[0].mxu0
        %2002 = vmatprep.mubr.bf16.mxu0 0
        %2003 = vmatmul.mubr.bf16.gmra.mrb[0].mxu0 %v1399
        %v2004 = vpop.f32.mrb[0].mxu0
        %v2005 = vadd.f32 0.0, %v2004
        %v2006 = vpop.f32.mrb[0].mxu0
        %v2007 = vpop.f32.mrb[0].mxu0
        %v2008 = vadd.f32 0.0, %v2007
        %v2009 = vpop.f32.mrb[0].mxu0
        %2010 = vmatprep.mubr.bf16.mxu0 0
        %2011 = vmatmul.mubr.bf16.gmra.mrb[0].mxu0 %v1402
        %v2012 = vpop.f32.mrb[0].mxu0
        %v2013 = vadd.f32 0.0, %v2012
        %v2014 = vpop.f32.mrb[0].mxu0
        %v2015 = vpop.f32.mrb[0].mxu0
        %v2016 = vadd.f32 0.0, %v2015
        %v2017 = vpop.f32.mrb[0].mxu0
        %2018 = vmatprep.mubr.bf16.mxu0 0
        %2019 = vmatmul.mubr.bf16.gmra.mrb[0].mxu0 %v1405
        %v2020 = vpop.f32.mrb[0].mxu0
        %v2021 = vadd.f32 0.0, %v2020
        %v2022 = vpop.f32.mrb[0].mxu0
        %v2023 = vpop.f32.mrb[0].mxu0
        %v2024 = vadd.f32 0.0, %v2023
        %v2025 = vpop.f32.mrb[0].mxu0
        %2026 = vmatprep.mubr.bf16.mxu0 0
        %2027 = vmatmul.mubr.bf16.gmra.mrb[0].mxu0 %v1408
        %v2028 = vpop.f32.mrb[0].mxu0
        %v2029 = vadd.f32 0.0, %v2028
        %v2030 = vpop.f32.mrb[0].mxu0
        %v2031 = vpop.f32.mrb[0].mxu0
        %v2032 = vadd.f32 0.0, %v2031
        %v2033 = vpop.f32.mrb[0].mxu0
        %2034 = vmatprep.mubr.bf16.mxu0 0
        %2035 = vmatmul.mubr.bf16.gmra.mrb[0].mxu0 %v1411
        %v2036 = vpop.f32.mrb[0].mxu0
        %v2037 = vadd.f32 0.0, %v2036
        %v2038 = vpop.f32.mrb[0].mxu0
        %v2039 = vpop.f32.mrb[0].mxu0
        %v2040 = vadd.f32 0.0, %v2039
        %v2041 = vpop.f32.mrb[0].mxu0
        %2042 = vmatprep.mubr.bf16.mxu0 0
        %2043 = vmatmul.mubr.bf16.gmra.mrb[0].mxu0 %v1414
        %v2044 = vpop.f32.mrb[0].mxu0
        %v2045 = vadd.f32 0.0, %v2044
        %v2046 = vpop.f32.mrb[0].mxu0
        %v2047 = vpop.f32.mrb[0].mxu0
        %v2048 = vadd.f32 0.0, %v2047
        %v2049 = vpop.f32.mrb[0].mxu0
        %2050 = vmatprep.mubr.bf16.mxu0 0
        %2051 = vmatmul.mubr.bf16.gmra.mrb[0].mxu0 %v1417
        %v2052 = vpop.f32.mrb[0].mxu0
        %v2053 = vadd.f32 0.0, %v2052
        %v2054 = vpop.f32.mrb[0].mxu0
        %v2055 = vpop.f32.mrb[0].mxu0
        %v2056 = vadd.f32 0.0, %v2055
        %v2057 = vpop.f32.mrb[0].mxu0
        %2058 = vmatprep.mubr.bf16.mxu0 0
        %2059 = vmatmul.mubr.bf16.gmra.mrb[0].mxu0 %v1420
        %v2060 = vpop.f32.mrb[0].mxu0
        %v2061 = vadd.f32 0.0, %v2060
        %v2062 = vpop.f32.mrb[0].mxu0
        %v2063 = vpop.f32.mrb[0].mxu0
        %v2064 = vadd.f32 0.0, %v2063
        %v2065 = vpop.f32.mrb[0].mxu0
        %2066 = vmatprep.mubr.bf16.mxu0 0
        %2067 = vmatmul.mubr.bf16.gmra.mrb[0].mxu0 %v1423
        %v2068 = vpop.f32.mrb[0].mxu0
        %v2069 = vadd.f32 0.0, %v2068
        %v2070 = vpop.f32.mrb[0].mxu0
        %v2071 = vpop.f32.mrb[0].mxu0
        %v2072 = vadd.f32 0.0, %v2071
        %v2073 = vpop.f32.mrb[0].mxu0
        %2074 = vmatprep.mubr.bf16.mxu0 0
        %2075 = vmatmul.mubr.bf16.gmra.mrb[0].mxu0 %v1426
        %v2076 = vpop.f32.mrb[0].mxu0
        %v2077 = vadd.f32 0.0, %v2076
        %v2078 = vpop.f32.mrb[0].mxu0
        %v2079 = vpop.f32.mrb[0].mxu0
        %v2080 = vadd.f32 0.0, %v2079
        %v2081 = vpop.f32.mrb[0].mxu0
        %2082 = vmatprep.mubr.bf16.mxu0 0
        %2083 = vmatmul.mubr.bf16.gmra.mrb[0].mxu0 %v1429
        %v2084 = vpop.f32.mrb[0].mxu0
        %v2085 = vadd.f32 0.0, %v2084
        %v2086 = vpop.f32.mrb[0].mxu0
        %v2087 = vpop.f32.mrb[0].mxu0
        %v2088 = vadd.f32 0.0, %v2087
        %v2089 = vpop.f32.mrb[0].mxu0
        %2090 = vmatprep.mubr.bf16.mxu0 0
        %2091 = vmatmul.mubr.bf16.gmra.mrb[0].mxu0 %v1432
        %v2092 = vpop.f32.mrb[0].mxu0
        %v2093 = vadd.f32 0.0, %v2092
        %v2094 = vpop.f32.mrb[0].mxu0
        %v2095 = vpop.f32.mrb[0].mxu0
        %v2096 = vadd.f32 0.0, %v2095
        %v2097 = vpop.f32.mrb[0].mxu0
        %2098 = vmatprep.mubr.bf16.mxu0 0
        %2099 = vmatmul.mubr.bf16.gmra.mrb[0].mxu0 %v1435
        %v2100 = vpop.f32.mrb[0].mxu0
        %v2101 = vadd.f32 0.0, %v2100
        %v2102 = vpop.f32.mrb[0].mxu0
        %v2103 = vpop.f32.mrb[0].mxu0
        %v2104 = vadd.f32 0.0, %v2103
        %v2105 = vpop.f32.mrb[0].mxu0
        %2106 = vmatprep.mubr.bf16.mxu0 0
        %2107 = vmatmul.mubr.bf16.gmra.mrb[0].mxu0 %v1438
        %v2108 = vpop.f32.mrb[0].mxu0
        %v2109 = vadd.f32 0.0, %v2108
        %v2110 = vpop.f32.mrb[0].mxu0
        %v2111 = vpop.f32.mrb[0].mxu0
        %v2112 = vadd.f32 0.0, %v2111
        %v2113 = vpop.f32.mrb[0].mxu0
        %2114 = vmatprep.mubr.bf16.mxu0 0
        %2115 = vmatmul.mubr.bf16.gmra.mrb[0].mxu0 %v1441
        %v2116 = vpop.f32.mrb[0].mxu0
        %v2117 = vadd.f32 0.0, %v2116
        %v2118 = vpop.f32.mrb[0].mxu0
        %v2119 = vpop.f32.mrb[0].mxu0
        %v2120 = vadd.f32 0.0, %v2119
        %v2121 = vpop.f32.mrb[0].mxu0
        %2122 = vmatprep.mubr.bf16.mxu0 0
        %2123 = vmatmul.mubr.bf16.gmra.mrb[0].mxu0 %v1444
        %v2124 = vpop.f32.mrb[0].mxu0
        %v2125 = vadd.f32 0.0, %v2124
        %v2126 = vpop.f32.mrb[0].mxu0
        %v2127 = vpop.f32.mrb[0].mxu0
        %v2128 = vadd.f32 0.0, %v2127
        %v2129 = vpop.f32.mrb[0].mxu0
        %2130 = vmatprep.mubr.bf16.mxu0 0
        %2131 = vmatmul.mubr.bf16.gmra.mrb[0].mxu0 %v1447
        %v2132 = vpop.f32.mrb[0].mxu0
        %v2133 = vadd.f32 0.0, %v2132
        %v2134 = vpop.f32.mrb[0].mxu0
        %v2135 = vpop.f32.mrb[0].mxu0
        %v2136 = vadd.f32 0.0, %v2135
        %v2137 = vpop.f32.mrb[0].mxu0
        %2138 = vmatprep.mubr.bf16.mxu0 0
        %2139 = vmatmul.mubr.bf16.gmra.mrb[0].mxu0 %v1450
        %v2140 = vpop.f32.mrb[0].mxu0
        %v2141 = vadd.f32 0.0, %v2140
        %v2142 = vpop.f32.mrb[0].mxu0
        %v2143 = vpop.f32.mrb[0].mxu0
        %v2144 = vadd.f32 0.0, %v2143
        %v2145 = vpop.f32.mrb[0].mxu0
        %2146 = vmatprep.mubr.bf16.mxu0 0
        %2147 = vmatmul.mubr.bf16.gmra.mrb[0].mxu0 %v1453
        %v2148 = vpop.f32.mrb[0].mxu0
        %v2149 = vadd.f32 0.0, %v2148
        %v2150 = vpop.f32.mrb[0].mxu0
        %v2151 = vpop.f32.mrb[0].mxu0
        %v2152 = vadd.f32 0.0, %v2151
        %v2153 = vpop.f32.mrb[0].mxu0
        %2154 = vmatprep.mubr.bf16.mxu0 0
        %2155 = vmatmul.mubr.bf16.gmra.mrb[0].mxu0 %v1456
        %v2156 = vpop.f32.mrb[0].mxu0
        %v2157 = vadd.f32 0.0, %v2156
        %v2158 = vpop.f32.mrb[0].mxu0
        %v2159 = vpop.f32.mrb[0].mxu0
        %v2160 = vadd.f32 0.0, %v2159
        %v2161 = vpop.f32.mrb[0].mxu0
        %2162 = vmatprep.mubr.bf16.mxu0 0
        %2163 = vmatmul.mubr.bf16.gmra.mrb[0].mxu0 %v1459
        %v2164 = vpop.f32.mrb[0].mxu0
        %v2165 = vadd.f32 0.0, %v2164
        %v2166 = vpop.f32.mrb[0].mxu0
        %v2167 = vpop.f32.mrb[0].mxu0
        %v2168 = vadd.f32 0.0, %v2167
        %v2169 = vpop.f32.mrb[0].mxu0
        %2170 = vmatprep.mubr.bf16.mxu0 0
        %2171 = vmatmul.mubr.bf16.gmra.mrb[0].mxu0 %v1462
        %v2172 = vpop.f32.mrb[0].mxu0
        %v2173 = vadd.f32 0.0, %v2172
        %v2174 = vpop.f32.mrb[0].mxu0
        %v2175 = vpop.f32.mrb[0].mxu0
        %v2176 = vadd.f32 0.0, %v2175
        %v2177 = vpop.f32.mrb[0].mxu0
        %2178 = vmatprep.mubr.bf16.mxu0 0
        %2179 = vmatmul.mubr.bf16.gmra.mrb[0].mxu0 %v1465
        %v2180 = vpop.f32.mrb[0].mxu0
        %v2181 = vadd.f32 0.0, %v2180
        %v2182 = vpop.f32.mrb[0].mxu0
        %v2183 = vpop.f32.mrb[0].mxu0
        %v2184 = vadd.f32 0.0, %v2183
        %v2185 = vpop.f32.mrb[0].mxu0
        %2186 = vmatprep.mubr.bf16.mxu0 0
        %2187 = vmatmul.mubr.bf16.gmra.mrb[0].mxu0 %v1468
        %v2188 = vpop.f32.mrb[0].mxu0
        %v2189 = vadd.f32 0.0, %v2188
        %v2190 = vpop.f32.mrb[0].mxu0
        %v2191 = vpop.f32.mrb[0].mxu0
        %v2192 = vadd.f32 0.0, %v2191
        %v2193 = vpop.f32.mrb[0].mxu0
        %2194 = vmatprep.mubr.bf16.mxu0 0
        %2195 = vmatmul.mubr.bf16.gmra.mrb[0].mxu0 %v1471
        %v2196 = vpop.f32.mrb[0].mxu0
        %v2197 = vadd.f32 0.0, %v2196
        %v2198 = vpop.f32.mrb[0].mxu0
        %v2199 = vpop.f32.mrb[0].mxu0
        %v2200 = vadd.f32 0.0, %v2199
        %v2201 = vpop.f32.mrb[0].mxu0
        %2202 = vmatprep.mubr.bf16.mxu0 0
        %2203 = vmatmul.mubr.bf16.gmra.mrb[0].mxu0 %v1474
        %v2204 = vpop.f32.mrb[0].mxu0
        %v2205 = vadd.f32 0.0, %v2204
        %v2206 = vpop.f32.mrb[0].mxu0
        %v2207 = vpop.f32.mrb[0].mxu0
        %v2208 = vadd.f32 0.0, %v2207
        %v2209 = vpop.f32.mrb[0].mxu0
        %2210 = vmatprep.mubr.bf16.mxu0 0
        %2211 = vmatmul.mubr.bf16.gmra.mrb[0].mxu0 %v1477
        %v2212 = vpop.f32.mrb[0].mxu0
        %v2213 = vadd.f32 0.0, %v2212
        %v2214 = vpop.f32.mrb[0].mxu0
        %v2215 = vpop.f32.mrb[0].mxu0
        %v2216 = vadd.f32 0.0, %v2215
        %v2217 = vpop.f32.mrb[0].mxu0
        %2218 = vmatprep.mubr.bf16.mxu0 0
        %2219 = vmatmul.mubr.bf16.gmra.mrb[0].mxu0 %v1480
        %v2220 = vpop.f32.mrb[0].mxu0
        %v2221 = vadd.f32 0.0, %v2220
        %v2222 = vpop.f32.mrb[0].mxu0
        %v2223 = vpop.f32.mrb[0].mxu0
        %v2224 = vadd.f32 0.0, %v2223
        %v2225 = vpop.f32.mrb[0].mxu0
        %2226 = vmatprep.mubr.bf16.mxu0 0
        %2227 = vmatmul.mubr.bf16.gmra.mrb[0].mxu0 %v1483
        %v2228 = vpop.f32.mrb[0].mxu0
        %v2229 = vadd.f32 0.0, %v2228
        %v2230 = vpop.f32.mrb[0].mxu0
        %v2231 = vpop.f32.mrb[0].mxu0
        %v2232 = vadd.f32 0.0, %v2231
        %v2233 = vpop.f32.mrb[0].mxu0
        %2234 = vmatprep.mubr.bf16.mxu0 0
        %2235 = vmatmul.mubr.bf16.gmra.mrb[0].mxu0 %v1486
        %v2236 = vpop.f32.mrb[0].mxu0
        %v2237 = vadd.f32 0.0, %v2236
        %v2238 = vpop.f32.mrb[0].mxu0
        %v2239 = vpop.f32.mrb[0].mxu0
        %v2240 = vadd.f32 0.0, %v2239
        %v2241 = vpop.f32.mrb[0].mxu0
        %2242 = vmatprep.mubr.bf16.mxu0 0
        %2243 = vmatmul.mubr.bf16.gmra.mrb[0].mxu0 %v1489
        %v2244 = vpop.f32.mrb[0].mxu0
        %v2245 = vadd.f32 0.0, %v2244
        %v2246 = vpop.f32.mrb[0].mxu0
        %v2247 = vpop.f32.mrb[0].mxu0
        %v2248 = vadd.f32 0.0, %v2247
        %v2249 = vpop.f32.mrb[0].mxu0
        %2250 = vmatprep.mubr.bf16.mxu0 0
        %2251 = vmatmul.mubr.bf16.gmra.mrb[0].mxu0 %v1492
        %v2252 = vpop.f32.mrb[0].mxu0
        %v2253 = vadd.f32 0.0, %v2252
        %v2254 = vpop.f32.mrb[0].mxu0
        %v2255 = vpop.f32.mrb[0].mxu0
        %v2256 = vadd.f32 0.0, %v2255
        %v2257 = vpop.f32.mrb[0].mxu0
        %2258 = vmatprep.mubr.bf16.mxu0 0
        %2259 = vmatmul.mubr.bf16.gmra.mrb[0].mxu0 %v1495
        %v2260 = vpop.f32.mrb[0].mxu0
        %v2261 = vadd.f32 0.0, %v2260
        %v2262 = vpop.f32.mrb[0].mxu0
        %v2263 = vpop.f32.mrb[0].mxu0
        %v2264 = vadd.f32 0.0, %v2263
        %v2265 = vpop.f32.mrb[0].mxu0
        %2266 = vmatprep.mubr.bf16.mxu0 0
        %2267 = vmatmul.mubr.bf16.gmra.mrb[0].mxu0 %v1498
        %v2268 = vpop.f32.mrb[0].mxu0
        %v2269 = vadd.f32 0.0, %v2268
        %v2270 = vpop.f32.mrb[0].mxu0
        %v2271 = vpop.f32.mrb[0].mxu0
        %v2272 = vadd.f32 0.0, %v2271
        %v2273 = vpop.f32.mrb[0].mxu0
        %2274 = vmatprep.mubr.bf16.mxu0 0
        %2275 = vmatmul.mubr.bf16.gmra.mrb[0].mxu0 %v1501
        %v2276 = vpop.f32.mrb[0].mxu0
        %v2277 = vadd.f32 0.0, %v2276
        %v2278 = vpop.f32.mrb[0].mxu0
        %v2279 = vpop.f32.mrb[0].mxu0
        %v2280 = vadd.f32 0.0, %v2279
        %v2281 = vpop.f32.mrb[0].mxu0
        %2282 = vmatprep.mubr.bf16.mxu0 0
        %2283 = vmatmul.mubr.bf16.gmra.mrb[0].mxu0 %v1504
        %v2284 = vpop.f32.mrb[0].mxu0
        %v2285 = vadd.f32 0.0, %v2284
        %v2286 = vpop.f32.mrb[0].mxu0
        %v2287 = vpop.f32.mrb[0].mxu0
        %v2288 = vadd.f32 0.0, %v2287
        %v2289 = vpop.f32.mrb[0].mxu0
        %2290 = vmatprep.mubr.bf16.mxu0 0
        %2291 = vmatmul.mubr.bf16.gmra.mrb[0].mxu0 %v1507
        %v2292 = vpop.f32.mrb[0].mxu0
        %v2293 = vadd.f32 0.0, %v2292
        %v2294 = vpop.f32.mrb[0].mxu0
        %v2295 = vpop.f32.mrb[0].mxu0
        %v2296 = vadd.f32 0.0, %v2295
        %v2297 = vpop.f32.mrb[0].mxu0
        %2298 = vmatprep.mubr.bf16.mxu0 0
        %2299 = vmatmul.mubr.bf16.gmra.mrb[0].mxu0 %v1510
        %v2300 = vpop.f32.mrb[0].mxu0
        %v2301 = vadd.f32 0.0, %v2300
        %v2302 = vpop.f32.mrb[0].mxu0
        %v2303 = vpop.f32.mrb[0].mxu0
        %v2304 = vadd.f32 0.0, %v2303
        %v2305 = vpop.f32.mrb[0].mxu0
        %2306 = vmatprep.mubr.bf16.mxu0 0
        %2307 = vmatmul.mubr.bf16.gmra.mrb[0].mxu0 %v1513
        %v2308 = vpop.f32.mrb[0].mxu0
        %v2309 = vadd.f32 0.0, %v2308
        %v2310 = vpop.f32.mrb[0].mxu0
        %v2311 = vpop.f32.mrb[0].mxu0
        %v2312 = vadd.f32 0.0, %v2311
        %v2313 = vpop.f32.mrb[0].mxu0
        %2314 = vmatprep.mubr.bf16.mxu0 0
        %2315 = vmatmul.mubr.bf16.gmra.mrb[0].mxu0 %v1516
        %v2316 = vpop.f32.mrb[0].mxu0
        %v2317 = vadd.f32 0.0, %v2316
        %v2318 = vpop.f32.mrb[0].mxu0
        %v2319 = vpop.f32.mrb[0].mxu0
        %v2320 = vadd.f32 0.0, %v2319
        %v2321 = vpop.f32.mrb[0].mxu0
        %2322 = vmatprep.mubr.bf16.mxu0 0
        %2323 = vmatmul.mubr.bf16.gmra.mrb[0].mxu0 %v1519
        %v2324 = vpop.f32.mrb[0].mxu0
        %v2325 = vadd.f32 0.0, %v2324
        %v2326 = vpop.f32.mrb[0].mxu0
        %v2327 = vpop.f32.mrb[0].mxu0
        %v2328 = vadd.f32 0.0, %v2327
        %v2329 = vpop.f32.mrb[0].mxu0
        %2330 = vmatprep.mubr.bf16.mxu0 0
        %2331 = vmatmul.mubr.bf16.gmra.mrb[0].mxu0 %v1522
        %v2332 = vpop.f32.mrb[0].mxu0
        %v2333 = vadd.f32 0.0, %v2332
        %v2334 = vpop.f32.mrb[0].mxu0
        %v2335 = vpop.f32.mrb[0].mxu0
        %v2336 = vadd.f32 0.0, %v2335
        %v2337 = vpop.f32.mrb[0].mxu0
        %2338 = vmatprep.mubr.bf16.mxu0 0
        %2339 = vmatmul.mubr.bf16.gmra.mrb[0].mxu0 %v1525
        %v2340 = vpop.f32.mrb[0].mxu0
        %v2341 = vadd.f32 0.0, %v2340
        %v2342 = vpop.f32.mrb[0].mxu0
        %v2343 = vpop.f32.mrb[0].mxu0
        %v2344 = vadd.f32 0.0, %v2343
        %v2345 = vpop.f32.mrb[0].mxu0
        %2346 = vmatprep.mubr.bf16.mxu0 0
        %2347 = vmatmul.mubr.bf16.gmra.mrb[0].mxu0 %v1528
        %v2348 = vpop.f32.mrb[0].mxu0
        %v2349 = vadd.f32 0.0, %v2348
        %v2350 = vpop.f32.mrb[0].mxu0
        %v2351 = vpop.f32.mrb[0].mxu0
        %v2352 = vadd.f32 0.0, %v2351
        %v2353 = vpop.f32.mrb[0].mxu0
        %2354 = vmatprep.mubr.bf16.mxu0 0
        %2355 = vmatmul.mubr.bf16.gmra.mrb[0].mxu0 %v1531
        %v2356 = vpop.f32.mrb[0].mxu0
        %v2357 = vadd.f32 0.0, %v2356
        %v2358 = vpop.f32.mrb[0].mxu0
        %v2359 = vpop.f32.mrb[0].mxu0
        %v2360 = vadd.f32 0.0, %v2359
        %v2361 = vpop.f32.mrb[0].mxu0
        %2362 = vmatprep.mubr.bf16.mxu0 0
        %2363 = vmatmul.mubr.bf16.gmra.mrb[0].mxu0 %v1534
        %v2364 = vpop.f32.mrb[0].mxu0
        %v2365 = vadd.f32 0.0, %v2364
        %v2366 = vpop.f32.mrb[0].mxu0
        %v2367 = vpop.f32.mrb[0].mxu0
        %v2368 = vadd.f32 0.0, %v2367
        %v2369 = vpop.f32.mrb[0].mxu0
        %2370 = vmatprep.mubr.bf16.mxu0 0
        %2371 = vmatmul.mubr.bf16.gmra.mrb[0].mxu0 %v1537
        %v2372 = vpop.f32.mrb[0].mxu0
        %v2373 = vadd.f32 0.0, %v2372
        %v2374 = vpop.f32.mrb[0].mxu0
        %v2375 = vpop.f32.mrb[0].mxu0
        %v2376 = vadd.f32 0.0, %v2375
        %v2377 = vpop.f32.mrb[0].mxu0
        %2378 = vmatprep.mubr.bf16.mxu0 0
        %2379 = vmatmul.mubr.bf16.gmra.mrb[0].mxu0 %v1540
        %v2380 = vpop.f32.mrb[0].mxu0
        %v2381 = vadd.f32 0.0, %v2380
        %v2382 = vpop.f32.mrb[0].mxu0
        %v2383 = vpop.f32.mrb[0].mxu0
        %v2384 = vadd.f32 0.0, %v2383
        %v2385 = vpop.f32.mrb[0].mxu0
        %2386 = vmatprep.mubr.bf16.mxu0 0
        %2387 = vmatmul.mubr.bf16.gmra.mrb[0].mxu0 %v1543
        %v2388 = vpop.f32.mrb[0].mxu0
        %v2389 = vadd.f32 0.0, %v2388
        %v2390 = vpop.f32.mrb[0].mxu0
        %v2391 = vpop.f32.mrb[0].mxu0
        %v2392 = vadd.f32 0.0, %v2391
        %v2393 = vpop.f32.mrb[0].mxu0
        %2394 = vmatprep.mubr.bf16.mxu0 0
        %2395 = vmatmul.mubr.bf16.gmra.mrb[0].mxu0 %v1546
        %v2396 = vpop.f32.mrb[0].mxu0
        %v2397 = vadd.f32 0.0, %v2396
        %v2398 = vpop.f32.mrb[0].mxu0
        %v2399 = vpop.f32.mrb[0].mxu0
        %v2400 = vadd.f32 0.0, %v2399
        %v2401 = vpop.f32.mrb[0].mxu0
        %2402 = vmatprep.mubr.bf16.mxu0 0
        %2403 = vmatmul.mubr.bf16.gmra.mrb[0].mxu0 %v1549
        %v2404 = vpop.f32.mrb[0].mxu0
        %v2405 = vadd.f32 0.0, %v2404
        %v2406 = vpop.f32.mrb[0].mxu0
        %v2407 = vpop.f32.mrb[0].mxu0
        %v2408 = vadd.f32 0.0, %v2407
        %v2409 = vpop.f32.mrb[0].mxu0
        %2410 = vmatprep.mubr.bf16.mxu0 0
        %2411 = vmatmul.mubr.bf16.gmra.mrb[0].mxu0 %v1552
        %v2412 = vpop.f32.mrb[0].mxu0
        %v2413 = vadd.f32 0.0, %v2412
        %v2414 = vpop.f32.mrb[0].mxu0
        %v2415 = vpop.f32.mrb[0].mxu0
        %v2416 = vadd.f32 0.0, %v2415
        %v2417 = vpop.f32.mrb[0].mxu0
        %2418 = vmatprep.mubr.bf16.mxu0 0
        %2419 = vmatmul.mubr.bf16.gmra.mrb[0].mxu0 %v1555
        %v2420 = vpop.f32.mrb[0].mxu0
        %v2421 = vadd.f32 0.0, %v2420
        %v2422 = vpop.f32.mrb[0].mxu0
        %v2423 = vpop.f32.mrb[0].mxu0
        %v2424 = vadd.f32 0.0, %v2423
        %v2425 = vpop.f32.mrb[0].mxu0
        %2426 = vmatprep.mubr.bf16.mxu0 0
        %2427 = vmatmul.mubr.bf16.gmra.mrb[0].mxu0 %v1558
        %v2428 = vpop.f32.mrb[0].mxu0
        %v2429 = vadd.f32 0.0, %v2428
        %v2430 = vpop.f32.mrb[0].mxu0
        %v2431 = vpop.f32.mrb[0].mxu0
        %v2432 = vadd.f32 0.0, %v2431
        %v2433 = vpop.f32.mrb[0].mxu0
        %2434 = vmatprep.mubr.bf16.mxu0 0
        %2435 = vmatmul.mubr.bf16.gmra.mrb[0].mxu0 %v1561
        %v2436 = vpop.f32.mrb[0].mxu0
        %v2437 = vadd.f32 0.0, %v2436
        %v2438 = vpop.f32.mrb[0].mxu0
        %v2439 = vpop.f32.mrb[0].mxu0
        %v2440 = vadd.f32 0.0, %v2439
        %v2441 = vpop.f32.mrb[0].mxu0
        %2442 = vmatprep.mubr.bf16.mxu0 0
        %2443 = vmatmul.mubr.bf16.gmra.mrb[0].mxu0 %v1564
        %v2444 = vpop.f32.mrb[0].mxu0
        %v2445 = vadd.f32 0.0, %v2444
        %v2446 = vpop.f32.mrb[0].mxu0
        %v2447 = vpop.f32.mrb[0].mxu0
        %v2448 = vadd.f32 0.0, %v2447
        %v2449 = vpop.f32.mrb[0].mxu0
        %2450 = vmatprep.mubr.bf16.mxu0 0
        %2451 = vmatmul.mubr.bf16.gmra.mrb[0].mxu0 %v1567
        %v2452 = vpop.f32.mrb[0].mxu0
        %v2453 = vadd.f32 0.0, %v2452
        %v2454 = vpop.f32.mrb[0].mxu0
        %v2455 = vpop.f32.mrb[0].mxu0
        %v2456 = vadd.f32 0.0, %v2455
        %v2457 = vpop.f32.mrb[0].mxu0
        %2458 = vmatprep.mubr.bf16.mxu0 0
        %2459 = vmatmul.mubr.bf16.gmra.mrb[0].mxu0 %v1570
        %v2460 = vpop.f32.mrb[0].mxu0
        %v2461 = vadd.f32 0.0, %v2460
        %v2462 = vpop.f32.mrb[0].mxu0
        %v2463 = vpop.f32.mrb[0].mxu0
        %v2464 = vadd.f32 0.0, %v2463
        %v2465 = vpop.f32.mrb[0].mxu0
        %2466 = vmatprep.mubr.bf16.mxu0 0
        %2467 = vmatmul.mubr.bf16.gmra.mrb[0].mxu0 %v1573
        %v2468 = vpop.f32.mrb[0].mxu0
        %v2469 = vadd.f32 0.0, %v2468
        %v2470 = vpop.f32.mrb[0].mxu0
        %v2471 = vpop.f32.mrb[0].mxu0
        %v2472 = vadd.f32 0.0, %v2471
        %v2473 = vpop.f32.mrb[0].mxu0
        %2474 = vmatprep.mubr.bf16.mxu0 0
        %2475 = vmatmul.mubr.bf16.gmra.mrb[0].mxu0 %v1576
        %v2476 = vpop.f32.mrb[0].mxu0
        %v2477 = vadd.f32 0.0, %v2476
        %v2478 = vpop.f32.mrb[0].mxu0
        %v2479 = vpop.f32.mrb[0].mxu0
        %v2480 = vadd.f32 0.0, %v2479
        %v2481 = vpop.f32.mrb[0].mxu0
        %2482 = vmatprep.mubr.bf16.mxu0 0
        %2483 = vmatmul.mubr.bf16.gmra.mrb[0].mxu0 %v1579
        %v2484 = vpop.f32.mrb[0].mxu0
        %v2485 = vadd.f32 0.0, %v2484
        %v2486 = vpop.f32.mrb[0].mxu0
        %v2487 = vpop.f32.mrb[0].mxu0
        %v2488 = vadd.f32 0.0, %v2487
        %v2489 = vpop.f32.mrb[0].mxu0
        %2490 = vmatprep.mubr.bf16.mxu0 0
        %2491 = vmatmul.mubr.bf16.gmra.mrb[0].mxu0 %v1582
        %v2492 = vpop.f32.mrb[0].mxu0
        %v2493 = vadd.f32 0.0, %v2492
        %v2494 = vpop.f32.mrb[0].mxu0
        %v2495 = vpop.f32.mrb[0].mxu0
        %v2496 = vadd.f32 0.0, %v2495
        %v2497 = vpop.f32.mrb[0].mxu0
        %2498 = vmatprep.mubr.bf16.mxu0 0
        %2499 = vmatmul.mubr.bf16.gmra.mrb[0].mxu0 %v1585
        %v2500 = vpop.f32.mrb[0].mxu0
        %v2501 = vadd.f32 0.0, %v2500
        %v2502 = vpop.f32.mrb[0].mxu0
        %v2503 = vpop.f32.mrb[0].mxu0
        %v2504 = vadd.f32 0.0, %v2503
        %v2505 = vpop.f32.mrb[0].mxu0
        %2506 = vmatprep.mubr.bf16.mxu0 0
        %2507 = vmatmul.mubr.bf16.gmra.mrb[0].mxu0 %v1588
        %v2508 = vpop.f32.mrb[0].mxu0
        %v2509 = vadd.f32 0.0, %v2508
        %v2510 = vpop.f32.mrb[0].mxu0
        %v2511 = vpop.f32.mrb[0].mxu0
        %v2512 = vadd.f32 0.0, %v2511
        %v2513 = vpop.f32.mrb[0].mxu0
        %2514 = vmatprep.mubr.bf16.mxu0 0
        %2515 = vmatmul.mubr.bf16.gmra.mrb[0].mxu0 %v1591
        %v2516 = vpop.f32.mrb[0].mxu0
        %v2517 = vadd.f32 0.0, %v2516
        %v2518 = vpop.f32.mrb[0].mxu0
        %v2519 = vpop.f32.mrb[0].mxu0
        %v2520 = vadd.f32 0.0, %v2519
        %v2521 = vpop.f32.mrb[0].mxu0
        %2522 = vmatprep.mubr.bf16.mxu0 0
        %2523 = vmatmul.mubr.bf16.gmra.mrb[0].mxu0 %v1594
        %v2524 = vpop.f32.mrb[0].mxu0
        %v2525 = vadd.f32 0.0, %v2524
        %v2526 = vpop.f32.mrb[0].mxu0
        %v2527 = vpop.f32.mrb[0].mxu0
        %v2528 = vadd.f32 0.0, %v2527
        %v2529 = vpop.f32.mrb[0].mxu0
        %2530 = vmatprep.mubr.bf16.mxu0 0
        %2531 = vmatmul.mubr.bf16.gmra.mrb[0].mxu0 %v1597
        %v2532 = vpop.f32.mrb[0].mxu0
        %v2533 = vadd.f32 0.0, %v2532
        %v2534 = vpop.f32.mrb[0].mxu0
        %v2535 = vpop.f32.mrb[0].mxu0
        %v2536 = vadd.f32 0.0, %v2535
        %v2537 = vpop.f32.mrb[0].mxu0
        %2538 = vmatprep.mubr.bf16.mxu0 0
        %2539 = vmatmul.mubr.bf16.gmra.mrb[0].mxu0 %v1600
        %v2540 = vpop.f32.mrb[0].mxu0
        %v2541 = vadd.f32 0.0, %v2540
        %v2542 = vpop.f32.mrb[0].mxu0
        %v2543 = vpop.f32.mrb[0].mxu0
        %v2544 = vadd.f32 0.0, %v2543
        %v2545 = vpop.f32.mrb[0].mxu0
        %2546 = vmatprep.mubr.bf16.mxu0 0
        %2547 = vmatmul.mubr.bf16.gmra.mrb[0].mxu0 %v1603
        %v2548 = vpop.f32.mrb[0].mxu0
        %v2549 = vadd.f32 0.0, %v2548
        %v2550 = vpop.f32.mrb[0].mxu0
        %v2551 = vpop.f32.mrb[0].mxu0
        %v2552 = vadd.f32 0.0, %v2551
        %v2553 = vpop.f32.mrb[0].mxu0
        %2554 = vmatprep.mubr.bf16.mxu0 0
        %2555 = vmatmul.mubr.bf16.gmra.mrb[0].mxu0 %v1606
        %v2556 = vpop.f32.mrb[0].mxu0
        %v2557 = vadd.f32 0.0, %v2556
        %v2558 = vpop.f32.mrb[0].mxu0
        %v2559 = vpop.f32.mrb[0].mxu0
        %v2560 = vadd.f32 0.0, %v2559
        %v2561 = vpop.f32.mrb[0].mxu0
        %2562 = vmatprep.mubr.bf16.mxu0 0
        %2563 = vmatmul.mubr.bf16.gmra.mrb[0].mxu0 %v1609
        %v2564 = vpop.f32.mrb[0].mxu0
        %v2565 = vadd.f32 0.0, %v2564
        %v2566 = vpop.f32.mrb[0].mxu0
        %v2567 = vpop.f32.mrb[0].mxu0
        %v2568 = vadd.f32 0.0, %v2567
        %v2569 = vpop.f32.mrb[0].mxu0
        %2570 = vmatprep.mubr.bf16.mxu0 0
        %2571 = vmatmul.mubr.bf16.gmra.mrb[0].mxu0 %v1612
        %v2572 = vpop.f32.mrb[0].mxu0
        %v2573 = vadd.f32 0.0, %v2572
        %v2574 = vpop.f32.mrb[0].mxu0
        %v2575 = vpop.f32.mrb[0].mxu0
        %v2576 = vadd.f32 0.0, %v2575
        %v2577 = vpop.f32.mrb[0].mxu0
        %2578 = vmatprep.mubr.bf16.mxu0 0
        %2579 = vmatmul.mubr.bf16.gmra.mrb[0].mxu0 %v1615
        %v2580 = vpop.f32.mrb[0].mxu0
        %v2581 = vadd.f32 0.0, %v2580
        %v2582 = vpop.f32.mrb[0].mxu0
        %v2583 = vpop.f32.mrb[0].mxu0
        %v2584 = vadd.f32 0.0, %v2583
        %v2585 = vpop.f32.mrb[0].mxu0
        %2586 = vmatprep.mubr.bf16.mxu0 0
        %2587 = vmatmul.mubr.bf16.gmra.mrb[0].mxu0 %v1618
        %v2588 = vpop.f32.mrb[0].mxu0
        %v2589 = vadd.f32 0.0, %v2588
        %v2590 = vpop.f32.mrb[0].mxu0
        %v2591 = vpop.f32.mrb[0].mxu0
        %v2592 = vadd.f32 0.0, %v2591
        %v2593 = vpop.f32.mrb[0].mxu0
        %2594 = vmatprep.mubr.bf16.mxu0 0
        %2595 = vmatmul.mubr.bf16.gmra.mrb[0].mxu0 %v1621
        %v2596 = vpop.f32.mrb[0].mxu0
        %v2597 = vadd.f32 0.0, %v2596
        %v2598 = vpop.f32.mrb[0].mxu0
        %v2599 = vpop.f32.mrb[0].mxu0
        %v2600 = vadd.f32 0.0, %v2599
        %v2601 = vpop.f32.mrb[0].mxu0
        %2602 = vmatprep.mubr.bf16.mxu0 0
        %2603 = vmatmul.mubr.bf16.gmra.mrb[0].mxu0 %v1624
        %v2604 = vpop.f32.mrb[0].mxu0
        %v2605 = vadd.f32 0.0, %v2604
        %v2606 = vpop.f32.mrb[0].mxu0
        %v2607 = vpop.f32.mrb[0].mxu0
        %v2608 = vadd.f32 0.0, %v2607
        %v2609 = vpop.f32.mrb[0].mxu0
        %2610 = vmatprep.mubr.bf16.mxu0 0
        %2611 = vmatmul.mubr.bf16.gmra.mrb[0].mxu0 %v1627
        %v2612 = vpop.f32.mrb[0].mxu0
        %v2613 = vadd.f32 0.0, %v2612
        %v2614 = vpop.f32.mrb[0].mxu0
        %v2615 = vpop.f32.mrb[0].mxu0
        %v2616 = vadd.f32 0.0, %v2615
        %v2617 = vpop.f32.mrb[0].mxu0
        %2618 = vmatprep.mubr.bf16.mxu0 0
        %2619 = vmatmul.mubr.bf16.gmra.mrb[0].mxu0 %v1630
        %v2620 = vpop.f32.mrb[0].mxu0
        %v2621 = vadd.f32 0.0, %v2620
        %v2622 = vpop.f32.mrb[0].mxu0
        %v2623 = vpop.f32.mrb[0].mxu0
        %v2624 = vadd.f32 0.0, %v2623
        %v2625 = vpop.f32.mrb[0].mxu0
        %2626 = vmatprep.mubr.bf16.mxu0 0
        %2627 = vmatmul.mubr.bf16.gmra.mrb[0].mxu0 %v1633
        %v2628 = vpop.f32.mrb[0].mxu0
        %v2629 = vadd.f32 0.0, %v2628
        %v2630 = vpop.f32.mrb[0].mxu0
        %v2631 = vpop.f32.mrb[0].mxu0
        %v2632 = vadd.f32 0.0, %v2631
        %v2633 = vpop.f32.mrb[0].mxu0
        %2634 = vmatprep.mubr.bf16.mxu0 0
        %2635 = vmatmul.mubr.bf16.gmra.mrb[0].mxu0 %v1636
        %v2636 = vpop.f32.mrb[0].mxu0
        %v2637 = vadd.f32 0.0, %v2636
        %v2638 = vpop.f32.mrb[0].mxu0
        %v2639 = vpop.f32.mrb[0].mxu0
        %v2640 = vadd.f32 0.0, %v2639
        %v2641 = vpop.f32.mrb[0].mxu0
        %2642 = vmatprep.mubr.bf16.mxu0 0
        %2643 = vmatmul.mubr.bf16.gmra.mrb[0].mxu0 %v1639
        %v2644 = vpop.f32.mrb[0].mxu0
        %v2645 = vadd.f32 0.0, %v2644
        %v2646 = vpop.f32.mrb[0].mxu0
        %v2647 = vpop.f32.mrb[0].mxu0
        %v2648 = vadd.f32 0.0, %v2647
        %v2649 = vpop.f32.mrb[0].mxu0
        %2650 = vmatprep.mubr.bf16.mxu0 0
        %2651 = vmatmul.mubr.bf16.gmra.mrb[0].mxu0 %v1642
        %v2652 = vpop.f32.mrb[0].mxu0
        %v2653 = vadd.f32 0.0, %v2652
        %v2654 = vpop.f32.mrb[0].mxu0
        %v2655 = vpop.f32.mrb[0].mxu0
        %v2656 = vadd.f32 0.0, %v2655
        %v2657 = vpop.f32.mrb[0].mxu0
        %2658 = vmatprep.mubr.bf16.mxu0 0
        %2659 = vmatmul.mubr.bf16.gmra.mrb[0].mxu0 %v1645
        %v2660 = vpop.f32.mrb[0].mxu0
        %v2661 = vadd.f32 0.0, %v2660
        %v2662 = vpop.f32.mrb[0].mxu0
        %v2663 = vpop.f32.mrb[0].mxu0
        %v2664 = vadd.f32 0.0, %v2663
        %v2665 = vpop.f32.mrb[0].mxu0
        %2666 = vmatprep.mubr.bf16.mxu0 0
        %2667 = vmatmul.mubr.bf16.gmra.mrb[0].mxu0 %v1648
        %v2668 = vpop.f32.mrb[0].mxu0
        %v2669 = vadd.f32 0.0, %v2668
        %v2670 = vpop.f32.mrb[0].mxu0
        %v2671 = vpop.f32.mrb[0].mxu0
        %v2672 = vadd.f32 0.0, %v2671
        %v2673 = vpop.f32.mrb[0].mxu0
        %2674 = vmatprep.mubr.bf16.mxu0 0
        %2675 = vmatmul.mubr.bf16.gmra.mrb[0].mxu0 %v1651
        %v2676 = vpop.f32.mrb[0].mxu0
        %v2677 = vadd.f32 0.0, %v2676
        %v2678 = vpop.f32.mrb[0].mxu0
        %v2679 = vpop.f32.mrb[0].mxu0
        %v2680 = vadd.f32 0.0, %v2679
        %v2681 = vpop.f32.mrb[0].mxu0
        %2682 = vmatprep.mubr.bf16.mxu0 0
        %2683 = vmatmul.mubr.bf16.gmra.mrb[0].mxu0 %v1654
        %v2684 = vpop.f32.mrb[0].mxu0
        %v2685 = vadd.f32 0.0, %v2684
        %v2686 = vpop.f32.mrb[0].mxu0
        %v2687 = vpop.f32.mrb[0].mxu0
        %v2688 = vadd.f32 0.0, %v2687
        %v2689 = vpop.f32.mrb[0].mxu0
        %2690 = vmatprep.mubr.bf16.mxu0 0
        %2691 = vmatmul.mubr.bf16.gmra.mrb[0].mxu0 %v1657
        %v2692 = vpop.f32.mrb[0].mxu0
        %v2693 = vadd.f32 0.0, %v2692
        %v2694 = vpop.f32.mrb[0].mxu0
        %v2695 = vpop.f32.mrb[0].mxu0
        %v2696 = vadd.f32 0.0, %v2695
        %v2697 = vpop.f32.mrb[0].mxu0
        %2698 = vmatprep.mubr.bf16.mxu0 0
        %2699 = vmatmul.mubr.bf16.gmra.mrb[0].mxu0 %v1660
        %v2700 = vpop.f32.mrb[0].mxu0
        %v2701 = vadd.f32 0.0, %v2700
        %v2702 = vpop.f32.mrb[0].mxu0
        %v2703 = vpop.f32.mrb[0].mxu0
        %v2704 = vadd.f32 0.0, %v2703
        %v2705 = vpop.f32.mrb[0].mxu0
        %2706 = vmatprep.mubr.bf16.mxu0 0
        %2707 = vmatmul.mubr.bf16.gmra.mrb[0].mxu0 %v1663
        %v2708 = vpop.f32.mrb[0].mxu0
        %v2709 = vadd.f32 0.0, %v2708
        %v2710 = vpop.f32.mrb[0].mxu0
        %v2711 = vpop.f32.mrb[0].mxu0
        %v2712 = vadd.f32 0.0, %v2711
        %v2713 = vpop.f32.mrb[0].mxu0
        %2714 = vmatprep.mubr.bf16.mxu0 0
        %2715 = vmatmul.mubr.bf16.gmra.mrb[0].mxu0 %v1666
        %v2716 = vpop.f32.mrb[0].mxu0
        %v2717 = vadd.f32 0.0, %v2716
        %v2718 = vpop.f32.mrb[0].mxu0
        %v2719 = vpop.f32.mrb[0].mxu0
        %v2720 = vadd.f32 0.0, %v2719
        %v2721 = vpop.f32.mrb[0].mxu0
        %2722 = vmatprep.mubr.bf16.mxu0 0
        %2723 = vmatmul.mubr.bf16.gmra.mrb[0].mxu0 %v1669
        %v2724 = vpop.f32.mrb[0].mxu0
        %v2725 = vadd.f32 0.0, %v2724
        %v2726 = vpop.f32.mrb[0].mxu0
        %v2727 = vpop.f32.mrb[0].mxu0
        %v2728 = vadd.f32 0.0, %v2727
        %v2729 = vpop.f32.mrb[0].mxu0
        %2730 = vmatprep.mubr.bf16.mxu0 0
        %2731 = vmatmul.mubr.bf16.gmra.mrb[0].mxu0 %v1672
        %v2732 = vpop.f32.mrb[0].mxu0
        %v2733 = vadd.f32 0.0, %v2732
        %v2734 = vpop.f32.mrb[0].mxu0
        %v2735 = vpop.f32.mrb[0].mxu0
        %v2736 = vadd.f32 0.0, %v2735
        %v2737 = vpop.f32.mrb[0].mxu0
        %2738 = vmatprep.mubr.bf16.mxu0 0
        %2739 = vmatmul.mubr.bf16.gmra.mrb[0].mxu0 %v1675
        %v2740 = vpop.f32.mrb[0].mxu0
        %v2741 = vadd.f32 0.0, %v2740
        %v2742 = vpop.f32.mrb[0].mxu0
        %v2743 = vpop.f32.mrb[0].mxu0
        %v2744 = vadd.f32 0.0, %v2743
        %v2745 = vpop.f32.mrb[0].mxu0
        %2746 = vmatprep.mubr.bf16.mxu0 0
        %2747 = vmatmul.mubr.bf16.gmra.mrb[0].mxu0 %v1678
        %v2748 = vpop.f32.mrb[0].mxu0
        %v2749 = vadd.f32 0.0, %v2748
        %v2750 = vpop.f32.mrb[0].mxu0
        %v2751 = vpop.f32.mrb[0].mxu0
        %v2752 = vadd.f32 0.0, %v2751
        %v2753 = vpop.f32.mrb[0].mxu0
        %2754 = vmatprep.mubr.bf16.mxu0 0
        %2755 = vmatmul.mubr.bf16.gmra.mrb[0].mxu0 %v1681
        %v2756 = vpop.f32.mrb[0].mxu0
        %v2757 = vadd.f32 0.0, %v2756
        %v2758 = vpop.f32.mrb[0].mxu0
        %v2759 = vpop.f32.mrb[0].mxu0
        %v2760 = vadd.f32 0.0, %v2759
        %v2761 = vpop.f32.mrb[0].mxu0
        %2762 = vdwg.mxu0
        %2763 = vst [vmem:[#allocation2] sm:$0xff] %v1725
        %2764 = vst [vmem:[#allocation2 + $0x8] sm:$0xff] %v1728
        %2765 = vst [vmem:[#allocation2 + $0x10] sm:$0xff] %v1733
        %2766 = vst [vmem:[#allocation2 + $0x18] sm:$0xff] %v1736
        %2767 = vst [vmem:[#allocation2 + $0x20] sm:$0xff] %v1741
        %2768 = vst [vmem:[#allocation2 + $0x28] sm:$0xff] %v1744
        %2769 = vst [vmem:[#allocation2 + $0x30] sm:$0xff] %v1749
        %2770 = vst [vmem:[#allocation2 + $0x38] sm:$0xff] %v1752
        %2771 = vst [vmem:[#allocation2 + $0x40] sm:$0xff] %v1757
        %2772 = vst [vmem:[#allocation2 + $0x48] sm:$0xff] %v1760
        %2773 = vst [vmem:[#allocation2 + $0x50] sm:$0xff] %v1765
        %2774 = vst [vmem:[#allocation2 + $0x58] sm:$0xff] %v1768
        %2775 = vst [vmem:[#allocation2 + $0x60] sm:$0xff] %v1773
        %2776 = vst [vmem:[#allocation2 + $0x68] sm:$0xff] %v1776
        %2777 = vst [vmem:[#allocation2 + $0x70] sm:$0xff] %v1781
        %2778 = vst [vmem:[#allocation2 + $0x78] sm:$0xff] %v1784
        %2779 = vst [vmem:[#allocation2 + $0x80] sm:$0xff] %v1789
        %2780 = vst [vmem:[#allocation2 + $0x88] sm:$0xff] %v1792
        %2781 = vst [vmem:[#allocation2 + $0x90] sm:$0xff] %v1797
        %2782 = vst [vmem:[#allocation2 + $0x98] sm:$0xff] %v1800
        %2783 = vst [vmem:[#allocation2 + $0xa0] sm:$0xff] %v1805
        %2784 = vst [vmem:[#allocation2 + $0xa8] sm:$0xff] %v1808
        %2785 = vst [vmem:[#allocation2 + $0xb0] sm:$0xff] %v1813
        %2786 = vst [vmem:[#allocation2 + $0xb8] sm:$0xff] %v1816
        %2787 = vst [vmem:[#allocation2 + $0xc0] sm:$0xff] %v1821
        %2788 = vst [vmem:[#allocation2 + $0xc8] sm:$0xff] %v1824
        %2789 = vst [vmem:[#allocation2 + $0xd0] sm:$0xff] %v1829
        %2790 = vst [vmem:[#allocation2 + $0xd8] sm:$0xff] %v1832
        %2791 = vst [vmem:[#allocation2 + $0xe0] sm:$0xff] %v1837
        %2792 = vst [vmem:[#allocation2 + $0xe8] sm:$0xff] %v1840
        %2793 = vst [vmem:[#allocation2 + $0xf0] sm:$0xff] %v1845
        %2794 = vst [vmem:[#allocation2 + $0xf8] sm:$0xff] %v1848
        %2795 = vst [vmem:[#allocation2 + $0x100] sm:$0xff] %v1853
        %2796 = vst [vmem:[#allocation2 + $0x108] sm:$0xff] %v1856
        %2797 = vst [vmem:[#allocation2 + $0x110] sm:$0xff] %v1861
        %2798 = vst [vmem:[#allocation2 + $0x118] sm:$0xff] %v1864
        %2799 = vst [vmem:[#allocation2 + $0x120] sm:$0xff] %v1869
        %2800 = vst [vmem:[#allocation2 + $0x128] sm:$0xff] %v1872
        %2801 = vst [vmem:[#allocation2 + $0x130] sm:$0xff] %v1877
        %2802 = vst [vmem:[#allocation2 + $0x138] sm:$0xff] %v1880
        %2803 = vst [vmem:[#allocation2 + $0x140] sm:$0xff] %v1885
        %2804 = vst [vmem:[#allocation2 + $0x148] sm:$0xff] %v1888
        %2805 = vst [vmem:[#allocation2 + $0x150] sm:$0xff] %v1893
        %2806 = vst [vmem:[#allocation2 + $0x158] sm:$0xff] %v1896
        %2807 = vst [vmem:[#allocation2 + $0x160] sm:$0xff] %v1901
        %2808 = vst [vmem:[#allocation2 + $0x168] sm:$0xff] %v1904
        %2809 = vst [vmem:[#allocation2 + $0x170] sm:$0xff] %v1909
        %2810 = vst [vmem:[#allocation2 + $0x178] sm:$0xff] %v1912
        %2811 = vst [vmem:[#allocation2 + $0x180] sm:$0xff] %v1917
        %2812 = vst [vmem:[#allocation2 + $0x188] sm:$0xff] %v1920
        %2813 = vst [vmem:[#allocation2 + $0x190] sm:$0xff] %v1925
        %2814 = vst [vmem:[#allocation2 + $0x198] sm:$0xff] %v1928
        %2815 = vst [vmem:[#allocation2 + $0x1a0] sm:$0xff] %v1933
        %2816 = vst [vmem:[#allocation2 + $0x1a8] sm:$0xff] %v1936
        %2817 = vst [vmem:[#allocation2 + $0x1b0] sm:$0xff] %v1941
        %2818 = vst [vmem:[#allocation2 + $0x1b8] sm:$0xff] %v1944
        %2819 = vst [vmem:[#allocation2 + $0x1c0] sm:$0xff] %v1949
        %2820 = vst [vmem:[#allocation2 + $0x1c8] sm:$0xff] %v1952
        %2821 = vst [vmem:[#allocation2 + $0x1d0] sm:$0xff] %v1957
        %2822 = vst [vmem:[#allocation2 + $0x1d8] sm:$0xff] %v1960
        %2823 = vst [vmem:[#allocation2 + $0x1e0] sm:$0xff] %v1965
        %2824 = vst [vmem:[#allocation2 + $0x1e8] sm:$0xff] %v1968
        %2825 = vst [vmem:[#allocation2 + $0x1f0] sm:$0xff] %v1973
        %2826 = vst [vmem:[#allocation2 + $0x1f8] sm:$0xff] %v1976
        %2827 = vst [vmem:[#allocation2 + $0x200] sm:$0xff] %v1981
        %2828 = vst [vmem:[#allocation2 + $0x208] sm:$0xff] %v1984
        %2829 = vst [vmem:[#allocation2 + $0x210] sm:$0xff] %v1989
        %2830 = vst [vmem:[#allocation2 + $0x218] sm:$0xff] %v1992
        %2831 = vst [vmem:[#allocation2 + $0x220] sm:$0xff] %v1997
        %2832 = vst [vmem:[#allocation2 + $0x228] sm:$0xff] %v2000
        %2833 = vst [vmem:[#allocation2 + $0x230] sm:$0xff] %v2005
        %2834 = vst [vmem:[#allocation2 + $0x238] sm:$0xff] %v2008
        %2835 = vst [vmem:[#allocation2 + $0x240] sm:$0xff] %v2013
        %2836 = vst [vmem:[#allocation2 + $0x248] sm:$0xff] %v2016
        %2837 = vst [vmem:[#allocation2 + $0x250] sm:$0xff] %v2021
        %2838 = vst [vmem:[#allocation2 + $0x258] sm:$0xff] %v2024
        %2839 = vst [vmem:[#allocation2 + $0x260] sm:$0xff] %v2029
        %2840 = vst [vmem:[#allocation2 + $0x268] sm:$0xff] %v2032
        %2841 = vst [vmem:[#allocation2 + $0x270] sm:$0xff] %v2037
        %2842 = vst [vmem:[#allocation2 + $0x278] sm:$0xff] %v2040
        %2843 = vst [vmem:[#allocation2 + $0x280] sm:$0xff] %v2045
        %2844 = vst [vmem:[#allocation2 + $0x288] sm:$0xff] %v2048
        %2845 = vst [vmem:[#allocation2 + $0x290] sm:$0xff] %v2053
        %2846 = vst [vmem:[#allocation2 + $0x298] sm:$0xff] %v2056
        %2847 = vst [vmem:[#allocation2 + $0x2a0] sm:$0xff] %v2061
        %2848 = vst [vmem:[#allocation2 + $0x2a8] sm:$0xff] %v2064
        %2849 = vst [vmem:[#allocation2 + $0x2b0] sm:$0xff] %v2069
        %2850 = vst [vmem:[#allocation2 + $0x2b8] sm:$0xff] %v2072
        %2851 = vst [vmem:[#allocation2 + $0x2c0] sm:$0xff] %v2077
        %2852 = vst [vmem:[#allocation2 + $0x2c8] sm:$0xff] %v2080
        %2853 = vst [vmem:[#allocation2 + $0x2d0] sm:$0xff] %v2085
        %2854 = vst [vmem:[#allocation2 + $0x2d8] sm:$0xff] %v2088
        %2855 = vst [vmem:[#allocation2 + $0x2e0] sm:$0xff] %v2093
        %2856 = vst [vmem:[#allocation2 + $0x2e8] sm:$0xff] %v2096
        %2857 = vst [vmem:[#allocation2 + $0x2f0] sm:$0xff] %v2101
        %2858 = vst [vmem:[#allocation2 + $0x2f8] sm:$0xff] %v2104
        %2859 = vst [vmem:[#allocation2 + $0x300] sm:$0xff] %v2109
        %2860 = vst [vmem:[#allocation2 + $0x308] sm:$0xff] %v2112
        %2861 = vst [vmem:[#allocation2 + $0x310] sm:$0xff] %v2117
        %2862 = vst [vmem:[#allocation2 + $0x318] sm:$0xff] %v2120
        %2863 = vst [vmem:[#allocation2 + $0x320] sm:$0xff] %v2125
        %2864 = vst [vmem:[#allocation2 + $0x328] sm:$0xff] %v2128
        %2865 = vst [vmem:[#allocation2 + $0x330] sm:$0xff] %v2133
        %2866 = vst [vmem:[#allocation2 + $0x338] sm:$0xff] %v2136
        %2867 = vst [vmem:[#allocation2 + $0x340] sm:$0xff] %v2141
        %2868 = vst [vmem:[#allocation2 + $0x348] sm:$0xff] %v2144
        %2869 = vst [vmem:[#allocation2 + $0x350] sm:$0xff] %v2149
        %2870 = vst [vmem:[#allocation2 + $0x358] sm:$0xff] %v2152
        %2871 = vst [vmem:[#allocation2 + $0x360] sm:$0xff] %v2157
        %2872 = vst [vmem:[#allocation2 + $0x368] sm:$0xff] %v2160
        %2873 = vst [vmem:[#allocation2 + $0x370] sm:$0xff] %v2165
        %2874 = vst [vmem:[#allocation2 + $0x378] sm:$0xff] %v2168
        %2875 = vst [vmem:[#allocation2 + $0x380] sm:$0xff] %v2173
        %2876 = vst [vmem:[#allocation2 + $0x388] sm:$0xff] %v2176
        %2877 = vst [vmem:[#allocation2 + $0x390] sm:$0xff] %v2181
        %2878 = vst [vmem:[#allocation2 + $0x398] sm:$0xff] %v2184
        %2879 = vst [vmem:[#allocation2 + $0x3a0] sm:$0xff] %v2189
        %2880 = vst [vmem:[#allocation2 + $0x3a8] sm:$0xff] %v2192
        %2881 = vst [vmem:[#allocation2 + $0x3b0] sm:$0xff] %v2197
        %2882 = vst [vmem:[#allocation2 + $0x3b8] sm:$0xff] %v2200
        %2883 = vst [vmem:[#allocation2 + $0x3c0] sm:$0xff] %v2205
        %2884 = vst [vmem:[#allocation2 + $0x3c8] sm:$0xff] %v2208
        %2885 = vst [vmem:[#allocation2 + $0x3d0] sm:$0xff] %v2213
        %2886 = vst [vmem:[#allocation2 + $0x3d8] sm:$0xff] %v2216
        %2887 = vst [vmem:[#allocation2 + $0x3e0] sm:$0xff] %v2221
        %2888 = vst [vmem:[#allocation2 + $0x3e8] sm:$0xff] %v2224
        %2889 = vst [vmem:[#allocation2 + $0x3f0] sm:$0xff] %v2229
        %2890 = vst [vmem:[#allocation2 + $0x3f8] sm:$0xff] %v2232
        %2891 = vst [vmem:[#allocation2 + $0x400] sm:$0xff] %v2237
        %2892 = vst [vmem:[#allocation2 + $0x408] sm:$0xff] %v2240
        %2893 = vst [vmem:[#allocation2 + $0x410] sm:$0xff] %v2245
        %2894 = vst [vmem:[#allocation2 + $0x418] sm:$0xff] %v2248
        %2895 = vst [vmem:[#allocation2 + $0x420] sm:$0xff] %v2253
        %2896 = vst [vmem:[#allocation2 + $0x428] sm:$0xff] %v2256
        %2897 = vst [vmem:[#allocation2 + $0x430] sm:$0xff] %v2261
        %2898 = vst [vmem:[#allocation2 + $0x438] sm:$0xff] %v2264
        %2899 = vst [vmem:[#allocation2 + $0x440] sm:$0xff] %v2269
        %2900 = vst [vmem:[#allocation2 + $0x448] sm:$0xff] %v2272
        %2901 = vst [vmem:[#allocation2 + $0x450] sm:$0xff] %v2277
        %2902 = vst [vmem:[#allocation2 + $0x458] sm:$0xff] %v2280
        %2903 = vst [vmem:[#allocation2 + $0x460] sm:$0xff] %v2285
        %2904 = vst [vmem:[#allocation2 + $0x468] sm:$0xff] %v2288
        %2905 = vst [vmem:[#allocation2 + $0x470] sm:$0xff] %v2293
        %2906 = vst [vmem:[#allocation2 + $0x478] sm:$0xff] %v2296
        %2907 = vst [vmem:[#allocation2 + $0x480] sm:$0xff] %v2301
        %2908 = vst [vmem:[#allocation2 + $0x488] sm:$0xff] %v2304
        %2909 = vst [vmem:[#allocation2 + $0x490] sm:$0xff] %v2309
        %2910 = vst [vmem:[#allocation2 + $0x498] sm:$0xff] %v2312
        %2911 = vst [vmem:[#allocation2 + $0x4a0] sm:$0xff] %v2317
        %2912 = vst [vmem:[#allocation2 + $0x4a8] sm:$0xff] %v2320
        %2913 = vst [vmem:[#allocation2 + $0x4b0] sm:$0xff] %v2325
        %2914 = vst [vmem:[#allocation2 + $0x4b8] sm:$0xff] %v2328
        %2915 = vst [vmem:[#allocation2 + $0x4c0] sm:$0xff] %v2333
        %2916 = vst [vmem:[#allocation2 + $0x4c8] sm:$0xff] %v2336
        %2917 = vst [vmem:[#allocation2 + $0x4d0] sm:$0xff] %v2341
        %2918 = vst [vmem:[#allocation2 + $0x4d8] sm:$0xff] %v2344
        %2919 = vst [vmem:[#allocation2 + $0x4e0] sm:$0xff] %v2349
        %2920 = vst [vmem:[#allocation2 + $0x4e8] sm:$0xff] %v2352
        %2921 = vst [vmem:[#allocation2 + $0x4f0] sm:$0xff] %v2357
        %2922 = vst [vmem:[#allocation2 + $0x4f8] sm:$0xff] %v2360
        %2923 = vst [vmem:[#allocation2 + $0x500] sm:$0xff] %v2365
        %2924 = vst [vmem:[#allocation2 + $0x508] sm:$0xff] %v2368
        %2925 = vst [vmem:[#allocation2 + $0x510] sm:$0xff] %v2373
        %2926 = vst [vmem:[#allocation2 + $0x518] sm:$0xff] %v2376
        %2927 = vst [vmem:[#allocation2 + $0x520] sm:$0xff] %v2381
        %2928 = vst [vmem:[#allocation2 + $0x528] sm:$0xff] %v2384
        %2929 = vst [vmem:[#allocation2 + $0x530] sm:$0xff] %v2389
        %2930 = vst [vmem:[#allocation2 + $0x538] sm:$0xff] %v2392
        %2931 = vst [vmem:[#allocation2 + $0x540] sm:$0xff] %v2397
        %2932 = vst [vmem:[#allocation2 + $0x548] sm:$0xff] %v2400
        %2933 = vst [vmem:[#allocation2 + $0x550] sm:$0xff] %v2405
        %2934 = vst [vmem:[#allocation2 + $0x558] sm:$0xff] %v2408
        %2935 = vst [vmem:[#allocation2 + $0x560] sm:$0xff] %v2413
        %2936 = vst [vmem:[#allocation2 + $0x568] sm:$0xff] %v2416
        %2937 = vst [vmem:[#allocation2 + $0x570] sm:$0xff] %v2421
        %2938 = vst [vmem:[#allocation2 + $0x578] sm:$0xff] %v2424
        %2939 = vst [vmem:[#allocation2 + $0x580] sm:$0xff] %v2429
        %2940 = vst [vmem:[#allocation2 + $0x588] sm:$0xff] %v2432
        %2941 = vst [vmem:[#allocation2 + $0x590] sm:$0xff] %v2437
        %2942 = vst [vmem:[#allocation2 + $0x598] sm:$0xff] %v2440
        %2943 = vst [vmem:[#allocation2 + $0x5a0] sm:$0xff] %v2445
        %2944 = vst [vmem:[#allocation2 + $0x5a8] sm:$0xff] %v2448
        %2945 = vst [vmem:[#allocation2 + $0x5b0] sm:$0xff] %v2453
        %2946 = vst [vmem:[#allocation2 + $0x5b8] sm:$0xff] %v2456
        %2947 = vst [vmem:[#allocation2 + $0x5c0] sm:$0xff] %v2461
        %2948 = vst [vmem:[#allocation2 + $0x5c8] sm:$0xff] %v2464
        %2949 = vst [vmem:[#allocation2 + $0x5d0] sm:$0xff] %v2469
        %2950 = vst [vmem:[#allocation2 + $0x5d8] sm:$0xff] %v2472
        %2951 = vst [vmem:[#allocation2 + $0x5e0] sm:$0xff] %v2477
        %2952 = vst [vmem:[#allocation2 + $0x5e8] sm:$0xff] %v2480
        %2953 = vst [vmem:[#allocation2 + $0x5f0] sm:$0xff] %v2485
        %2954 = vst [vmem:[#allocation2 + $0x5f8] sm:$0xff] %v2488
        %2955 = vst [vmem:[#allocation2 + $0x600] sm:$0xff] %v2493
        %2956 = vst [vmem:[#allocation2 + $0x608] sm:$0xff] %v2496
        %2957 = vst [vmem:[#allocation2 + $0x610] sm:$0xff] %v2501
        %2958 = vst [vmem:[#allocation2 + $0x618] sm:$0xff] %v2504
        %2959 = vst [vmem:[#allocation2 + $0x620] sm:$0xff] %v2509
        %2960 = vst [vmem:[#allocation2 + $0x628] sm:$0xff] %v2512
        %2961 = vst [vmem:[#allocation2 + $0x630] sm:$0xff] %v2517
        %2962 = vst [vmem:[#allocation2 + $0x638] sm:$0xff] %v2520
        %2963 = vst [vmem:[#allocation2 + $0x640] sm:$0xff] %v2525
        %2964 = vst [vmem:[#allocation2 + $0x648] sm:$0xff] %v2528
        %2965 = vst [vmem:[#allocation2 + $0x650] sm:$0xff] %v2533
        %2966 = vst [vmem:[#allocation2 + $0x658] sm:$0xff] %v2536
        %2967 = vst [vmem:[#allocation2 + $0x660] sm:$0xff] %v2541
        %2968 = vst [vmem:[#allocation2 + $0x668] sm:$0xff] %v2544
        %2969 = vst [vmem:[#allocation2 + $0x670] sm:$0xff] %v2549
        %2970 = vst [vmem:[#allocation2 + $0x678] sm:$0xff] %v2552
        %2971 = vst [vmem:[#allocation2 + $0x680] sm:$0xff] %v2557
        %2972 = vst [vmem:[#allocation2 + $0x688] sm:$0xff] %v2560
        %2973 = vst [vmem:[#allocation2 + $0x690] sm:$0xff] %v2565
        %2974 = vst [vmem:[#allocation2 + $0x698] sm:$0xff] %v2568
        %2975 = vst [vmem:[#allocation2 + $0x6a0] sm:$0xff] %v2573
        %2976 = vst [vmem:[#allocation2 + $0x6a8] sm:$0xff] %v2576
        %2977 = vst [vmem:[#allocation2 + $0x6b0] sm:$0xff] %v2581
        %2978 = vst [vmem:[#allocation2 + $0x6b8] sm:$0xff] %v2584
        %2979 = vst [vmem:[#allocation2 + $0x6c0] sm:$0xff] %v2589
        %2980 = vst [vmem:[#allocation2 + $0x6c8] sm:$0xff] %v2592
        %2981 = vst [vmem:[#allocation2 + $0x6d0] sm:$0xff] %v2597
        %2982 = vst [vmem:[#allocation2 + $0x6d8] sm:$0xff] %v2600
        %2983 = vst [vmem:[#allocation2 + $0x6e0] sm:$0xff] %v2605
        %2984 = vst [vmem:[#allocation2 + $0x6e8] sm:$0xff] %v2608
        %2985 = vst [vmem:[#allocation2 + $0x6f0] sm:$0xff] %v2613
        %2986 = vst [vmem:[#allocation2 + $0x6f8] sm:$0xff] %v2616
        %2987 = vst [vmem:[#allocation2 + $0x700] sm:$0xff] %v2621
        %2988 = vst [vmem:[#allocation2 + $0x708] sm:$0xff] %v2624
        %2989 = vst [vmem:[#allocation2 + $0x710] sm:$0xff] %v2629
        %2990 = vst [vmem:[#allocation2 + $0x718] sm:$0xff] %v2632
        %2991 = vst [vmem:[#allocation2 + $0x720] sm:$0xff] %v2637
        %2992 = vst [vmem:[#allocation2 + $0x728] sm:$0xff] %v2640
        %2993 = vst [vmem:[#allocation2 + $0x730] sm:$0xff] %v2645
        %2994 = vst [vmem:[#allocation2 + $0x738] sm:$0xff] %v2648
        %2995 = vst [vmem:[#allocation2 + $0x740] sm:$0xff] %v2653
        %2996 = vst [vmem:[#allocation2 + $0x748] sm:$0xff] %v2656
        %2997 = vst [vmem:[#allocation2 + $0x750] sm:$0xff] %v2661
        %2998 = vst [vmem:[#allocation2 + $0x758] sm:$0xff] %v2664
        %2999 = vst [vmem:[#allocation2 + $0x760] sm:$0xff] %v2669
        %3000 = vst [vmem:[#allocation2 + $0x768] sm:$0xff] %v2672
        %3001 = vst [vmem:[#allocation2 + $0x770] sm:$0xff] %v2677
        %3002 = vst [vmem:[#allocation2 + $0x778] sm:$0xff] %v2680
        %3003 = vst [vmem:[#allocation2 + $0x780] sm:$0xff] %v2685
        %3004 = vst [vmem:[#allocation2 + $0x788] sm:$0xff] %v2688
        %3005 = vst [vmem:[#allocation2 + $0x790] sm:$0xff] %v2693
        %3006 = vst [vmem:[#allocation2 + $0x798] sm:$0xff] %v2696
        %3007 = vst [vmem:[#allocation2 + $0x7a0] sm:$0xff] %v2701
        %3008 = vst [vmem:[#allocation2 + $0x7a8] sm:$0xff] %v2704
        %3009 = vst [vmem:[#allocation2 + $0x7b0] sm:$0xff] %v2709
        %3010 = vst [vmem:[#allocation2 + $0x7b8] sm:$0xff] %v2712
        %3011 = vst [vmem:[#allocation2 + $0x7c0] sm:$0xff] %v2717
        %3012 = vst [vmem:[#allocation2 + $0x7c8] sm:$0xff] %v2720
        %3013 = vst [vmem:[#allocation2 + $0x7d0] sm:$0xff] %v2725
        %3014 = vst [vmem:[#allocation2 + $0x7d8] sm:$0xff] %v2728
        %3015 = vst [vmem:[#allocation2 + $0x7e0] sm:$0xff] %v2733
        %3016 = vst [vmem:[#allocation2 + $0x7e8] sm:$0xff] %v2736
        %3017 = vst [vmem:[#allocation2 + $0x7f0] sm:$0xff] %v2741
        %3018 = vst [vmem:[#allocation2 + $0x7f8] sm:$0xff] %v2744
        %3019 = vst [vmem:[#allocation2 + $0x800] sm:$0xff] %v2749
        %3020 = vst [vmem:[#allocation2 + $0x808] sm:$0xff] %v2752
        %3021 = vst [vmem:[#allocation2 + $0x810] sm:$0xff] %v2757
        %3022 = vst [vmem:[#allocation2 + $0x818] sm:$0xff] %v2760
        %v3023 = vld [vmem:[%s2] sm:$0xff]
        %v3024 = vld [vmem:[%s2 + $0x8] sm:$0xff]
        %v3025 = vld [vmem:[%s2 + $0x10] sm:$0xff]
        %v3026 = vld [vmem:[%s2 + $0x18] sm:$0xff]
        %v3027 = vld [vmem:[%s2 + $0x20] sm:$0xff]
        %v3028 = vld [vmem:[%s2 + $0x28] sm:$0xff]
        %v3029 = vld [vmem:[%s2 + $0x30] sm:$0xff]
        %v3030 = vld [vmem:[%s2 + $0x38] sm:$0xff]
        %v3031 = vld [vmem:[%s2 + $0x40] sm:$0xff]
        %v3032 = vld [vmem:[%s2 + $0x48] sm:$0xff]
        %v3033 = vld [vmem:[%s2 + $0x50] sm:$0xff]
        %v3034 = vld [vmem:[%s2 + $0x58] sm:$0xff]
        %v3035 = vld [vmem:[%s2 + $0x60] sm:$0xff]
        %v3036 = vld [vmem:[%s2 + $0x68] sm:$0xff]
        %v3037 = vld [vmem:[%s2 + $0x70] sm:$0xff]
        %v3038 = vld [vmem:[%s2 + $0x78] sm:$0xff]
        %v3039 = vld [vmem:[%s2 + $0x80] sm:$0xff]
        %v3040 = vld [vmem:[%s2 + $0x88] sm:$0xff]
        %v3041 = vld [vmem:[%s2 + $0x90] sm:$0xff]
        %v3042 = vld [vmem:[%s2 + $0x98] sm:$0xff]
        %v3043 = vld [vmem:[#allocation2] sm:$0xff]
        %v3044 = vld [vmem:[#allocation2 + $0x8] sm:$0xff]
        %v3045 = vld [vmem:[#allocation2 + $0x10] sm:$0xff]
        %v3046 = vld [vmem:[#allocation2 + $0x18] sm:$0xff]
        %v3047 = vld [vmem:[#allocation2 + $0x20] sm:$0xff]
        %v3048 = vld [vmem:[#allocation2 + $0x28] sm:$0xff]
        %v3049 = vld [vmem:[#allocation2 + $0x30] sm:$0xff]
        %v3050 = vld [vmem:[#allocation2 + $0x38] sm:$0xff]
        %v3051 = vld [vmem:[#allocation2 + $0x40] sm:$0xff]
        %v3052 = vld [vmem:[#allocation2 + $0x48] sm:$0xff]
        %v3053 = vld [vmem:[#allocation2 + $0x50] sm:$0xff]
        %v3054 = vld [vmem:[#allocation2 + $0x58] sm:$0xff]
        %v3055 = vld [vmem:[#allocation2 + $0x60] sm:$0xff]
        %v3056 = vld [vmem:[#allocation2 + $0x68] sm:$0xff]
        %v3057 = vld [vmem:[#allocation2 + $0x70] sm:$0xff]
        %v3058 = vld [vmem:[#allocation2 + $0x78] sm:$0xff]
        %v3059 = vld [vmem:[#allocation2 + $0x80] sm:$0xff]
        %v3060 = vld [vmem:[#allocation2 + $0x88] sm:$0xff]
        %v3061 = vld [vmem:[#allocation2 + $0x90] sm:$0xff]
        %v3062 = vld [vmem:[#allocation2 + $0x98] sm:$0xff]
        %3064 = vset.pattern.permute.xlu0 0
        %3065 = vperm.xlu0 %3064, %v3023
        %v3066 = vpop.permute.xlu0 %3065
        %3069 = vset.pattern.permute.xlu0 0
        %3070 = vperm.xlu0 %3069, %v3024
        %v3071 = vpop.permute.xlu0 %3070
        %3074 = vset.pattern.permute.xlu0 0
        %3075 = vperm.xlu0 %3074, %v3025
        %v3076 = vpop.permute.xlu0 %3075
        %3079 = vset.pattern.permute.xlu0 0
        %3080 = vperm.xlu0 %3079, %v3026
        %v3081 = vpop.permute.xlu0 %3080
        %3084 = vset.pattern.permute.xlu0 0
        %3085 = vperm.xlu0 %3084, %v3027
        %v3086 = vpop.permute.xlu0 %3085
        %3089 = vset.pattern.permute.xlu0 0
        %3090 = vperm.xlu0 %3089, %v3028
        %v3091 = vpop.permute.xlu0 %3090
        %3094 = vset.pattern.permute.xlu0 0
        %3095 = vperm.xlu0 %3094, %v3029
        %v3096 = vpop.permute.xlu0 %3095
        %3099 = vset.pattern.permute.xlu0 0
        %3100 = vperm.xlu0 %3099, %v3030
        %v3101 = vpop.permute.xlu0 %3100
        %3104 = vset.pattern.permute.xlu0 0
        %3105 = vperm.xlu0 %3104, %v3031
        %v3106 = vpop.permute.xlu0 %3105
        %3109 = vset.pattern.permute.xlu0 0
        %3110 = vperm.xlu0 %3109, %v3032
        %v3111 = vpop.permute.xlu0 %3110
        %3114 = vset.pattern.permute.xlu0 0
        %3115 = vperm.xlu0 %3114, %v3033
        %v3116 = vpop.permute.xlu0 %3115
        %3119 = vset.pattern.permute.xlu0 0
        %3120 = vperm.xlu0 %3119, %v3034
        %v3121 = vpop.permute.xlu0 %3120
        %3124 = vset.pattern.permute.xlu0 0
        %3125 = vperm.xlu0 %3124, %v3035
        %v3126 = vpop.permute.xlu0 %3125
        %3129 = vset.pattern.permute.xlu0 0
        %3130 = vperm.xlu0 %3129, %v3036
        %v3131 = vpop.permute.xlu0 %3130
        %3134 = vset.pattern.permute.xlu0 0
        %3135 = vperm.xlu0 %3134, %v3037
        %v3136 = vpop.permute.xlu0 %3135
        %3139 = vset.pattern.permute.xlu0 0
        %3140 = vperm.xlu0 %3139, %v3038
        %v3141 = vpop.permute.xlu0 %3140
        %3144 = vset.pattern.permute.xlu0 0
        %3145 = vperm.xlu0 %3144, %v3039
        %v3146 = vpop.permute.xlu0 %3145
        %3149 = vset.pattern.permute.xlu0 0
        %3150 = vperm.xlu0 %3149, %v3040
        %v3151 = vpop.permute.xlu0 %3150
        %3154 = vset.pattern.permute.xlu0 0
        %3155 = vperm.xlu0 %3154, %v3041
        %v3156 = vpop.permute.xlu0 %3155
        %3159 = vset.pattern.permute.xlu0 0
        %3160 = vperm.xlu0 %3159, %v3042
        %v3161 = vpop.permute.xlu0 %3160
        %v3163 = vadd.f32 %v3066, %v3043
        %v3164 = vadd.f32 %v3071, %v3044
        %v3165 = vadd.f32 %v3076, %v3045
        %v3166 = vadd.f32 %v3081, %v3046
        %v3167 = vadd.f32 %v3086, %v3047
        %v3168 = vadd.f32 %v3091, %v3048
        %v3169 = vadd.f32 %v3096, %v3049
        %v3170 = vadd.f32 %v3101, %v3050
        %v3171 = vadd.f32 %v3106, %v3051
        %v3172 = vadd.f32 %v3111, %v3052
        %v3173 = vadd.f32 %v3116, %v3053
        %v3174 = vadd.f32 %v3121, %v3054
        %v3175 = vadd.f32 %v3126, %v3055
        %v3176 = vadd.f32 %v3131, %v3056
        %v3177 = vadd.f32 %v3136, %v3057
        %v3178 = vadd.f32 %v3141, %v3058
        %v3179 = vadd.f32 %v3146, %v3059
        %v3180 = vadd.f32 %v3151, %v3060
        %v3181 = vadd.f32 %v3156, %v3061
        %v3182 = vadd.f32 %v3161, %v3062
        %v3183 = vld [vmem:[#allocation2 + $0xa0] sm:$0xff]
        %v3184 = vld [vmem:[#allocation2 + $0xa8] sm:$0xff]
        %v3185 = vld [vmem:[#allocation2 + $0xb0] sm:$0xff]
        %v3186 = vld [vmem:[#allocation2 + $0xb8] sm:$0xff]
        %v3187 = vld [vmem:[#allocation2 + $0xc0] sm:$0xff]
        %v3188 = vld [vmem:[#allocation2 + $0xc8] sm:$0xff]
        %v3189 = vld [vmem:[#allocation2 + $0xd0] sm:$0xff]
        %v3190 = vld [vmem:[#allocation2 + $0xd8] sm:$0xff]
        %v3191 = vld [vmem:[#allocation2 + $0xe0] sm:$0xff]
        %v3192 = vld [vmem:[#allocation2 + $0xe8] sm:$0xff]
        %v3193 = vld [vmem:[#allocation2 + $0xf0] sm:$0xff]
        %v3194 = vld [vmem:[#allocation2 + $0xf8] sm:$0xff]
        %v3195 = vld [vmem:[#allocation2 + $0x100] sm:$0xff]
        %v3196 = vld [vmem:[#allocation2 + $0x108] sm:$0xff]
        %v3197 = vld [vmem:[#allocation2 + $0x110] sm:$0xff]
        %v3198 = vld [vmem:[#allocation2 + $0x118] sm:$0xff]
        %v3199 = vld [vmem:[#allocation2 + $0x120] sm:$0xff]
        %v3200 = vld [vmem:[#allocation2 + $0x128] sm:$0xff]
        %v3201 = vld [vmem:[#allocation2 + $0x130] sm:$0xff]
        %v3202 = vld [vmem:[#allocation2 + $0x138] sm:$0xff]
        %v3203 = vld [vmem:[#allocation2 + $0x140] sm:$0xff]
        %v3204 = vld [vmem:[#allocation2 + $0x148] sm:$0xff]
        %v3205 = vld [vmem:[#allocation2 + $0x150] sm:$0xff]
        %v3206 = vld [vmem:[#allocation2 + $0x158] sm:$0xff]
        %v3207 = vld [vmem:[#allocation2 + $0x160] sm:$0xff]
        %v3208 = vld [vmem:[#allocation2 + $0x168] sm:$0xff]
        %v3209 = vld [vmem:[#allocation2 + $0x170] sm:$0xff]
        %v3210 = vld [vmem:[#allocation2 + $0x178] sm:$0xff]
        %v3211 = vld [vmem:[#allocation2 + $0x180] sm:$0xff]
        %v3212 = vld [vmem:[#allocation2 + $0x188] sm:$0xff]
        %v3213 = vld [vmem:[#allocation2 + $0x190] sm:$0xff]
        %v3214 = vld [vmem:[#allocation2 + $0x198] sm:$0xff]
        %v3215 = vld [vmem:[#allocation2 + $0x1a0] sm:$0xff]
        %v3216 = vld [vmem:[#allocation2 + $0x1a8] sm:$0xff]
        %v3217 = vld [vmem:[#allocation2 + $0x1b0] sm:$0xff]
        %v3218 = vld [vmem:[#allocation2 + $0x1b8] sm:$0xff]
        %v3219 = vld [vmem:[#allocation2 + $0x1c0] sm:$0xff]
        %v3220 = vld [vmem:[#allocation2 + $0x1c8] sm:$0xff]
        %v3221 = vld [vmem:[#allocation2 + $0x1d0] sm:$0xff]
        %v3222 = vld [vmem:[#allocation2 + $0x1d8] sm:$0xff]
        %3243 = vrot.lane.b32.xlu0 %v3203, 126
        %v3244 = vpop.permute.xlu0 %3243
        %3245 = vrot.lane.b32.xlu0 %v3204, 126
        %v3246 = vpop.permute.xlu0 %3245
        %3247 = vrot.lane.b32.xlu0 %v3205, 126
        %v3248 = vpop.permute.xlu0 %3247
        %3249 = vrot.lane.b32.xlu0 %v3206, 126
        %v3250 = vpop.permute.xlu0 %3249
        %3251 = vrot.lane.b32.xlu0 %v3207, 126
        %v3252 = vpop.permute.xlu0 %3251
        %3253 = vrot.lane.b32.xlu0 %v3208, 126
        %v3254 = vpop.permute.xlu0 %3253
        %3255 = vrot.lane.b32.xlu0 %v3209, 126
        %v3256 = vpop.permute.xlu0 %3255
        %3257 = vrot.lane.b32.xlu0 %v3210, 126
        %v3258 = vpop.permute.xlu0 %3257
        %3259 = vrot.lane.b32.xlu0 %v3211, 126
        %v3260 = vpop.permute.xlu0 %3259
        %3261 = vrot.lane.b32.xlu0 %v3212, 126
        %v3262 = vpop.permute.xlu0 %3261
        %3263 = vrot.lane.b32.xlu0 %v3213, 126
        %v3264 = vpop.permute.xlu0 %3263
        %3265 = vrot.lane.b32.xlu0 %v3214, 126
        %v3266 = vpop.permute.xlu0 %3265
        %3267 = vrot.lane.b32.xlu0 %v3215, 126
        %v3268 = vpop.permute.xlu0 %3267
        %3269 = vrot.lane.b32.xlu0 %v3216, 126
        %v3270 = vpop.permute.xlu0 %3269
        %3271 = vrot.lane.b32.xlu0 %v3217, 126
        %v3272 = vpop.permute.xlu0 %3271
        %3273 = vrot.lane.b32.xlu0 %v3218, 126
        %v3274 = vpop.permute.xlu0 %3273
        %3275 = vrot.lane.b32.xlu0 %v3219, 126
        %v3276 = vpop.permute.xlu0 %3275
        %3277 = vrot.lane.b32.xlu0 %v3220, 126
        %v3278 = vpop.permute.xlu0 %3277
        %3279 = vrot.lane.b32.xlu0 %v3221, 126
        %v3280 = vpop.permute.xlu0 %3279
        %3281 = vrot.lane.b32.xlu0 %v3222, 126
        %v3282 = vpop.permute.xlu0 %3281
        %v3303 = vadd.f32 %v3163, %v3244
        %v3304 = vadd.f32 %v3164, %v3246
        %v3305 = vadd.f32 %v3165, %v3248
        %v3306 = vadd.f32 %v3166, %v3250
        %v3307 = vadd.f32 %v3167, %v3252
        %v3308 = vadd.f32 %v3168, %v3254
        %v3309 = vadd.f32 %v3169, %v3256
        %v3310 = vadd.f32 %v3170, %v3258
        %v3311 = vadd.f32 %v3171, %v3260
        %v3312 = vadd.f32 %v3172, %v3262
        %v3313 = vadd.f32 %v3173, %v3264
        %v3314 = vadd.f32 %v3174, %v3266
        %v3315 = vadd.f32 %v3175, %v3268
        %v3316 = vadd.f32 %v3176, %v3270
        %v3317 = vadd.f32 %v3177, %v3272
        %v3318 = vadd.f32 %v3178, %v3274
        %v3319 = vadd.f32 %v3179, %v3276
        %v3320 = vadd.f32 %v3180, %v3278
        %v3321 = vadd.f32 %v3181, %v3280
        %v3322 = vadd.f32 %v3182, %v3282
        %v3323 = vld [vmem:[#allocation2 + $0x1e0] sm:$0xff]
        %v3324 = vld [vmem:[#allocation2 + $0x1e8] sm:$0xff]
        %v3325 = vld [vmem:[#allocation2 + $0x1f0] sm:$0xff]
        %v3326 = vld [vmem:[#allocation2 + $0x1f8] sm:$0xff]
        %v3327 = vld [vmem:[#allocation2 + $0x200] sm:$0xff]
        %v3328 = vld [vmem:[#allocation2 + $0x208] sm:$0xff]
        %v3329 = vld [vmem:[#allocation2 + $0x210] sm:$0xff]
        %v3330 = vld [vmem:[#allocation2 + $0x218] sm:$0xff]
        %v3331 = vld [vmem:[#allocation2 + $0x220] sm:$0xff]
        %v3332 = vld [vmem:[#allocation2 + $0x228] sm:$0xff]
        %v3333 = vld [vmem:[#allocation2 + $0x230] sm:$0xff]
        %v3334 = vld [vmem:[#allocation2 + $0x238] sm:$0xff]
        %v3335 = vld [vmem:[#allocation2 + $0x240] sm:$0xff]
        %v3336 = vld [vmem:[#allocation2 + $0x248] sm:$0xff]
        %v3337 = vld [vmem:[#allocation2 + $0x250] sm:$0xff]
        %v3338 = vld [vmem:[#allocation2 + $0x258] sm:$0xff]
        %v3339 = vld [vmem:[#allocation2 + $0x260] sm:$0xff]
        %v3340 = vld [vmem:[#allocation2 + $0x268] sm:$0xff]
        %v3341 = vld [vmem:[#allocation2 + $0x270] sm:$0xff]
        %v3342 = vld [vmem:[#allocation2 + $0x278] sm:$0xff]
        %3363 = vrot.lane.b32.xlu0 %v3323, 126
        %v3364 = vpop.permute.xlu0 %3363
        %3365 = vrot.lane.b32.xlu0 %v3324, 126
        %v3366 = vpop.permute.xlu0 %3365
        %3367 = vrot.lane.b32.xlu0 %v3325, 126
        %v3368 = vpop.permute.xlu0 %3367
        %3369 = vrot.lane.b32.xlu0 %v3326, 126
        %v3370 = vpop.permute.xlu0 %3369
        %3371 = vrot.lane.b32.xlu0 %v3327, 126
        %v3372 = vpop.permute.xlu0 %3371
        %3373 = vrot.lane.b32.xlu0 %v3328, 126
        %v3374 = vpop.permute.xlu0 %3373
        %3375 = vrot.lane.b32.xlu0 %v3329, 126
        %v3376 = vpop.permute.xlu0 %3375
        %3377 = vrot.lane.b32.xlu0 %v3330, 126
        %v3378 = vpop.permute.xlu0 %3377
        %3379 = vrot.lane.b32.xlu0 %v3331, 126
        %v3380 = vpop.permute.xlu0 %3379
        %3381 = vrot.lane.b32.xlu0 %v3332, 126
        %v3382 = vpop.permute.xlu0 %3381
        %3383 = vrot.lane.b32.xlu0 %v3333, 126
        %v3384 = vpop.permute.xlu0 %3383
        %3385 = vrot.lane.b32.xlu0 %v3334, 126
        %v3386 = vpop.permute.xlu0 %3385
        %3387 = vrot.lane.b32.xlu0 %v3335, 126
        %v3388 = vpop.permute.xlu0 %3387
        %3389 = vrot.lane.b32.xlu0 %v3336, 126
        %v3390 = vpop.permute.xlu0 %3389
        %3391 = vrot.lane.b32.xlu0 %v3337, 126
        %v3392 = vpop.permute.xlu0 %3391
        %3393 = vrot.lane.b32.xlu0 %v3338, 126
        %v3394 = vpop.permute.xlu0 %3393
        %3395 = vrot.lane.b32.xlu0 %v3339, 126
        %v3396 = vpop.permute.xlu0 %3395
        %3397 = vrot.lane.b32.xlu0 %v3340, 126
        %v3398 = vpop.permute.xlu0 %3397
        %3399 = vrot.lane.b32.xlu0 %v3341, 126
        %v3400 = vpop.permute.xlu0 %3399
        %3401 = vrot.lane.b32.xlu0 %v3342, 126
        %v3402 = vpop.permute.xlu0 %3401
        %v3423 = vadd.f32 %v3183, %v3364
        %v3424 = vadd.f32 %v3184, %v3366
        %v3425 = vadd.f32 %v3185, %v3368
        %v3426 = vadd.f32 %v3186, %v3370
        %v3427 = vadd.f32 %v3187, %v3372
        %v3428 = vadd.f32 %v3188, %v3374
        %v3429 = vadd.f32 %v3189, %v3376
        %v3430 = vadd.f32 %v3190, %v3378
        %v3431 = vadd.f32 %v3191, %v3380
        %v3432 = vadd.f32 %v3192, %v3382
        %v3433 = vadd.f32 %v3193, %v3384
        %v3434 = vadd.f32 %v3194, %v3386
        %v3435 = vadd.f32 %v3195, %v3388
        %v3436 = vadd.f32 %v3196, %v3390
        %v3437 = vadd.f32 %v3197, %v3392
        %v3438 = vadd.f32 %v3198, %v3394
        %v3439 = vadd.f32 %v3199, %v3396
        %v3440 = vadd.f32 %v3200, %v3398
        %v3441 = vadd.f32 %v3201, %v3400
        %v3442 = vadd.f32 %v3202, %v3402
        %v3443 = vld [vmem:[#allocation2 + $0x280] sm:$0xff]
        %v3444 = vld [vmem:[#allocation2 + $0x288] sm:$0xff]
        %v3445 = vld [vmem:[#allocation2 + $0x290] sm:$0xff]
        %v3446 = vld [vmem:[#allocation2 + $0x298] sm:$0xff]
        %v3447 = vld [vmem:[#allocation2 + $0x2a0] sm:$0xff]
        %v3448 = vld [vmem:[#allocation2 + $0x2a8] sm:$0xff]
        %v3449 = vld [vmem:[#allocation2 + $0x2b0] sm:$0xff]
        %v3450 = vld [vmem:[#allocation2 + $0x2b8] sm:$0xff]
        %v3451 = vld [vmem:[#allocation2 + $0x2c0] sm:$0xff]
        %v3452 = vld [vmem:[#allocation2 + $0x2c8] sm:$0xff]
        %v3453 = vld [vmem:[#allocation2 + $0x2d0] sm:$0xff]
        %v3454 = vld [vmem:[#allocation2 + $0x2d8] sm:$0xff]
        %v3455 = vld [vmem:[#allocation2 + $0x2e0] sm:$0xff]
        %v3456 = vld [vmem:[#allocation2 + $0x2e8] sm:$0xff]
        %v3457 = vld [vmem:[#allocation2 + $0x2f0] sm:$0xff]
        %v3458 = vld [vmem:[#allocation2 + $0x2f8] sm:$0xff]
        %v3459 = vld [vmem:[#allocation2 + $0x300] sm:$0xff]
        %v3460 = vld [vmem:[#allocation2 + $0x308] sm:$0xff]
        %v3461 = vld [vmem:[#allocation2 + $0x310] sm:$0xff]
        %v3462 = vld [vmem:[#allocation2 + $0x318] sm:$0xff]
        %3483 = vrot.lane.b32.xlu0 %v3443, 124
        %v3484 = vpop.permute.xlu0 %3483
        %3485 = vrot.lane.b32.xlu0 %v3444, 124
        %v3486 = vpop.permute.xlu0 %3485
        %3487 = vrot.lane.b32.xlu0 %v3445, 124
        %v3488 = vpop.permute.xlu0 %3487
        %3489 = vrot.lane.b32.xlu0 %v3446, 124
        %v3490 = vpop.permute.xlu0 %3489
        %3491 = vrot.lane.b32.xlu0 %v3447, 124
        %v3492 = vpop.permute.xlu0 %3491
        %3493 = vrot.lane.b32.xlu0 %v3448, 124
        %v3494 = vpop.permute.xlu0 %3493
        %3495 = vrot.lane.b32.xlu0 %v3449, 124
        %v3496 = vpop.permute.xlu0 %3495
        %3497 = vrot.lane.b32.xlu0 %v3450, 124
        %v3498 = vpop.permute.xlu0 %3497
        %3499 = vrot.lane.b32.xlu0 %v3451, 124
        %v3500 = vpop.permute.xlu0 %3499
        %3501 = vrot.lane.b32.xlu0 %v3452, 124
        %v3502 = vpop.permute.xlu0 %3501
        %3503 = vrot.lane.b32.xlu0 %v3453, 124
        %v3504 = vpop.permute.xlu0 %3503
        %3505 = vrot.lane.b32.xlu0 %v3454, 124
        %v3506 = vpop.permute.xlu0 %3505
        %3507 = vrot.lane.b32.xlu0 %v3455, 124
        %v3508 = vpop.permute.xlu0 %3507
        %3509 = vrot.lane.b32.xlu0 %v3456, 124
        %v3510 = vpop.permute.xlu0 %3509
        %3511 = vrot.lane.b32.xlu0 %v3457, 124
        %v3512 = vpop.permute.xlu0 %3511
        %3513 = vrot.lane.b32.xlu0 %v3458, 124
        %v3514 = vpop.permute.xlu0 %3513
        %3515 = vrot.lane.b32.xlu0 %v3459, 124
        %v3516 = vpop.permute.xlu0 %3515
        %3517 = vrot.lane.b32.xlu0 %v3460, 124
        %v3518 = vpop.permute.xlu0 %3517
        %3519 = vrot.lane.b32.xlu0 %v3461, 124
        %v3520 = vpop.permute.xlu0 %3519
        %3521 = vrot.lane.b32.xlu0 %v3462, 124
        %v3522 = vpop.permute.xlu0 %3521
        %v3543 = vadd.f32 %v3303, %v3484
        %v3544 = vadd.f32 %v3304, %v3486
        %v3545 = vadd.f32 %v3305, %v3488
        %v3546 = vadd.f32 %v3306, %v3490
        %v3547 = vadd.f32 %v3307, %v3492
        %v3548 = vadd.f32 %v3308, %v3494
        %v3549 = vadd.f32 %v3309, %v3496
        %v3550 = vadd.f32 %v3310, %v3498
        %v3551 = vadd.f32 %v3311, %v3500
        %v3552 = vadd.f32 %v3312, %v3502
        %v3553 = vadd.f32 %v3313, %v3504
        %v3554 = vadd.f32 %v3314, %v3506
        %v3555 = vadd.f32 %v3315, %v3508
        %v3556 = vadd.f32 %v3316, %v3510
        %v3557 = vadd.f32 %v3317, %v3512
        %v3558 = vadd.f32 %v3318, %v3514
        %v3559 = vadd.f32 %v3319, %v3516
        %v3560 = vadd.f32 %v3320, %v3518
        %v3561 = vadd.f32 %v3321, %v3520
        %v3562 = vadd.f32 %v3322, %v3522
        %v3563 = vld [vmem:[#allocation2 + $0x320] sm:$0xff]
        %v3564 = vld [vmem:[#allocation2 + $0x328] sm:$0xff]
        %v3565 = vld [vmem:[#allocation2 + $0x330] sm:$0xff]
        %v3566 = vld [vmem:[#allocation2 + $0x338] sm:$0xff]
        %v3567 = vld [vmem:[#allocation2 + $0x340] sm:$0xff]
        %v3568 = vld [vmem:[#allocation2 + $0x348] sm:$0xff]
        %v3569 = vld [vmem:[#allocation2 + $0x350] sm:$0xff]
        %v3570 = vld [vmem:[#allocation2 + $0x358] sm:$0xff]
        %v3571 = vld [vmem:[#allocation2 + $0x360] sm:$0xff]
        %v3572 = vld [vmem:[#allocation2 + $0x368] sm:$0xff]
        %v3573 = vld [vmem:[#allocation2 + $0x370] sm:$0xff]
        %v3574 = vld [vmem:[#allocation2 + $0x378] sm:$0xff]
        %v3575 = vld [vmem:[#allocation2 + $0x380] sm:$0xff]
        %v3576 = vld [vmem:[#allocation2 + $0x388] sm:$0xff]
        %v3577 = vld [vmem:[#allocation2 + $0x390] sm:$0xff]
        %v3578 = vld [vmem:[#allocation2 + $0x398] sm:$0xff]
        %v3579 = vld [vmem:[#allocation2 + $0x3a0] sm:$0xff]
        %v3580 = vld [vmem:[#allocation2 + $0x3a8] sm:$0xff]
        %v3581 = vld [vmem:[#allocation2 + $0x3b0] sm:$0xff]
        %v3582 = vld [vmem:[#allocation2 + $0x3b8] sm:$0xff]
        %3603 = vrot.lane.b32.xlu0 %v3563, 124
        %v3604 = vpop.permute.xlu0 %3603
        %3605 = vrot.lane.b32.xlu0 %v3564, 124
        %v3606 = vpop.permute.xlu0 %3605
        %3607 = vrot.lane.b32.xlu0 %v3565, 124
        %v3608 = vpop.permute.xlu0 %3607
        %3609 = vrot.lane.b32.xlu0 %v3566, 124
        %v3610 = vpop.permute.xlu0 %3609
        %3611 = vrot.lane.b32.xlu0 %v3567, 124
        %v3612 = vpop.permute.xlu0 %3611
        %3613 = vrot.lane.b32.xlu0 %v3568, 124
        %v3614 = vpop.permute.xlu0 %3613
        %3615 = vrot.lane.b32.xlu0 %v3569, 124
        %v3616 = vpop.permute.xlu0 %3615
        %3617 = vrot.lane.b32.xlu0 %v3570, 124
        %v3618 = vpop.permute.xlu0 %3617
        %3619 = vrot.lane.b32.xlu0 %v3571, 124
        %v3620 = vpop.permute.xlu0 %3619
        %3621 = vrot.lane.b32.xlu0 %v3572, 124
        %v3622 = vpop.permute.xlu0 %3621
        %3623 = vrot.lane.b32.xlu0 %v3573, 124
        %v3624 = vpop.permute.xlu0 %3623
        %3625 = vrot.lane.b32.xlu0 %v3574, 124
        %v3626 = vpop.permute.xlu0 %3625
        %3627 = vrot.lane.b32.xlu0 %v3575, 124
        %v3628 = vpop.permute.xlu0 %3627
        %3629 = vrot.lane.b32.xlu0 %v3576, 124
        %v3630 = vpop.permute.xlu0 %3629
        %3631 = vrot.lane.b32.xlu0 %v3577, 124
        %v3632 = vpop.permute.xlu0 %3631
        %3633 = vrot.lane.b32.xlu0 %v3578, 124
        %v3634 = vpop.permute.xlu0 %3633
        %3635 = vrot.lane.b32.xlu0 %v3579, 124
        %v3636 = vpop.permute.xlu0 %3635
        %3637 = vrot.lane.b32.xlu0 %v3580, 124
        %v3638 = vpop.permute.xlu0 %3637
        %3639 = vrot.lane.b32.xlu0 %v3581, 124
        %v3640 = vpop.permute.xlu0 %3639
        %3641 = vrot.lane.b32.xlu0 %v3582, 124
        %v3642 = vpop.permute.xlu0 %3641
        %v3663 = vadd.f32 %v3423, %v3604
        %v3664 = vadd.f32 %v3424, %v3606
        %v3665 = vadd.f32 %v3425, %v3608
        %v3666 = vadd.f32 %v3426, %v3610
        %v3667 = vadd.f32 %v3427, %v3612
        %v3668 = vadd.f32 %v3428, %v3614
        %v3669 = vadd.f32 %v3429, %v3616
        %v3670 = vadd.f32 %v3430, %v3618
        %v3671 = vadd.f32 %v3431, %v3620
        %v3672 = vadd.f32 %v3432, %v3622
        %v3673 = vadd.f32 %v3433, %v3624
        %v3674 = vadd.f32 %v3434, %v3626
        %v3675 = vadd.f32 %v3435, %v3628
        %v3676 = vadd.f32 %v3436, %v3630
        %v3677 = vadd.f32 %v3437, %v3632
        %v3678 = vadd.f32 %v3438, %v3634
        %v3679 = vadd.f32 %v3439, %v3636
        %v3680 = vadd.f32 %v3440, %v3638
        %v3681 = vadd.f32 %v3441, %v3640
        %v3682 = vadd.f32 %v3442, %v3642
        %v3683 = vld [vmem:[#allocation2 + $0x3c0] sm:$0xff]
        %v3684 = vld [vmem:[#allocation2 + $0x3c8] sm:$0xff]
        %v3685 = vld [vmem:[#allocation2 + $0x3d0] sm:$0xff]
        %v3686 = vld [vmem:[#allocation2 + $0x3d8] sm:$0xff]
        %v3687 = vld [vmem:[#allocation2 + $0x3e0] sm:$0xff]
        %v3688 = vld [vmem:[#allocation2 + $0x3e8] sm:$0xff]
        %v3689 = vld [vmem:[#allocation2 + $0x3f0] sm:$0xff]
        %v3690 = vld [vmem:[#allocation2 + $0x3f8] sm:$0xff]
        %v3691 = vld [vmem:[#allocation2 + $0x400] sm:$0xff]
        %v3692 = vld [vmem:[#allocation2 + $0x408] sm:$0xff]
        %v3693 = vld [vmem:[#allocation2 + $0x410] sm:$0xff]
        %v3694 = vld [vmem:[#allocation2 + $0x418] sm:$0xff]
        %v3695 = vld [vmem:[#allocation2 + $0x420] sm:$0xff]
        %v3696 = vld [vmem:[#allocation2 + $0x428] sm:$0xff]
        %v3697 = vld [vmem:[#allocation2 + $0x430] sm:$0xff]
        %v3698 = vld [vmem:[#allocation2 + $0x438] sm:$0xff]
        %v3699 = vld [vmem:[#allocation2 + $0x440] sm:$0xff]
        %v3700 = vld [vmem:[#allocation2 + $0x448] sm:$0xff]
        %v3701 = vld [vmem:[#allocation2 + $0x450] sm:$0xff]
        %v3702 = vld [vmem:[#allocation2 + $0x458] sm:$0xff]
        %3723 = vrot.lane.b32.xlu0 %v3683, 122
        %v3724 = vpop.permute.xlu0 %3723
        %3725 = vrot.lane.b32.xlu0 %v3684, 122
        %v3726 = vpop.permute.xlu0 %3725
        %3727 = vrot.lane.b32.xlu0 %v3685, 122
        %v3728 = vpop.permute.xlu0 %3727
        %3729 = vrot.lane.b32.xlu0 %v3686, 122
        %v3730 = vpop.permute.xlu0 %3729
        %3731 = vrot.lane.b32.xlu0 %v3687, 122
        %v3732 = vpop.permute.xlu0 %3731
        %3733 = vrot.lane.b32.xlu0 %v3688, 122
        %v3734 = vpop.permute.xlu0 %3733
        %3735 = vrot.lane.b32.xlu0 %v3689, 122
        %v3736 = vpop.permute.xlu0 %3735
        %3737 = vrot.lane.b32.xlu0 %v3690, 122
        %v3738 = vpop.permute.xlu0 %3737
        %3739 = vrot.lane.b32.xlu0 %v3691, 122
        %v3740 = vpop.permute.xlu0 %3739
        %3741 = vrot.lane.b32.xlu0 %v3692, 122
        %v3742 = vpop.permute.xlu0 %3741
        %3743 = vrot.lane.b32.xlu0 %v3693, 122
        %v3744 = vpop.permute.xlu0 %3743
        %3745 = vrot.lane.b32.xlu0 %v3694, 122
        %v3746 = vpop.permute.xlu0 %3745
        %3747 = vrot.lane.b32.xlu0 %v3695, 122
        %v3748 = vpop.permute.xlu0 %3747
        %3749 = vrot.lane.b32.xlu0 %v3696, 122
        %v3750 = vpop.permute.xlu0 %3749
        %3751 = vrot.lane.b32.xlu0 %v3697, 122
        %v3752 = vpop.permute.xlu0 %3751
        %3753 = vrot.lane.b32.xlu0 %v3698, 122
        %v3754 = vpop.permute.xlu0 %3753
        %3755 = vrot.lane.b32.xlu0 %v3699, 122
        %v3756 = vpop.permute.xlu0 %3755
        %3757 = vrot.lane.b32.xlu0 %v3700, 122
        %v3758 = vpop.permute.xlu0 %3757
        %3759 = vrot.lane.b32.xlu0 %v3701, 122
        %v3760 = vpop.permute.xlu0 %3759
        %3761 = vrot.lane.b32.xlu0 %v3702, 122
        %v3762 = vpop.permute.xlu0 %3761
        %v3783 = vadd.f32 %v3543, %v3724
        %v3784 = vadd.f32 %v3544, %v3726
        %v3785 = vadd.f32 %v3545, %v3728
        %v3786 = vadd.f32 %v3546, %v3730
        %v3787 = vadd.f32 %v3547, %v3732
        %v3788 = vadd.f32 %v3548, %v3734
        %v3789 = vadd.f32 %v3549, %v3736
        %v3790 = vadd.f32 %v3550, %v3738
        %v3791 = vadd.f32 %v3551, %v3740
        %v3792 = vadd.f32 %v3552, %v3742
        %v3793 = vadd.f32 %v3553, %v3744
        %v3794 = vadd.f32 %v3554, %v3746
        %v3795 = vadd.f32 %v3555, %v3748
        %v3796 = vadd.f32 %v3556, %v3750
        %v3797 = vadd.f32 %v3557, %v3752
        %v3798 = vadd.f32 %v3558, %v3754
        %v3799 = vadd.f32 %v3559, %v3756
        %v3800 = vadd.f32 %v3560, %v3758
        %v3801 = vadd.f32 %v3561, %v3760
        %v3802 = vadd.f32 %v3562, %v3762
        %v3803 = vld [vmem:[#allocation2 + $0x460] sm:$0xff]
        %v3804 = vld [vmem:[#allocation2 + $0x468] sm:$0xff]
        %v3805 = vld [vmem:[#allocation2 + $0x470] sm:$0xff]
        %v3806 = vld [vmem:[#allocation2 + $0x478] sm:$0xff]
        %v3807 = vld [vmem:[#allocation2 + $0x480] sm:$0xff]
        %v3808 = vld [vmem:[#allocation2 + $0x488] sm:$0xff]
        %v3809 = vld [vmem:[#allocation2 + $0x490] sm:$0xff]
        %v3810 = vld [vmem:[#allocation2 + $0x498] sm:$0xff]
        %v3811 = vld [vmem:[#allocation2 + $0x4a0] sm:$0xff]
        %v3812 = vld [vmem:[#allocation2 + $0x4a8] sm:$0xff]
        %v3813 = vld [vmem:[#allocation2 + $0x4b0] sm:$0xff]
        %v3814 = vld [vmem:[#allocation2 + $0x4b8] sm:$0xff]
        %v3815 = vld [vmem:[#allocation2 + $0x4c0] sm:$0xff]
        %v3816 = vld [vmem:[#allocation2 + $0x4c8] sm:$0xff]
        %v3817 = vld [vmem:[#allocation2 + $0x4d0] sm:$0xff]
        %v3818 = vld [vmem:[#allocation2 + $0x4d8] sm:$0xff]
        %v3819 = vld [vmem:[#allocation2 + $0x4e0] sm:$0xff]
        %v3820 = vld [vmem:[#allocation2 + $0x4e8] sm:$0xff]
        %v3821 = vld [vmem:[#allocation2 + $0x4f0] sm:$0xff]
        %v3822 = vld [vmem:[#allocation2 + $0x4f8] sm:$0xff]
        %3843 = vrot.lane.b32.xlu0 %v3803, 122
        %v3844 = vpop.permute.xlu0 %3843
        %3845 = vrot.lane.b32.xlu0 %v3804, 122
        %v3846 = vpop.permute.xlu0 %3845
        %3847 = vrot.lane.b32.xlu0 %v3805, 122
        %v3848 = vpop.permute.xlu0 %3847
        %3849 = vrot.lane.b32.xlu0 %v3806, 122
        %v3850 = vpop.permute.xlu0 %3849
        %3851 = vrot.lane.b32.xlu0 %v3807, 122
        %v3852 = vpop.permute.xlu0 %3851
        %3853 = vrot.lane.b32.xlu0 %v3808, 122
        %v3854 = vpop.permute.xlu0 %3853
        %3855 = vrot.lane.b32.xlu0 %v3809, 122
        %v3856 = vpop.permute.xlu0 %3855
        %3857 = vrot.lane.b32.xlu0 %v3810, 122
        %v3858 = vpop.permute.xlu0 %3857
        %3859 = vrot.lane.b32.xlu0 %v3811, 122
        %v3860 = vpop.permute.xlu0 %3859
        %3861 = vrot.lane.b32.xlu0 %v3812, 122
        %v3862 = vpop.permute.xlu0 %3861
        %3863 = vrot.lane.b32.xlu0 %v3813, 122
        %v3864 = vpop.permute.xlu0 %3863
        %3865 = vrot.lane.b32.xlu0 %v3814, 122
        %v3866 = vpop.permute.xlu0 %3865
        %3867 = vrot.lane.b32.xlu0 %v3815, 122
        %v3868 = vpop.permute.xlu0 %3867
        %3869 = vrot.lane.b32.xlu0 %v3816, 122
        %v3870 = vpop.permute.xlu0 %3869
        %3871 = vrot.lane.b32.xlu0 %v3817, 122
        %v3872 = vpop.permute.xlu0 %3871
        %3873 = vrot.lane.b32.xlu0 %v3818, 122
        %v3874 = vpop.permute.xlu0 %3873
        %3875 = vrot.lane.b32.xlu0 %v3819, 122
        %v3876 = vpop.permute.xlu0 %3875
        %3877 = vrot.lane.b32.xlu0 %v3820, 122
        %v3878 = vpop.permute.xlu0 %3877
        %3879 = vrot.lane.b32.xlu0 %v3821, 122
        %v3880 = vpop.permute.xlu0 %3879
        %3881 = vrot.lane.b32.xlu0 %v3822, 122
        %v3882 = vpop.permute.xlu0 %3881
        %v3903 = vadd.f32 %v3663, %v3844
        %v3904 = vadd.f32 %v3664, %v3846
        %v3905 = vadd.f32 %v3665, %v3848
        %v3906 = vadd.f32 %v3666, %v3850
        %v3907 = vadd.f32 %v3667, %v3852
        %v3908 = vadd.f32 %v3668, %v3854
        %v3909 = vadd.f32 %v3669, %v3856
        %v3910 = vadd.f32 %v3670, %v3858
        %v3911 = vadd.f32 %v3671, %v3860
        %v3912 = vadd.f32 %v3672, %v3862
        %v3913 = vadd.f32 %v3673, %v3864
        %v3914 = vadd.f32 %v3674, %v3866
        %v3915 = vadd.f32 %v3675, %v3868
        %v3916 = vadd.f32 %v3676, %v3870
        %v3917 = vadd.f32 %v3677, %v3872
        %v3918 = vadd.f32 %v3678, %v3874
        %v3919 = vadd.f32 %v3679, %v3876
        %v3920 = vadd.f32 %v3680, %v3878
        %v3921 = vadd.f32 %v3681, %v3880
        %v3922 = vadd.f32 %v3682, %v3882
        %v3923 = vld [vmem:[#allocation2 + $0x500] sm:$0xff]
        %v3924 = vld [vmem:[#allocation2 + $0x508] sm:$0xff]
        %v3925 = vld [vmem:[#allocation2 + $0x510] sm:$0xff]
        %v3926 = vld [vmem:[#allocation2 + $0x518] sm:$0xff]
        %v3927 = vld [vmem:[#allocation2 + $0x520] sm:$0xff]
        %v3928 = vld [vmem:[#allocation2 + $0x528] sm:$0xff]
        %v3929 = vld [vmem:[#allocation2 + $0x530] sm:$0xff]
        %v3930 = vld [vmem:[#allocation2 + $0x538] sm:$0xff]
        %v3931 = vld [vmem:[#allocation2 + $0x540] sm:$0xff]
        %v3932 = vld [vmem:[#allocation2 + $0x548] sm:$0xff]
        %v3933 = vld [vmem:[#allocation2 + $0x550] sm:$0xff]
        %v3934 = vld [vmem:[#allocation2 + $0x558] sm:$0xff]
        %v3935 = vld [vmem:[#allocation2 + $0x560] sm:$0xff]
        %v3936 = vld [vmem:[#allocation2 + $0x568] sm:$0xff]
        %v3937 = vld [vmem:[#allocation2 + $0x570] sm:$0xff]
        %v3938 = vld [vmem:[#allocation2 + $0x578] sm:$0xff]
        %v3939 = vld [vmem:[#allocation2 + $0x580] sm:$0xff]
        %v3940 = vld [vmem:[#allocation2 + $0x588] sm:$0xff]
        %v3941 = vld [vmem:[#allocation2 + $0x590] sm:$0xff]
        %v3942 = vld [vmem:[#allocation2 + $0x598] sm:$0xff]
        %3963 = vrot.lane.b32.xlu0 %v3923, 120
        %v3964 = vpop.permute.xlu0 %3963
        %3965 = vrot.lane.b32.xlu0 %v3924, 120
        %v3966 = vpop.permute.xlu0 %3965
        %3967 = vrot.lane.b32.xlu0 %v3925, 120
        %v3968 = vpop.permute.xlu0 %3967
        %3969 = vrot.lane.b32.xlu0 %v3926, 120
        %v3970 = vpop.permute.xlu0 %3969
        %3971 = vrot.lane.b32.xlu0 %v3927, 120
        %v3972 = vpop.permute.xlu0 %3971
        %3973 = vrot.lane.b32.xlu0 %v3928, 120
        %v3974 = vpop.permute.xlu0 %3973
        %3975 = vrot.lane.b32.xlu0 %v3929, 120
        %v3976 = vpop.permute.xlu0 %3975
        %3977 = vrot.lane.b32.xlu0 %v3930, 120
        %v3978 = vpop.permute.xlu0 %3977
        %3979 = vrot.lane.b32.xlu0 %v3931, 120
        %v3980 = vpop.permute.xlu0 %3979
        %3981 = vrot.lane.b32.xlu0 %v3932, 120
        %v3982 = vpop.permute.xlu0 %3981
        %3983 = vrot.lane.b32.xlu0 %v3933, 120
        %v3984 = vpop.permute.xlu0 %3983
        %3985 = vrot.lane.b32.xlu0 %v3934, 120
        %v3986 = vpop.permute.xlu0 %3985
        %3987 = vrot.lane.b32.xlu0 %v3935, 120
        %v3988 = vpop.permute.xlu0 %3987
        %3989 = vrot.lane.b32.xlu0 %v3936, 120
        %v3990 = vpop.permute.xlu0 %3989
        %3991 = vrot.lane.b32.xlu0 %v3937, 120
        %v3992 = vpop.permute.xlu0 %3991
        %3993 = vrot.lane.b32.xlu0 %v3938, 120
        %v3994 = vpop.permute.xlu0 %3993
        %3995 = vrot.lane.b32.xlu0 %v3939, 120
        %v3996 = vpop.permute.xlu0 %3995
        %3997 = vrot.lane.b32.xlu0 %v3940, 120
        %v3998 = vpop.permute.xlu0 %3997
        %3999 = vrot.lane.b32.xlu0 %v3941, 120
        %v4000 = vpop.permute.xlu0 %3999
        %4001 = vrot.lane.b32.xlu0 %v3942, 120
        %v4002 = vpop.permute.xlu0 %4001
        %v4023 = vadd.f32 %v3783, %v3964
        %v4024 = vadd.f32 %v3784, %v3966
        %v4025 = vadd.f32 %v3785, %v3968
        %v4026 = vadd.f32 %v3786, %v3970
        %v4027 = vadd.f32 %v3787, %v3972
        %v4028 = vadd.f32 %v3788, %v3974
        %v4029 = vadd.f32 %v3789, %v3976
        %v4030 = vadd.f32 %v3790, %v3978
        %v4031 = vadd.f32 %v3791, %v3980
        %v4032 = vadd.f32 %v3792, %v3982
        %v4033 = vadd.f32 %v3793, %v3984
        %v4034 = vadd.f32 %v3794, %v3986
        %v4035 = vadd.f32 %v3795, %v3988
        %v4036 = vadd.f32 %v3796, %v3990
        %v4037 = vadd.f32 %v3797, %v3992
        %v4038 = vadd.f32 %v3798, %v3994
        %v4039 = vadd.f32 %v3799, %v3996
        %v4040 = vadd.f32 %v3800, %v3998
        %v4041 = vadd.f32 %v3801, %v4000
        %v4042 = vadd.f32 %v3802, %v4002
        %v4043 = vld [vmem:[#allocation2 + $0x5a0] sm:$0xff]
        %v4044 = vld [vmem:[#allocation2 + $0x5a8] sm:$0xff]
        %v4045 = vld [vmem:[#allocation2 + $0x5b0] sm:$0xff]
        %v4046 = vld [vmem:[#allocation2 + $0x5b8] sm:$0xff]
        %v4047 = vld [vmem:[#allocation2 + $0x5c0] sm:$0xff]
        %v4048 = vld [vmem:[#allocation2 + $0x5c8] sm:$0xff]
        %v4049 = vld [vmem:[#allocation2 + $0x5d0] sm:$0xff]
        %v4050 = vld [vmem:[#allocation2 + $0x5d8] sm:$0xff]
        %v4051 = vld [vmem:[#allocation2 + $0x5e0] sm:$0xff]
        %v4052 = vld [vmem:[#allocation2 + $0x5e8] sm:$0xff]
        %v4053 = vld [vmem:[#allocation2 + $0x5f0] sm:$0xff]
        %v4054 = vld [vmem:[#allocation2 + $0x5f8] sm:$0xff]
        %v4055 = vld [vmem:[#allocation2 + $0x600] sm:$0xff]
        %v4056 = vld [vmem:[#allocation2 + $0x608] sm:$0xff]
        %v4057 = vld [vmem:[#allocation2 + $0x610] sm:$0xff]
        %v4058 = vld [vmem:[#allocation2 + $0x618] sm:$0xff]
        %v4059 = vld [vmem:[#allocation2 + $0x620] sm:$0xff]
        %v4060 = vld [vmem:[#allocation2 + $0x628] sm:$0xff]
        %v4061 = vld [vmem:[#allocation2 + $0x630] sm:$0xff]
        %v4062 = vld [vmem:[#allocation2 + $0x638] sm:$0xff]
        %4083 = vrot.lane.b32.xlu0 %v4043, 120
        %v4084 = vpop.permute.xlu0 %4083
        %4085 = vrot.lane.b32.xlu0 %v4044, 120
        %v4086 = vpop.permute.xlu0 %4085
        %4087 = vrot.lane.b32.xlu0 %v4045, 120
        %v4088 = vpop.permute.xlu0 %4087
        %4089 = vrot.lane.b32.xlu0 %v4046, 120
        %v4090 = vpop.permute.xlu0 %4089
        %4091 = vrot.lane.b32.xlu0 %v4047, 120
        %v4092 = vpop.permute.xlu0 %4091
        %4093 = vrot.lane.b32.xlu0 %v4048, 120
        %v4094 = vpop.permute.xlu0 %4093
        %4095 = vrot.lane.b32.xlu0 %v4049, 120
        %v4096 = vpop.permute.xlu0 %4095
        %4097 = vrot.lane.b32.xlu0 %v4050, 120
        %v4098 = vpop.permute.xlu0 %4097
        %4099 = vrot.lane.b32.xlu0 %v4051, 120
        %v4100 = vpop.permute.xlu0 %4099
        %4101 = vrot.lane.b32.xlu0 %v4052, 120
        %v4102 = vpop.permute.xlu0 %4101
        %4103 = vrot.lane.b32.xlu0 %v4053, 120
        %v4104 = vpop.permute.xlu0 %4103
        %4105 = vrot.lane.b32.xlu0 %v4054, 120
        %v4106 = vpop.permute.xlu0 %4105
        %4107 = vrot.lane.b32.xlu0 %v4055, 120
        %v4108 = vpop.permute.xlu0 %4107
        %4109 = vrot.lane.b32.xlu0 %v4056, 120
        %v4110 = vpop.permute.xlu0 %4109
        %4111 = vrot.lane.b32.xlu0 %v4057, 120
        %v4112 = vpop.permute.xlu0 %4111
        %4113 = vrot.lane.b32.xlu0 %v4058, 120
        %v4114 = vpop.permute.xlu0 %4113
        %4115 = vrot.lane.b32.xlu0 %v4059, 120
        %v4116 = vpop.permute.xlu0 %4115
        %4117 = vrot.lane.b32.xlu0 %v4060, 120
        %v4118 = vpop.permute.xlu0 %4117
        %4119 = vrot.lane.b32.xlu0 %v4061, 120
        %v4120 = vpop.permute.xlu0 %4119
        %4121 = vrot.lane.b32.xlu0 %v4062, 120
        %v4122 = vpop.permute.xlu0 %4121
        %v4143 = vadd.f32 %v3903, %v4084
        %v4144 = vadd.f32 %v3904, %v4086
        %v4145 = vadd.f32 %v3905, %v4088
        %v4146 = vadd.f32 %v3906, %v4090
        %v4147 = vadd.f32 %v3907, %v4092
        %v4148 = vadd.f32 %v3908, %v4094
        %v4149 = vadd.f32 %v3909, %v4096
        %v4150 = vadd.f32 %v3910, %v4098
        %v4151 = vadd.f32 %v3911, %v4100
        %v4152 = vadd.f32 %v3912, %v4102
        %v4153 = vadd.f32 %v3913, %v4104
        %v4154 = vadd.f32 %v3914, %v4106
        %v4155 = vadd.f32 %v3915, %v4108
        %v4156 = vadd.f32 %v3916, %v4110
        %v4157 = vadd.f32 %v3917, %v4112
        %v4158 = vadd.f32 %v3918, %v4114
        %v4159 = vadd.f32 %v3919, %v4116
        %v4160 = vadd.f32 %v3920, %v4118
        %v4161 = vadd.f32 %v3921, %v4120
        %v4162 = vadd.f32 %v3922, %v4122
        %v4163 = vld [vmem:[#allocation2 + $0x640] sm:$0xff]
        %v4164 = vld [vmem:[#allocation2 + $0x648] sm:$0xff]
        %v4165 = vld [vmem:[#allocation2 + $0x650] sm:$0xff]
        %v4166 = vld [vmem:[#allocation2 + $0x658] sm:$0xff]
        %v4167 = vld [vmem:[#allocation2 + $0x660] sm:$0xff]
        %v4168 = vld [vmem:[#allocation2 + $0x668] sm:$0xff]
        %v4169 = vld [vmem:[#allocation2 + $0x670] sm:$0xff]
        %v4170 = vld [vmem:[#allocation2 + $0x678] sm:$0xff]
        %v4171 = vld [vmem:[#allocation2 + $0x680] sm:$0xff]
        %v4172 = vld [vmem:[#allocation2 + $0x688] sm:$0xff]
        %v4173 = vld [vmem:[#allocation2 + $0x690] sm:$0xff]
        %v4174 = vld [vmem:[#allocation2 + $0x698] sm:$0xff]
        %v4175 = vld [vmem:[#allocation2 + $0x6a0] sm:$0xff]
        %v4176 = vld [vmem:[#allocation2 + $0x6a8] sm:$0xff]
        %v4177 = vld [vmem:[#allocation2 + $0x6b0] sm:$0xff]
        %v4178 = vld [vmem:[#allocation2 + $0x6b8] sm:$0xff]
        %v4179 = vld [vmem:[#allocation2 + $0x6c0] sm:$0xff]
        %v4180 = vld [vmem:[#allocation2 + $0x6c8] sm:$0xff]
        %v4181 = vld [vmem:[#allocation2 + $0x6d0] sm:$0xff]
        %v4182 = vld [vmem:[#allocation2 + $0x6d8] sm:$0xff]
        %4203 = vrot.lane.b32.xlu0 %v4163, 118
        %v4204 = vpop.permute.xlu0 %4203
        %4205 = vrot.lane.b32.xlu0 %v4164, 118
        %v4206 = vpop.permute.xlu0 %4205
        %4207 = vrot.lane.b32.xlu0 %v4165, 118
        %v4208 = vpop.permute.xlu0 %4207
        %4209 = vrot.lane.b32.xlu0 %v4166, 118
        %v4210 = vpop.permute.xlu0 %4209
        %4211 = vrot.lane.b32.xlu0 %v4167, 118
        %v4212 = vpop.permute.xlu0 %4211
        %4213 = vrot.lane.b32.xlu0 %v4168, 118
        %v4214 = vpop.permute.xlu0 %4213
        %4215 = vrot.lane.b32.xlu0 %v4169, 118
        %v4216 = vpop.permute.xlu0 %4215
        %4217 = vrot.lane.b32.xlu0 %v4170, 118
        %v4218 = vpop.permute.xlu0 %4217
        %4219 = vrot.lane.b32.xlu0 %v4171, 118
        %v4220 = vpop.permute.xlu0 %4219
        %4221 = vrot.lane.b32.xlu0 %v4172, 118
        %v4222 = vpop.permute.xlu0 %4221
        %4223 = vrot.lane.b32.xlu0 %v4173, 118
        %v4224 = vpop.permute.xlu0 %4223
        %4225 = vrot.lane.b32.xlu0 %v4174, 118
        %v4226 = vpop.permute.xlu0 %4225
        %4227 = vrot.lane.b32.xlu0 %v4175, 118
        %v4228 = vpop.permute.xlu0 %4227
        %4229 = vrot.lane.b32.xlu0 %v4176, 118
        %v4230 = vpop.permute.xlu0 %4229
        %4231 = vrot.lane.b32.xlu0 %v4177, 118
        %v4232 = vpop.permute.xlu0 %4231
        %4233 = vrot.lane.b32.xlu0 %v4178, 118
        %v4234 = vpop.permute.xlu0 %4233
        %4235 = vrot.lane.b32.xlu0 %v4179, 118
        %v4236 = vpop.permute.xlu0 %4235
        %4237 = vrot.lane.b32.xlu0 %v4180, 118
        %v4238 = vpop.permute.xlu0 %4237
        %4239 = vrot.lane.b32.xlu0 %v4181, 118
        %v4240 = vpop.permute.xlu0 %4239
        %4241 = vrot.lane.b32.xlu0 %v4182, 118
        %v4242 = vpop.permute.xlu0 %4241
        %v4263 = vadd.f32 %v4023, %v4204
        %v4264 = vadd.f32 %v4024, %v4206
        %v4265 = vadd.f32 %v4025, %v4208
        %v4266 = vadd.f32 %v4026, %v4210
        %v4267 = vadd.f32 %v4027, %v4212
        %v4268 = vadd.f32 %v4028, %v4214
        %v4269 = vadd.f32 %v4029, %v4216
        %v4270 = vadd.f32 %v4030, %v4218
        %v4271 = vadd.f32 %v4031, %v4220
        %v4272 = vadd.f32 %v4032, %v4222
        %v4273 = vadd.f32 %v4033, %v4224
        %v4274 = vadd.f32 %v4034, %v4226
        %v4275 = vadd.f32 %v4035, %v4228
        %v4276 = vadd.f32 %v4036, %v4230
        %v4277 = vadd.f32 %v4037, %v4232
        %v4278 = vadd.f32 %v4038, %v4234
        %v4279 = vadd.f32 %v4039, %v4236
        %v4280 = vadd.f32 %v4040, %v4238
        %v4281 = vadd.f32 %v4041, %v4240
        %v4282 = vadd.f32 %v4042, %v4242
        %v4283 = vld [vmem:[#allocation2 + $0x6e0] sm:$0xff]
        %v4284 = vld [vmem:[#allocation2 + $0x6e8] sm:$0xff]
        %v4285 = vld [vmem:[#allocation2 + $0x6f0] sm:$0xff]
        %v4286 = vld [vmem:[#allocation2 + $0x6f8] sm:$0xff]
        %v4287 = vld [vmem:[#allocation2 + $0x700] sm:$0xff]
        %v4288 = vld [vmem:[#allocation2 + $0x708] sm:$0xff]
        %v4289 = vld [vmem:[#allocation2 + $0x710] sm:$0xff]
        %v4290 = vld [vmem:[#allocation2 + $0x718] sm:$0xff]
        %v4291 = vld [vmem:[#allocation2 + $0x720] sm:$0xff]
        %v4292 = vld [vmem:[#allocation2 + $0x728] sm:$0xff]
        %v4293 = vld [vmem:[#allocation2 + $0x730] sm:$0xff]
        %v4294 = vld [vmem:[#allocation2 + $0x738] sm:$0xff]
        %v4295 = vld [vmem:[#allocation2 + $0x740] sm:$0xff]
        %v4296 = vld [vmem:[#allocation2 + $0x748] sm:$0xff]
        %v4297 = vld [vmem:[#allocation2 + $0x750] sm:$0xff]
        %v4298 = vld [vmem:[#allocation2 + $0x758] sm:$0xff]
        %v4299 = vld [vmem:[#allocation2 + $0x760] sm:$0xff]
        %v4300 = vld [vmem:[#allocation2 + $0x768] sm:$0xff]
        %v4301 = vld [vmem:[#allocation2 + $0x770] sm:$0xff]
        %v4302 = vld [vmem:[#allocation2 + $0x778] sm:$0xff]
        %4323 = vrot.lane.b32.xlu0 %v4283, 118
        %v4324 = vpop.permute.xlu0 %4323
        %4325 = vrot.lane.b32.xlu0 %v4284, 118
        %v4326 = vpop.permute.xlu0 %4325
        %4327 = vrot.lane.b32.xlu0 %v4285, 118
        %v4328 = vpop.permute.xlu0 %4327
        %4329 = vrot.lane.b32.xlu0 %v4286, 118
        %v4330 = vpop.permute.xlu0 %4329
        %4331 = vrot.lane.b32.xlu0 %v4287, 118
        %v4332 = vpop.permute.xlu0 %4331
        %4333 = vrot.lane.b32.xlu0 %v4288, 118
        %v4334 = vpop.permute.xlu0 %4333
        %4335 = vrot.lane.b32.xlu0 %v4289, 118
        %v4336 = vpop.permute.xlu0 %4335
        %4337 = vrot.lane.b32.xlu0 %v4290, 118
        %v4338 = vpop.permute.xlu0 %4337
        %4339 = vrot.lane.b32.xlu0 %v4291, 118
        %v4340 = vpop.permute.xlu0 %4339
        %4341 = vrot.lane.b32.xlu0 %v4292, 118
        %v4342 = vpop.permute.xlu0 %4341
        %4343 = vrot.lane.b32.xlu0 %v4293, 118
        %v4344 = vpop.permute.xlu0 %4343
        %4345 = vrot.lane.b32.xlu0 %v4294, 118
        %v4346 = vpop.permute.xlu0 %4345
        %4347 = vrot.lane.b32.xlu0 %v4295, 118
        %v4348 = vpop.permute.xlu0 %4347
        %4349 = vrot.lane.b32.xlu0 %v4296, 118
        %v4350 = vpop.permute.xlu0 %4349
        %4351 = vrot.lane.b32.xlu0 %v4297, 118
        %v4352 = vpop.permute.xlu0 %4351
        %4353 = vrot.lane.b32.xlu0 %v4298, 118
        %v4354 = vpop.permute.xlu0 %4353
        %4355 = vrot.lane.b32.xlu0 %v4299, 118
        %v4356 = vpop.permute.xlu0 %4355
        %4357 = vrot.lane.b32.xlu0 %v4300, 118
        %v4358 = vpop.permute.xlu0 %4357
        %4359 = vrot.lane.b32.xlu0 %v4301, 118
        %v4360 = vpop.permute.xlu0 %4359
        %4361 = vrot.lane.b32.xlu0 %v4302, 118
        %v4362 = vpop.permute.xlu0 %4361
        %v4383 = vadd.f32 %v4143, %v4324
        %v4384 = vadd.f32 %v4144, %v4326
        %v4385 = vadd.f32 %v4145, %v4328
        %v4386 = vadd.f32 %v4146, %v4330
        %v4387 = vadd.f32 %v4147, %v4332
        %v4388 = vadd.f32 %v4148, %v4334
        %v4389 = vadd.f32 %v4149, %v4336
        %v4390 = vadd.f32 %v4150, %v4338
        %v4391 = vadd.f32 %v4151, %v4340
        %v4392 = vadd.f32 %v4152, %v4342
        %v4393 = vadd.f32 %v4153, %v4344
        %v4394 = vadd.f32 %v4154, %v4346
        %v4395 = vadd.f32 %v4155, %v4348
        %v4396 = vadd.f32 %v4156, %v4350
        %v4397 = vadd.f32 %v4157, %v4352
        %v4398 = vadd.f32 %v4158, %v4354
        %v4399 = vadd.f32 %v4159, %v4356
        %v4400 = vadd.f32 %v4160, %v4358
        %v4401 = vadd.f32 %v4161, %v4360
        %v4402 = vadd.f32 %v4162, %v4362
        %v4403 = vld [vmem:[#allocation2 + $0x780] sm:$0xff]
        %v4404 = vld [vmem:[#allocation2 + $0x788] sm:$0xff]
        %v4405 = vld [vmem:[#allocation2 + $0x790] sm:$0xff]
        %v4406 = vld [vmem:[#allocation2 + $0x798] sm:$0xff]
        %v4407 = vld [vmem:[#allocation2 + $0x7a0] sm:$0xff]
        %v4408 = vld [vmem:[#allocation2 + $0x7a8] sm:$0xff]
        %v4409 = vld [vmem:[#allocation2 + $0x7b0] sm:$0xff]
        %v4410 = vld [vmem:[#allocation2 + $0x7b8] sm:$0xff]
        %v4411 = vld [vmem:[#allocation2 + $0x7c0] sm:$0xff]
        %v4412 = vld [vmem:[#allocation2 + $0x7c8] sm:$0xff]
        %v4413 = vld [vmem:[#allocation2 + $0x7d0] sm:$0xff]
        %v4414 = vld [vmem:[#allocation2 + $0x7d8] sm:$0xff]
        %v4415 = vld [vmem:[#allocation2 + $0x7e0] sm:$0xff]
        %v4416 = vld [vmem:[#allocation2 + $0x7e8] sm:$0xff]
        %v4417 = vld [vmem:[#allocation2 + $0x7f0] sm:$0xff]
        %v4418 = vld [vmem:[#allocation2 + $0x7f8] sm:$0xff]
        %v4419 = vld [vmem:[#allocation2 + $0x800] sm:$0xff]
        %v4420 = vld [vmem:[#allocation2 + $0x808] sm:$0xff]
        %v4421 = vld [vmem:[#allocation2 + $0x810] sm:$0xff]
        %v4422 = vld [vmem:[#allocation2 + $0x818] sm:$0xff]
        %4443 = vrot.lane.b32.xlu0 %v4403, 116
        %v4444 = vpop.permute.xlu0 %4443
        %4445 = vrot.lane.b32.xlu0 %v4404, 116
        %v4446 = vpop.permute.xlu0 %4445
        %4447 = vrot.lane.b32.xlu0 %v4405, 116
        %v4448 = vpop.permute.xlu0 %4447
        %4449 = vrot.lane.b32.xlu0 %v4406, 116
        %v4450 = vpop.permute.xlu0 %4449
        %4451 = vrot.lane.b32.xlu0 %v4407, 116
        %v4452 = vpop.permute.xlu0 %4451
        %4453 = vrot.lane.b32.xlu0 %v4408, 116
        %v4454 = vpop.permute.xlu0 %4453
        %4455 = vrot.lane.b32.xlu0 %v4409, 116
        %v4456 = vpop.permute.xlu0 %4455
        %4457 = vrot.lane.b32.xlu0 %v4410, 116
        %v4458 = vpop.permute.xlu0 %4457
        %4459 = vrot.lane.b32.xlu0 %v4411, 116
        %v4460 = vpop.permute.xlu0 %4459
        %4461 = vrot.lane.b32.xlu0 %v4412, 116
        %v4462 = vpop.permute.xlu0 %4461
        %4463 = vrot.lane.b32.xlu0 %v4413, 116
        %v4464 = vpop.permute.xlu0 %4463
        %4465 = vrot.lane.b32.xlu0 %v4414, 116
        %v4466 = vpop.permute.xlu0 %4465
        %4467 = vrot.lane.b32.xlu0 %v4415, 116
        %v4468 = vpop.permute.xlu0 %4467
        %4469 = vrot.lane.b32.xlu0 %v4416, 116
        %v4470 = vpop.permute.xlu0 %4469
        %4471 = vrot.lane.b32.xlu0 %v4417, 116
        %v4472 = vpop.permute.xlu0 %4471
        %4473 = vrot.lane.b32.xlu0 %v4418, 116
        %v4474 = vpop.permute.xlu0 %4473
        %4475 = vrot.lane.b32.xlu0 %v4419, 116
        %v4476 = vpop.permute.xlu0 %4475
        %4477 = vrot.lane.b32.xlu0 %v4420, 116
        %v4478 = vpop.permute.xlu0 %4477
        %4479 = vrot.lane.b32.xlu0 %v4421, 116
        %v4480 = vpop.permute.xlu0 %4479
        %4481 = vrot.lane.b32.xlu0 %v4422, 116
        %v4482 = vpop.permute.xlu0 %4481
        %v4503 = vadd.f32 %v4263, %v4444
        %v4504 = vadd.f32 %v4264, %v4446
        %v4505 = vadd.f32 %v4265, %v4448
        %v4506 = vadd.f32 %v4266, %v4450
        %v4507 = vadd.f32 %v4267, %v4452
        %v4508 = vadd.f32 %v4268, %v4454
        %v4509 = vadd.f32 %v4269, %v4456
        %v4510 = vadd.f32 %v4270, %v4458
        %v4511 = vadd.f32 %v4271, %v4460
        %v4512 = vadd.f32 %v4272, %v4462
        %v4513 = vadd.f32 %v4273, %v4464
        %v4514 = vadd.f32 %v4274, %v4466
        %v4515 = vadd.f32 %v4275, %v4468
        %v4516 = vadd.f32 %v4276, %v4470
        %v4517 = vadd.f32 %v4277, %v4472
        %v4518 = vadd.f32 %v4278, %v4474
        %v4519 = vadd.f32 %v4279, %v4476
        %v4520 = vadd.f32 %v4280, %v4478
        %v4521 = vadd.f32 %v4281, %v4480
        %v4522 = vadd.f32 %v4282, %v4482
        %4543 = vrot.lane.b32.xlu0 %v4383, 127
        %v4544 = vpop.permute.xlu0 %4543
        %4545 = vrot.lane.b32.xlu0 %v4384, 127
        %v4546 = vpop.permute.xlu0 %4545
        %4547 = vrot.lane.b32.xlu0 %v4385, 127
        %v4548 = vpop.permute.xlu0 %4547
        %4549 = vrot.lane.b32.xlu0 %v4386, 127
        %v4550 = vpop.permute.xlu0 %4549
        %4551 = vrot.lane.b32.xlu0 %v4387, 127
        %v4552 = vpop.permute.xlu0 %4551
        %4553 = vrot.lane.b32.xlu0 %v4388, 127
        %v4554 = vpop.permute.xlu0 %4553
        %4555 = vrot.lane.b32.xlu0 %v4389, 127
        %v4556 = vpop.permute.xlu0 %4555
        %4557 = vrot.lane.b32.xlu0 %v4390, 127
        %v4558 = vpop.permute.xlu0 %4557
        %4559 = vrot.lane.b32.xlu0 %v4391, 127
        %v4560 = vpop.permute.xlu0 %4559
        %4561 = vrot.lane.b32.xlu0 %v4392, 127
        %v4562 = vpop.permute.xlu0 %4561
        %4563 = vrot.lane.b32.xlu0 %v4393, 127
        %v4564 = vpop.permute.xlu0 %4563
        %4565 = vrot.lane.b32.xlu0 %v4394, 127
        %v4566 = vpop.permute.xlu0 %4565
        %4567 = vrot.lane.b32.xlu0 %v4395, 127
        %v4568 = vpop.permute.xlu0 %4567
        %4569 = vrot.lane.b32.xlu0 %v4396, 127
        %v4570 = vpop.permute.xlu0 %4569
        %4571 = vrot.lane.b32.xlu0 %v4397, 127
        %v4572 = vpop.permute.xlu0 %4571
        %4573 = vrot.lane.b32.xlu0 %v4398, 127
        %v4574 = vpop.permute.xlu0 %4573
        %4575 = vrot.lane.b32.xlu0 %v4399, 127
        %v4576 = vpop.permute.xlu0 %4575
        %4577 = vrot.lane.b32.xlu0 %v4400, 127
        %v4578 = vpop.permute.xlu0 %4577
        %4579 = vrot.lane.b32.xlu0 %v4401, 127
        %v4580 = vpop.permute.xlu0 %4579
        %4581 = vrot.lane.b32.xlu0 %v4402, 127
        %v4582 = vpop.permute.xlu0 %4581
        %v4603 = vadd.f32 %v4503, %v4544
        %v4604 = vadd.f32 %v4504, %v4546
        %v4605 = vadd.f32 %v4505, %v4548
        %v4606 = vadd.f32 %v4506, %v4550
        %v4607 = vadd.f32 %v4507, %v4552
        %v4608 = vadd.f32 %v4508, %v4554
        %v4609 = vadd.f32 %v4509, %v4556
        %v4610 = vadd.f32 %v4510, %v4558
        %v4611 = vadd.f32 %v4511, %v4560
        %v4612 = vadd.f32 %v4512, %v4562
        %v4613 = vadd.f32 %v4513, %v4564
        %v4614 = vadd.f32 %v4514, %v4566
        %v4615 = vadd.f32 %v4515, %v4568
        %v4616 = vadd.f32 %v4516, %v4570
        %v4617 = vadd.f32 %v4517, %v4572
        %v4618 = vadd.f32 %v4518, %v4574
        %v4619 = vadd.f32 %v4519, %v4576
        %v4620 = vadd.f32 %v4520, %v4578
        %v4621 = vadd.f32 %v4521, %v4580
        %v4622 = vadd.f32 %v4522, %v4582
        %v4623 = vxor.u32 %v4603, 2147483648
        %v4624 = vxor.u32 %v4604, 2147483648
        %v4625 = vxor.u32 %v4605, 2147483648
        %v4626 = vxor.u32 %v4606, 2147483648
        %v4627 = vxor.u32 %v4607, 2147483648
        %v4628 = vxor.u32 %v4608, 2147483648
        %v4629 = vxor.u32 %v4609, 2147483648
        %v4630 = vxor.u32 %v4610, 2147483648
        %v4631 = vxor.u32 %v4611, 2147483648
        %v4632 = vxor.u32 %v4612, 2147483648
        %v4633 = vxor.u32 %v4613, 2147483648
        %v4634 = vxor.u32 %v4614, 2147483648
        %v4635 = vxor.u32 %v4615, 2147483648
        %v4636 = vxor.u32 %v4616, 2147483648
        %v4637 = vxor.u32 %v4617, 2147483648
        %v4638 = vxor.u32 %v4618, 2147483648
        %v4639 = vxor.u32 %v4619, 2147483648
        %v4640 = vxor.u32 %v4620, 2147483648
        %v4641 = vxor.u32 %v4621, 2147483648
        %v4642 = vxor.u32 %v4622, 2147483648
        %v4643 = vmul.f32 %v4623, 1.442695
        %v4644 = vpow.pop %v4643
        %v4645 = vmul.f32 %v4624, 1.442695
        %v4646 = vpow.pop %v4645
        %v4647 = vmul.f32 %v4625, 1.442695
        %v4648 = vpow.pop %v4647
        %v4649 = vmul.f32 %v4626, 1.442695
        %v4650 = vpow.pop %v4649
        %v4651 = vmul.f32 %v4627, 1.442695
        %v4652 = vpow.pop %v4651
        %v4653 = vmul.f32 %v4628, 1.442695
        %v4654 = vpow.pop %v4653
        %v4655 = vmul.f32 %v4629, 1.442695
        %v4656 = vpow.pop %v4655
        %v4657 = vmul.f32 %v4630, 1.442695
        %v4658 = vpow.pop %v4657
        %v4659 = vmul.f32 %v4631, 1.442695
        %v4660 = vpow.pop %v4659
        %v4661 = vmul.f32 %v4632, 1.442695
        %v4662 = vpow.pop %v4661
        %v4663 = vmul.f32 %v4633, 1.442695
        %v4664 = vpow.pop %v4663
        %v4665 = vmul.f32 %v4634, 1.442695
        %v4666 = vpow.pop %v4665
        %v4667 = vmul.f32 %v4635, 1.442695
        %v4668 = vpow.pop %v4667
        %v4669 = vmul.f32 %v4636, 1.442695
        %v4670 = vpow.pop %v4669
        %v4671 = vmul.f32 %v4637, 1.442695
        %v4672 = vpow.pop %v4671
        %v4673 = vmul.f32 %v4638, 1.442695
        %v4674 = vpow.pop %v4673
        %v4675 = vmul.f32 %v4639, 1.442695
        %v4676 = vpow.pop %v4675
        %v4677 = vmul.f32 %v4640, 1.442695
        %v4678 = vpow.pop %v4677
        %v4679 = vmul.f32 %v4641, 1.442695
        %v4680 = vpow.pop %v4679
        %v4681 = vmul.f32 %v4642, 1.442695
        %v4682 = vpow.pop %v4681
        %v4683 = vadd.f32 %v4644, 1.0
        %v4684 = vadd.f32 %v4646, 1.0
        %v4685 = vadd.f32 %v4648, 1.0
        %v4686 = vadd.f32 %v4650, 1.0
        %v4687 = vadd.f32 %v4652, 1.0
        %v4688 = vadd.f32 %v4654, 1.0
        %v4689 = vadd.f32 %v4656, 1.0
        %v4690 = vadd.f32 %v4658, 1.0
        %v4691 = vadd.f32 %v4660, 1.0
        %v4692 = vadd.f32 %v4662, 1.0
        %v4693 = vadd.f32 %v4664, 1.0
        %v4694 = vadd.f32 %v4666, 1.0
        %v4695 = vadd.f32 %v4668, 1.0
        %v4696 = vadd.f32 %v4670, 1.0
        %v4697 = vadd.f32 %v4672, 1.0
        %v4698 = vadd.f32 %v4674, 1.0
        %v4699 = vadd.f32 %v4676, 1.0
        %v4700 = vadd.f32 %v4678, 1.0
        %v4701 = vadd.f32 %v4680, 1.0
        %v4702 = vadd.f32 %v4682, 1.0
        %v4703 = vrcp.pop %v4683
        %v4704 = vmul.f32 1.0, %v4703
        %v4705 = vrcp.pop %v4684
        %v4706 = vmul.f32 1.0, %v4705
        %v4707 = vrcp.pop %v4685
        %v4708 = vmul.f32 1.0, %v4707
        %v4709 = vrcp.pop %v4686
        %v4710 = vmul.f32 1.0, %v4709
        %v4711 = vrcp.pop %v4687
        %v4712 = vmul.f32 1.0, %v4711
        %v4713 = vrcp.pop %v4688
        %v4714 = vmul.f32 1.0, %v4713
        %v4715 = vrcp.pop %v4689
        %v4716 = vmul.f32 1.0, %v4715
        %v4717 = vrcp.pop %v4690
        %v4718 = vmul.f32 1.0, %v4717
        %v4719 = vrcp.pop %v4691
        %v4720 = vmul.f32 1.0, %v4719
        %v4721 = vrcp.pop %v4692
        %v4722 = vmul.f32 1.0, %v4721
        %v4723 = vrcp.pop %v4693
        %v4724 = vmul.f32 1.0, %v4723
        %v4725 = vrcp.pop %v4694
        %v4726 = vmul.f32 1.0, %v4725
        %v4727 = vrcp.pop %v4695
        %v4728 = vmul.f32 1.0, %v4727
        %v4729 = vrcp.pop %v4696
        %v4730 = vmul.f32 1.0, %v4729
        %v4731 = vrcp.pop %v4697
        %v4732 = vmul.f32 1.0, %v4731
        %v4733 = vrcp.pop %v4698
        %v4734 = vmul.f32 1.0, %v4733
        %v4735 = vrcp.pop %v4699
        %v4736 = vmul.f32 1.0, %v4735
        %v4737 = vrcp.pop %v4700
        %v4738 = vmul.f32 1.0, %v4737
        %v4739 = vrcp.pop %v4701
        %v4740 = vmul.f32 1.0, %v4739
        %v4741 = vrcp.pop %v4702
        %v4742 = vmul.f32 1.0, %v4741
        %vm4743 = vcmask 949248
        %4744 = vst.msk [vmem:[%s336] sm:$0xff] %vm4743, %v4704
        %4745 = vst.msk [vmem:[%s336 + $0x8] sm:$0xff] %vm4743, %v4706
        %4746 = vst.msk [vmem:[%s336 + $0x10] sm:$0xff] %vm4743, %v4708
        %4747 = vst.msk [vmem:[%s336 + $0x18] sm:$0xff] %vm4743, %v4710
        %4748 = vst.msk [vmem:[%s336 + $0x20] sm:$0xff] %vm4743, %v4712
        %4749 = vst.msk [vmem:[%s336 + $0x28] sm:$0xff] %vm4743, %v4714
        %4750 = vst.msk [vmem:[%s336 + $0x30] sm:$0xff] %vm4743, %v4716
        %4751 = vst.msk [vmem:[%s336 + $0x38] sm:$0xff] %vm4743, %v4718
        %4752 = vst.msk [vmem:[%s336 + $0x40] sm:$0xff] %vm4743, %v4720
        %4753 = vst.msk [vmem:[%s336 + $0x48] sm:$0xff] %vm4743, %v4722
        %4754 = vst.msk [vmem:[%s336 + $0x50] sm:$0xff] %vm4743, %v4724
        %4755 = vst.msk [vmem:[%s336 + $0x58] sm:$0xff] %vm4743, %v4726
        %4756 = vst.msk [vmem:[%s336 + $0x60] sm:$0xff] %vm4743, %v4728
        %4757 = vst.msk [vmem:[%s336 + $0x68] sm:$0xff] %vm4743, %v4730
        %4758 = vst.msk [vmem:[%s336 + $0x70] sm:$0xff] %vm4743, %v4732
        %4759 = vst.msk [vmem:[%s336 + $0x78] sm:$0xff] %vm4743, %v4734
        %4760 = vst.msk [vmem:[%s336 + $0x80] sm:$0xff] %vm4743, %v4736
        %4761 = vst.msk [vmem:[%s336 + $0x88] sm:$0xff] %vm4743, %v4738
        %4762 = vst.msk [vmem:[%s336 + $0x90] sm:$0xff] %vm4743, %v4740
        %4763 = vst.msk [vmem:[%s336 + $0x98] sm:$0xff] %vm4743, %v4742
        %v4764 = vlaneseq
        %v4765 = vand.u32 %v4764, 127
        %vm4766 = vcmp.lt.s32.totalorder %v4765, 0
        %v4767 = vsub.s32 0, %v4765
        %v4768 = vsel %vm4766, %v4767, %v4765
        %v4769 = vshrl.u32 %v4768, 5
        %v4770 = vand.u32 %v4768, 31
        %v4771 = vsub.s32 0, %v4770
        %v4772 = vsel %vm4766, %v4771, %v4770
        %vm4773 = vcmp.ne.s32.totalorder %v4772, 0
        %vm4774 = vcmp.lt.s32.totalorder %v4772, 0
        %vm4775 = vmand %vm4774, %vm4773
        %v4776 = vadd.s32 %v4772, 32
        %v4777 = vsel %vm4775, %v4776, %v4772
        %vm4778 = vcmp.ge.s32.totalorder %v4777, 1
        %vm4779 = vcmp.lt.s32.totalorder %v4777, 19
        %vm4780 = vmand %vm4778, %vm4779
        %v4781 = vsel %vm4780, 1, 0
        %vm4782 = vcmp.eq.s32.totalorder %v4781, 1
        %v4783 = vsel %vm4782, %v4704, 0.0
        %v4784 = vsel %vm4782, %v4706, 0.0
        %v4785 = vsel %vm4782, %v4708, 0.0
        %v4786 = vsel %vm4782, %v4710, 0.0
        %v4787 = vsel %vm4782, %v4712, 0.0
        %v4788 = vsel %vm4782, %v4714, 0.0
        %v4789 = vsel %vm4782, %v4716, 0.0
        %v4790 = vsel %vm4782, %v4718, 0.0
        %v4791 = vsel %vm4782, %v4720, 0.0
        %v4792 = vsel %vm4782, %v4722, 0.0
        %v4793 = vsel %vm4782, %v4724, 0.0
        %v4794 = vsel %vm4782, %v4726, 0.0
        %v4795 = vsel %vm4782, %v4728, 0.0
        %v4796 = vsel %vm4782, %v4730, 0.0
        %v4797 = vsel %vm4782, %v4732, 0.0
        %v4798 = vsel %vm4782, %v4734, 0.0
        %v4799 = vsel %vm4782, %v4736, 0.0
        %v4800 = vsel %vm4782, %v4738, 0.0
        %v4801 = vsel %vm4782, %v4740, 0.0
        %v4802 = vsel %vm4782, %v4742, 0.0
        %v4803 = vpack.c.bf16 %v4784, %v4783
        %v4804 = vpack.c.bf16 %v4786, %v4785
        %v4805 = vpack.c.bf16 %v4788, %v4787
        %v4806 = vpack.c.bf16 %v4790, %v4789
        %v4807 = vpack.c.bf16 %v4792, %v4791
        %v4808 = vpack.c.bf16 %v4794, %v4793
        %v4809 = vpack.c.bf16 %v4796, %v4795
        %v4810 = vpack.c.bf16 %v4798, %v4797
        %v4811 = vpack.c.bf16 %v4800, %v4799
        %v4812 = vpack.c.bf16 %v4802, %v4801
        %v4813 = vld [vmem:[%s3] sm:$0xff]
        %v4814 = vld [vmem:[%s3 + $0x8] sm:$0xff]
        %v4815 = vld [vmem:[%s3 + $0x10] sm:$0xff]
        %v4816 = vld [vmem:[%s3 + $0x18] sm:$0xff]
        %v4817 = vld [vmem:[%s3 + $0x20] sm:$0xff]
        %v4818 = vld [vmem:[%s3 + $0x28] sm:$0xff]
        %v4819 = vld [vmem:[%s3 + $0x30] sm:$0xff]
        %v4820 = vld [vmem:[%s3 + $0x38] sm:$0xff]
        %v4821 = vld [vmem:[%s3 + $0x40] sm:$0xff]
        %v4822 = vld [vmem:[%s3 + $0x48] sm:$0xff]
        %v4823 = vld [vmem:[%s3 + $0x50] sm:$0xff]
        %v4824 = vld [vmem:[%s3 + $0x58] sm:$0xff]
        %v4825 = vld [vmem:[%s3 + $0x60] sm:$0xff]
        %v4826 = vld [vmem:[%s3 + $0x68] sm:$0xff]
        %v4827 = vld [vmem:[%s3 + $0x70] sm:$0xff]
        %v4828 = vld [vmem:[%s3 + $0x78] sm:$0xff]
        %v4829 = vld [vmem:[%s3 + $0x80] sm:$0xff]
        %v4830 = vld [vmem:[%s3 + $0x88] sm:$0xff]
        %v4831 = vld [vmem:[%s3 + $0x90] sm:$0xff]
        %v4832 = vld [vmem:[%s3 + $0x98] sm:$0xff]
        %v4833 = vld [vmem:[%s3 + $0xa0] sm:$0xff]
        %v4834 = vld [vmem:[%s3 + $0xa8] sm:$0xff]
        %v4835 = vld [vmem:[%s3 + $0xb0] sm:$0xff]
        %v4836 = vld [vmem:[%s3 + $0xb8] sm:$0xff]
        %v4837 = vld [vmem:[%s3 + $0xc0] sm:$0xff]
        %v4838 = vld [vmem:[%s3 + $0xc8] sm:$0xff]
        %v4865 = vunpack.c.l.b16 %v4813
        %v4866 = vunpack.c.h.b16 %v4813
        %v4867 = vunpack.c.l.b16 %v4814
        %v4868 = vunpack.c.h.b16 %v4814
        %v4869 = vunpack.c.l.b16 %v4815
        %v4870 = vunpack.c.h.b16 %v4815
        %v4871 = vunpack.c.l.b16 %v4816
        %v4872 = vunpack.c.h.b16 %v4816
        %v4873 = vunpack.c.l.b16 %v4817
        %v4874 = vunpack.c.h.b16 %v4817
        %v4875 = vunpack.c.l.b16 %v4818
        %v4876 = vunpack.c.h.b16 %v4818
        %v4877 = vunpack.c.l.b16 %v4819
        %v4878 = vunpack.c.h.b16 %v4819
        %v4879 = vunpack.c.l.b16 %v4820
        %v4880 = vunpack.c.h.b16 %v4820
        %v4881 = vunpack.c.l.b16 %v4821
        %v4882 = vunpack.c.h.b16 %v4821
        %v4883 = vunpack.c.l.b16 %v4822
        %v4884 = vunpack.c.h.b16 %v4822
        %v4885 = vunpack.c.l.b16 %v4823
        %v4886 = vunpack.c.h.b16 %v4823
        %v4887 = vunpack.c.l.b16 %v4824
        %v4888 = vunpack.c.h.b16 %v4824
        %v4889 = vunpack.c.l.b16 %v4825
        %v4890 = vunpack.c.h.b16 %v4825
        %v4891 = vunpack.c.l.b16 %v4826
        %v4892 = vunpack.c.h.b16 %v4826
        %v4893 = vunpack.c.l.b16 %v4827
        %v4894 = vunpack.c.h.b16 %v4827
        %v4895 = vunpack.c.l.b16 %v4828
        %v4896 = vunpack.c.h.b16 %v4828
        %v4897 = vunpack.c.l.b16 %v4829
        %v4898 = vunpack.c.h.b16 %v4829
        %v4899 = vunpack.c.l.b16 %v4830
        %v4900 = vunpack.c.h.b16 %v4830
        %v4901 = vunpack.c.l.b16 %v4831
        %v4902 = vunpack.c.h.b16 %v4831
        %v4903 = vunpack.c.l.b16 %v4832
        %v4904 = vunpack.c.h.b16 %v4832
        %v4905 = vunpack.c.l.b16 %v4833
        %v4906 = vunpack.c.h.b16 %v4833
        %v4907 = vunpack.c.l.b16 %v4834
        %v4908 = vunpack.c.h.b16 %v4834
        %v4909 = vunpack.c.l.b16 %v4835
        %v4910 = vunpack.c.h.b16 %v4835
        %v4911 = vunpack.c.l.b16 %v4836
        %v4912 = vunpack.c.h.b16 %v4836
        %v4913 = vunpack.c.l.b16 %v4837
        %v4914 = vunpack.c.h.b16 %v4837
        %v4915 = vunpack.c.l.b16 %v4838
        %v4916 = vunpack.c.h.b16 %v4838
        %v4917 = vpack.c.b16 %v4867, %v4865
        %v4918 = vpack.c.b16 %v4868, %v4866
        %v4919 = vpack.c.b16 %v4871, %v4869
        %v4920 = vpack.c.b16 %v4872, %v4870
        %v4921 = vpack.c.b16 %v4875, %v4873
        %v4922 = vpack.c.b16 %v4876, %v4874
        %v4923 = vpack.c.b16 %v4879, %v4877
        %v4924 = vpack.c.b16 %v4880, %v4878
        %v4925 = vpack.c.b16 %v4883, %v4881
        %v4926 = vpack.c.b16 %v4884, %v4882
        %v4927 = vpack.c.b16 %v4887, %v4885
        %v4928 = vpack.c.b16 %v4888, %v4886
        %v4929 = vpack.c.b16 %v4891, %v4889
        %v4930 = vpack.c.b16 %v4892, %v4890
        %v4931 = vpack.c.b16 %v4895, %v4893
        %v4932 = vpack.c.b16 %v4896, %v4894
        %v4933 = vpack.c.b16 %v4899, %v4897
        %v4934 = vpack.c.b16 %v4900, %v4898
        %v4935 = vpack.c.b16 %v4903, %v4901
        %v4936 = vpack.c.b16 %v4904, %v4902
        %v4937 = vpack.c.b16 %v4907, %v4905
        %v4938 = vpack.c.b16 %v4908, %v4906
        %v4939 = vpack.c.b16 %v4911, %v4909
        %v4940 = vpack.c.b16 %v4912, %v4910
        %v4941 = vpack.c.b16 %v4915, %v4913
        %v4942 = vpack.c.b16 %v4916, %v4914
        %vm4956 = vcmask 261120
        %v4958 = vsel %vm4956, %v4918, 0
        %v4961 = vsel %vm4956, %v4920, 0
        %v4964 = vsel %vm4956, %v4922, 0
        %v4967 = vsel %vm4956, %v4924, 0
        %v4970 = vsel %vm4956, %v4926, 0
        %v4973 = vsel %vm4956, %v4928, 0
        %v4976 = vsel %vm4956, %v4930, 0
        %v4979 = vsel %vm4956, %v4932, 0
        %v4982 = vsel %vm4956, %v4934, 0
        %v4985 = vsel %vm4956, %v4936, 0
        %v4988 = vsel %vm4956, %v4938, 0
        %v4991 = vsel %vm4956, %v4940, 0
        %v4994 = vsel %vm4956, %v4942, 0
        %4996 = vmatprep.subr.bf16.mxu0 0
        %4997 = vmatpush1.bf16.msra.mxu0 %v4803
        %4998 = vmatprep.subr.bf16.mxu0 0
        %4999 = vmatpush1.bf16.msra.mxu0 %v4804
        %5000 = vmatprep.subr.bf16.mxu0 0
        %5001 = vmatpush1.bf16.msra.mxu0 %v4805
        %5002 = vmatprep.subr.bf16.mxu0 0
        %5003 = vmatpush1.bf16.msra.mxu0 %v4806
        %5004 = vmatprep.subr.bf16.mxu0 0
        %5005 = vmatpush1.bf16.msra.mxu0 %v4807
        %5006 = vmatprep.subr.bf16.mxu0 0
        %5007 = vmatpush1.bf16.msra.mxu0 %v4808
        %5008 = vmatprep.subr.bf16.mxu0 0
        %5009 = vmatpush1.bf16.msra.mxu0 %v4809
        %5010 = vmatprep.subr.bf16.mxu0 0
        %5011 = vmatpush1.bf16.msra.mxu0 %v4810
        %5012 = vmatprep.subr.bf16.mxu0 0
        %5013 = vmatpush1.bf16.msra.mxu0 %v4811
        %5014 = vmatprep.subr.bf16.mxu0 0
        %5015 = vmatpush1.bf16.msra.mxu0 %v4812
        %5016 = vmatprep.subr.bf16.mxu0 0
        %5017 = vmatpush1.bf16.msra.mxu0 0
        %5018 = vmatprep.subr.bf16.mxu0 0
        %5019 = vmatpush1.bf16.msra.mxu0 0
        %5020 = vmatprep.subr.bf16.mxu0 0
        %5021 = vmatpush1.bf16.msra.mxu0 0
        %5022 = vmatprep.subr.bf16.mxu0 0
        %5023 = vmatpush1.bf16.msra.mxu0 0
        %5024 = vmatprep.subr.bf16.mxu0 0
        %5025 = vmatpush1.bf16.msra.mxu0 0
        %5026 = vmatprep.subr.bf16.mxu0 0
        %5027 = vmatpush1.bf16.msra.mxu0 0
        %5028 = vmatprep.mubr.bf16.mxu0 %v4958
        %5029 = vmatmul.mubr.bf16.gmra.mrb[0].mxu0 %v4917
        %v5030 = vpop.f32.mrb[0].mxu0
        %v5031 = vadd.f32 0.0, %v5030
        %v5032 = vpop.f32.mrb[0].mxu0
        %v5033 = vpop.f32.mrb[0].mxu0
        %v5034 = vadd.f32 0.0, %v5033
        %v5035 = vpop.f32.mrb[0].mxu0
        %5036 = vmatprep.mubr.bf16.mxu0 %v4961
        %5037 = vmatmul.mubr.bf16.gmra.mrb[0].mxu0 %v4919
        %v5038 = vpop.f32.mrb[0].mxu0
        %v5039 = vadd.f32 0.0, %v5038
        %v5040 = vpop.f32.mrb[0].mxu0
        %v5041 = vpop.f32.mrb[0].mxu0
        %v5042 = vadd.f32 0.0, %v5041
        %v5043 = vpop.f32.mrb[0].mxu0
        %5044 = vmatprep.mubr.bf16.mxu0 %v4964
        %5045 = vmatmul.mubr.bf16.gmra.mrb[0].mxu0 %v4921
        %v5046 = vpop.f32.mrb[0].mxu0
        %v5047 = vadd.f32 0.0, %v5046
        %v5048 = vpop.f32.mrb[0].mxu0
        %v5049 = vpop.f32.mrb[0].mxu0
        %v5050 = vadd.f32 0.0, %v5049
        %v5051 = vpop.f32.mrb[0].mxu0
        %5052 = vmatprep.mubr.bf16.mxu0 %v4967
        %5053 = vmatmul.mubr.bf16.gmra.mrb[0].mxu0 %v4923
        %v5054 = vpop.f32.mrb[0].mxu0
        %v5055 = vadd.f32 0.0, %v5054
        %v5056 = vpop.f32.mrb[0].mxu0
        %v5057 = vpop.f32.mrb[0].mxu0
        %v5058 = vadd.f32 0.0, %v5057
        %v5059 = vpop.f32.mrb[0].mxu0
        %5060 = vmatprep.mubr.bf16.mxu0 %v4970
        %5061 = vmatmul.mubr.bf16.gmra.mrb[0].mxu0 %v4925
        %v5062 = vpop.f32.mrb[0].mxu0
        %v5063 = vadd.f32 0.0, %v5062
        %v5064 = vpop.f32.mrb[0].mxu0
        %v5065 = vpop.f32.mrb[0].mxu0
        %v5066 = vadd.f32 0.0, %v5065
        %v5067 = vpop.f32.mrb[0].mxu0
        %5068 = vmatprep.mubr.bf16.mxu0 %v4973
        %5069 = vmatmul.mubr.bf16.gmra.mrb[0].mxu0 %v4927
        %v5070 = vpop.f32.mrb[0].mxu0
        %v5071 = vadd.f32 0.0, %v5070
        %v5072 = vpop.f32.mrb[0].mxu0
        %v5073 = vpop.f32.mrb[0].mxu0
        %v5074 = vadd.f32 0.0, %v5073
        %v5075 = vpop.f32.mrb[0].mxu0
        %5076 = vmatprep.mubr.bf16.mxu0 %v4976
        %5077 = vmatmul.mubr.bf16.gmra.mrb[0].mxu0 %v4929
        %v5078 = vpop.f32.mrb[0].mxu0
        %v5079 = vadd.f32 0.0, %v5078
        %v5080 = vpop.f32.mrb[0].mxu0
        %v5081 = vpop.f32.mrb[0].mxu0
        %v5082 = vadd.f32 0.0, %v5081
        %v5083 = vpop.f32.mrb[0].mxu0
        %5084 = vmatprep.mubr.bf16.mxu0 %v4979
        %5085 = vmatmul.mubr.bf16.gmra.mrb[0].mxu0 %v4931
        %v5086 = vpop.f32.mrb[0].mxu0
        %v5087 = vadd.f32 0.0, %v5086
        %v5088 = vpop.f32.mrb[0].mxu0
        %v5089 = vpop.f32.mrb[0].mxu0
        %v5090 = vadd.f32 0.0, %v5089
        %v5091 = vpop.f32.mrb[0].mxu0
        %5092 = vmatprep.mubr.bf16.mxu0 %v4982
        %5093 = vmatmul.mubr.bf16.gmra.mrb[0].mxu0 %v4933
        %v5094 = vpop.f32.mrb[0].mxu0
        %v5095 = vadd.f32 0.0, %v5094
        %v5096 = vpop.f32.mrb[0].mxu0
        %v5097 = vpop.f32.mrb[0].mxu0
        %v5098 = vadd.f32 0.0, %v5097
        %v5099 = vpop.f32.mrb[0].mxu0
        %5100 = vmatprep.mubr.bf16.mxu0 %v4985
        %5101 = vmatmul.mubr.bf16.gmra.mrb[0].mxu0 %v4935
        %v5102 = vpop.f32.mrb[0].mxu0
        %v5103 = vadd.f32 0.0, %v5102
        %v5104 = vpop.f32.mrb[0].mxu0
        %v5105 = vpop.f32.mrb[0].mxu0
        %v5106 = vadd.f32 0.0, %v5105
        %v5107 = vpop.f32.mrb[0].mxu0
        %5108 = vmatprep.mubr.bf16.mxu0 %v4988
        %5109 = vmatmul.mubr.bf16.gmra.mrb[0].mxu0 %v4937
        %v5110 = vpop.f32.mrb[0].mxu0
        %v5111 = vadd.f32 0.0, %v5110
        %v5112 = vpop.f32.mrb[0].mxu0
        %v5113 = vpop.f32.mrb[0].mxu0
        %v5114 = vadd.f32 0.0, %v5113
        %v5115 = vpop.f32.mrb[0].mxu0
        %5116 = vmatprep.mubr.bf16.mxu0 %v4991
        %5117 = vmatmul.mubr.bf16.gmra.mrb[0].mxu0 %v4939
        %v5118 = vpop.f32.mrb[0].mxu0
        %v5119 = vadd.f32 0.0, %v5118
        %v5120 = vpop.f32.mrb[0].mxu0
        %v5121 = vpop.f32.mrb[0].mxu0
        %v5122 = vadd.f32 0.0, %v5121
        %v5123 = vpop.f32.mrb[0].mxu0
        %5124 = vmatprep.mubr.bf16.mxu0 %v4994
        %5125 = vmatmul.mubr.bf16.gmra.mrb[0].mxu0 %v4941
        %v5126 = vpop.f32.mrb[0].mxu0
        %v5127 = vadd.f32 0.0, %v5126
        %v5128 = vpop.f32.mrb[0].mxu0
        %v5129 = vpop.f32.mrb[0].mxu0
        %v5130 = vadd.f32 0.0, %v5129
        %v5131 = vpop.f32.mrb[0].mxu0
        %5132 = vdwg.mxu0
        %v5133 = vld [vmem:[%s4] sm:$0xff]
        %v5134 = vld [vmem:[%s4 + $0x8] sm:$0xff]
        %5136 = vset.pattern.permute.xlu0 0
        %5137 = vperm.xlu0 %5136, %v5133
        %v5138 = vpop.permute.xlu0 %5137
        %5141 = vset.pattern.permute.xlu0 0
        %5142 = vperm.xlu0 %5141, %v5134
        %v5143 = vpop.permute.xlu0 %5142
        %vm5145 = vcmask 916480
        %5146 = vst.msk [vmem:[#allocation3] sm:$0xff] %vm5145, %v5138
        %5147 = vst.msk [vmem:[#allocation3 + $0x8] sm:$0xff] %vm5145, %v5143
        %v5148 = vld [vmem:[#allocation3] sm:$0xff]
        %v5149 = vld [vmem:[#allocation3 + $0x8] sm:$0xff]
        %5152 = vrot.lane.b32.xlu0 %v5031, 4
        %v5153 = vpop.permute.xlu0 %5152
        %5154 = vrot.lane.b32.xlu0 %v5034, 4
        %v5155 = vpop.permute.xlu0 %5154
        %v5158 = vadd.f32 %v5148, %v5153
        %v5159 = vadd.f32 %v5149, %v5155
        %vm5160 = vcmask 916512
        %5161 = vst.msk [vmem:[#allocation3] sm:$0xff] %vm5160, %v5158
        %5162 = vst.msk [vmem:[#allocation3 + $0x8] sm:$0xff] %vm5160, %v5159
        %v5163 = vld [vmem:[#allocation3] sm:$0xff]
        %v5164 = vld [vmem:[#allocation3 + $0x8] sm:$0xff]
        %5167 = vrot.lane.b32.xlu0 %v5039, 3
        %v5168 = vpop.permute.xlu0 %5167
        %5169 = vrot.lane.b32.xlu0 %v5042, 3
        %v5170 = vpop.permute.xlu0 %5169
        %v5173 = vadd.f32 %v5163, %v5168
        %v5174 = vadd.f32 %v5164, %v5170
        %vm5175 = vcmask 916504
        %5176 = vst.msk [vmem:[#allocation3] sm:$0xff] %vm5175, %v5173
        %5177 = vst.msk [vmem:[#allocation3 + $0x8] sm:$0xff] %vm5175, %v5174
        %v5178 = vld [vmem:[#allocation3] sm:$0xff]
        %v5179 = vld [vmem:[#allocation3 + $0x8] sm:$0xff]
        %5182 = vrot.lane.b32.xlu0 %v5047, 2
        %v5183 = vpop.permute.xlu0 %5182
        %5184 = vrot.lane.b32.xlu0 %v5050, 2
        %v5185 = vpop.permute.xlu0 %5184
        %v5188 = vadd.f32 %v5178, %v5183
        %v5189 = vadd.f32 %v5179, %v5185
        %vm5190 = vcmask 916496
        %5191 = vst.msk [vmem:[#allocation3] sm:$0xff] %vm5190, %v5188
        %5192 = vst.msk [vmem:[#allocation3 + $0x8] sm:$0xff] %vm5190, %v5189
        %v5193 = vld [vmem:[#allocation3] sm:$0xff]
        %v5194 = vld [vmem:[#allocation3 + $0x8] sm:$0xff]
        %5197 = vrot.lane.b32.xlu0 %v5055, 1
        %v5198 = vpop.permute.xlu0 %5197
        %5199 = vrot.lane.b32.xlu0 %v5058, 1
        %v5200 = vpop.permute.xlu0 %5199
        %v5203 = vadd.f32 %v5193, %v5198
        %v5204 = vadd.f32 %v5194, %v5200
        %vm5205 = vcmask 916488
        %5206 = vst.msk [vmem:[#allocation3] sm:$0xff] %vm5205, %v5203
        %5207 = vst.msk [vmem:[#allocation3 + $0x8] sm:$0xff] %vm5205, %v5204
        %v5208 = vld [vmem:[#allocation3] sm:$0xff]
        %v5209 = vld [vmem:[#allocation3 + $0x8] sm:$0xff]
        %v5210 = vadd.f32 %v5208, %v5063
        %v5211 = vadd.f32 %v5209, %v5066
        %5212 = vst.msk [vmem:[#allocation3] sm:$0xff] %vm5145, %v5210
        %5213 = vst.msk [vmem:[#allocation3 + $0x8] sm:$0xff] %vm5145, %v5211
        %v5214 = vld [vmem:[#allocation3] sm:$0xff]
        %v5215 = vld [vmem:[#allocation3 + $0x8] sm:$0xff]
        %5218 = vrot.lane.b32.xlu0 %v5071, 127
        %v5219 = vpop.permute.xlu0 %5218
        %5220 = vrot.lane.b32.xlu0 %v5074, 127
        %v5221 = vpop.permute.xlu0 %5220
        %v5224 = vadd.f32 %v5214, %v5219
        %v5225 = vadd.f32 %v5215, %v5221
        %5226 = vst.msk [vmem:[#allocation3] sm:$0xff] %vm5145, %v5224
        %5227 = vst.msk [vmem:[#allocation3 + $0x8] sm:$0xff] %vm5145, %v5225
        %v5228 = vld [vmem:[#allocation3] sm:$0xff]
        %v5229 = vld [vmem:[#allocation3 + $0x8] sm:$0xff]
        %5232 = vrot.lane.b32.xlu0 %v5079, 126
        %v5233 = vpop.permute.xlu0 %5232
        %5234 = vrot.lane.b32.xlu0 %v5082, 126
        %v5235 = vpop.permute.xlu0 %5234
        %v5238 = vadd.f32 %v5228, %v5233
        %v5239 = vadd.f32 %v5229, %v5235
        %5240 = vst.msk [vmem:[#allocation3] sm:$0xff] %vm5145, %v5238
        %5241 = vst.msk [vmem:[#allocation3 + $0x8] sm:$0xff] %vm5145, %v5239
        %v5242 = vld [vmem:[#allocation3] sm:$0xff]
        %v5243 = vld [vmem:[#allocation3 + $0x8] sm:$0xff]
        %5246 = vrot.lane.b32.xlu0 %v5087, 125
        %v5247 = vpop.permute.xlu0 %5246
        %5248 = vrot.lane.b32.xlu0 %v5090, 125
        %v5249 = vpop.permute.xlu0 %5248
        %v5252 = vadd.f32 %v5242, %v5247
        %v5253 = vadd.f32 %v5243, %v5249
        %5254 = vst.msk [vmem:[#allocation3] sm:$0xff] %vm5145, %v5252
        %5255 = vst.msk [vmem:[#allocation3 + $0x8] sm:$0xff] %vm5145, %v5253
        %v5256 = vld [vmem:[#allocation3] sm:$0xff]
        %v5257 = vld [vmem:[#allocation3 + $0x8] sm:$0xff]
        %5260 = vrot.lane.b32.xlu0 %v5095, 124
        %v5261 = vpop.permute.xlu0 %5260
        %5262 = vrot.lane.b32.xlu0 %v5098, 124
        %v5263 = vpop.permute.xlu0 %5262
        %v5266 = vadd.f32 %v5256, %v5261
        %v5267 = vadd.f32 %v5257, %v5263
        %5268 = vst.msk [vmem:[#allocation3] sm:$0xff] %vm5145, %v5266
        %5269 = vst.msk [vmem:[#allocation3 + $0x8] sm:$0xff] %vm5145, %v5267
        %v5270 = vld [vmem:[#allocation3] sm:$0xff]
        %v5271 = vld [vmem:[#allocation3 + $0x8] sm:$0xff]
        %5274 = vrot.lane.b32.xlu0 %v5103, 123
        %v5275 = vpop.permute.xlu0 %5274
        %5276 = vrot.lane.b32.xlu0 %v5106, 123
        %v5277 = vpop.permute.xlu0 %5276
        %v5280 = vadd.f32 %v5270, %v5275
        %v5281 = vadd.f32 %v5271, %v5277
        %vm5282 = vcmask 908288
        %5283 = vst.msk [vmem:[#allocation3] sm:$0xff] %vm5282, %v5280
        %5284 = vst.msk [vmem:[#allocation3 + $0x8] sm:$0xff] %vm5282, %v5281
        %v5285 = vld [vmem:[#allocation3] sm:$0xff]
        %v5286 = vld [vmem:[#allocation3 + $0x8] sm:$0xff]
        %5289 = vrot.lane.b32.xlu0 %v5111, 122
        %v5290 = vpop.permute.xlu0 %5289
        %5291 = vrot.lane.b32.xlu0 %v5114, 122
        %v5292 = vpop.permute.xlu0 %5291
        %v5295 = vadd.f32 %v5285, %v5290
        %v5296 = vadd.f32 %v5286, %v5292
        %vm5297 = vcmask 900096
        %5298 = vst.msk [vmem:[#allocation3] sm:$0xff] %vm5297, %v5295
        %5299 = vst.msk [vmem:[#allocation3 + $0x8] sm:$0xff] %vm5297, %v5296
        %v5300 = vld [vmem:[#allocation3] sm:$0xff]
        %v5301 = vld [vmem:[#allocation3 + $0x8] sm:$0xff]
        %5304 = vrot.lane.b32.xlu0 %v5119, 121
        %v5305 = vpop.permute.xlu0 %5304
        %5306 = vrot.lane.b32.xlu0 %v5122, 121
        %v5307 = vpop.permute.xlu0 %5306
        %v5310 = vadd.f32 %v5300, %v5305
        %v5311 = vadd.f32 %v5301, %v5307
        %vm5312 = vcmask 891904
        %5313 = vst.msk [vmem:[#allocation3] sm:$0xff] %vm5312, %v5310
        %5314 = vst.msk [vmem:[#allocation3 + $0x8] sm:$0xff] %vm5312, %v5311
        %v5315 = vld [vmem:[#allocation3] sm:$0xff]
        %v5316 = vld [vmem:[#allocation3 + $0x8] sm:$0xff]
        %5319 = vrot.lane.b32.xlu0 %v5127, 120
        %v5320 = vpop.permute.xlu0 %5319
        %5321 = vrot.lane.b32.xlu0 %v5130, 120
        %v5322 = vpop.permute.xlu0 %5321
        %v5325 = vadd.f32 %v5315, %v5320
        %v5326 = vadd.f32 %v5316, %v5322
        %vm5327 = vcmask 883712
        %5328 = vst.msk [vmem:[#allocation3] sm:$0xff] %vm5327, %v5325
        %5329 = vst.msk [vmem:[#allocation3 + $0x8] sm:$0xff] %vm5327, %v5326
        %v5330 = vld [vmem:[#allocation3] sm:$0xff]
        %v5331 = vld [vmem:[#allocation3 + $0x8] sm:$0xff]
        %v5332 = vxor.u32 %v5330, 2147483648
        %v5333 = vxor.u32 %v5331, 2147483648
        %v5334 = vmul.f32 %v5332, 1.442695
        %v5335 = vpow.pop %v5334
        %v5336 = vmul.f32 %v5333, 1.442695
        %v5337 = vpow.pop %v5336
        %v5338 = vadd.f32 %v5335, 1.0
        %v5339 = vadd.f32 %v5337, 1.0
        %v5340 = vrcp.pop %v5338
        %v5341 = vmul.f32 1.0, %v5340
        %v5342 = vrcp.pop %v5339
        %v5343 = vmul.f32 1.0, %v5342
        %5344 = vst.msk [vmem:[%s341] sm:$0xff] %vm5145, %v5341
        %5345 = vst.msk [vmem:[%s341 + $0x8] sm:$0xff] %vm5145, %v5343
        %p5346 = scmp.lt.s32.totalorder %s18, 1
        %s5347 = scalar_select %p5346, %s18, 1
        %s5348 = smul.addr %s5347, 20
        %s5349 = smul.addr %s5348, 8
        %s5350 = scalar_lea.vmem %s5, %s5349
        %p5351 = scmp.lt.s32.totalorder %s18, 1
        %s5352 = scalar_select %p5351, %s18, 1
        %s5353 = smul.addr %s5352, 2
        %s5354 = smul.addr %s5353, 8
        %s5355 = scalar_lea.vmem %s6, %s5354
        // Predicated region
        $region82: #{_fused_forward.1} parent=76 // pred_check
          %p5356 = pneg %p146
        $region83: #{_fused_forward.1} parent=76 // pred_check_branch
          %5358 = sbr.rel (%p5356) target = $region85
        $region84: #{_fused_forward.1} parent=76 // pred_region
          _
        $region85: #{_fused_forward.1} parent=76 // pred_fallthru
          _
        // Predicated region
        $region86: #{_fused_forward.1} parent=76 // pred_check
          %p5359 = pneg %p172
        $region87: #{_fused_forward.1} parent=76 // pred_check_branch
          %5361 = sbr.rel (%p5359) target = $region89
        $region88: #{_fused_forward.1} parent=76 // pred_region
          _
        $region89: #{_fused_forward.1} parent=76 // pred_fallthru
          _
      $region77: #{_fused_forward.1} parent=5 // pred_fallthru
        _
      %p5362 = scmp.le.s32.totalorder 2, %s13
      // Predicated region
      $region90: #{_fused_forward.1} parent=5 // pred_check
        %p5363 = pneg %p5362
      $region91: #{_fused_forward.1} parent=5 // pred_check_branch
        %5365 = sbr.rel (%p5363) target = $region93
      $region92: #{_fused_forward.1} parent=5 // pred_region
        %s5366 = ssub.s32 %s13, 2
        // Predicated region
        $region94: #{_fused_forward.1} parent=92 // pred_check
          %p5367 = pneg %p152
        $region95: #{_fused_forward.1} parent=92 // pred_check_branch
          %5369 = sbr.rel (%p5367) target = $region97
        $region96: #{_fused_forward.1} parent=92 // pred_region
          %p5370 = scmp.lt.s32.totalorder %s19, 1
          %s5371 = scalar_select %p5370, %s19, 1
          %s5372 = smul.addr %s5371, 20
          %s5373 = smul.addr %s5372, 8
          %s5374 = scalar_lea.vmem %s5, %s5373
        $region97: #{_fused_forward.1} parent=92 // pred_fallthru
          _
        // Predicated region
        $region98: #{_fused_forward.1} parent=92 // pred_check
          %p5375 = pneg %p178
        $region99: #{_fused_forward.1} parent=92 // pred_check_branch
          %5377 = sbr.rel (%p5375) target = $region101
        $region100: #{_fused_forward.1} parent=92 // pred_region
          %p5378 = scmp.lt.s32.totalorder %s19, 1
          %s5379 = scalar_select %p5378, %s19, 1
          %s5380 = smul.addr %s5379, 2
          %s5381 = smul.addr %s5380, 8
          %s5382 = scalar_lea.vmem %s6, %s5381
        $region101: #{_fused_forward.1} parent=92 // pred_fallthru
          _
      $region93: #{_fused_forward.1} parent=5 // pred_fallthru
        _
    $region6: #{_fused_forward.1} parent=1 // loop_footer
      %s17 = sadd.s32 1, %s13
    $region7: #{_fused_forward.1} parent=1 // loop_footer_branch
      %12 = sbr.rel target = $region3
    $region8: #{_fused_forward.1} parent=1 // loop_exit
      _

</llo_original>
